<compile_context>
chip_gen: v5e
topology: v5e:2x2
jax: 0.10.0
libtpu: 0.0.40
codegen_flags: <defaults>
</compile_context>

<pallas_src>
import functools

import numpy as np
import jax
import jax.numpy as jnp
from jax.experimental import pallas as pl
from jax.experimental.pallas import tpu as pltpu

_VMEM_LIMIT = 32 * 1024 * 1024  # safe scoped-VMEM request on v5e/v6e/v7x


# ---------------------------------------------------------------------------
# Fused conv3x3 + bias + ReLU + maxpool2x2 stage (Bt images per grid step)
# ---------------------------------------------------------------------------
def _conv_stage_kernel(x_ref, w_ref, b_ref, s_ref, o_ref, z_ref, *,
                       taps, mz, row_stride, n_img):
    """
    x_ref: [n_img, P_in, Cin]      bf16  zero-bordered padded flat input (or im2col for stage 1)
    w_ref: [len(taps)*Cin, Cout]   bf16  fused-tap weights, row = tap*Cin + cin
    b_ref: [1, Cout]               f32
    s_ref: [Pout, L]               bf16  one-hot pool-gather + scatter-to-next-padded-layout
    o_ref: [n_img, Pout, Cout]     bf16  next stage's padded flat layout (zero border included)
    z_ref: [mz, Cout]              f32   scratch: conv+bias+ReLU result for one image
    """
    L = mz - row_stride - 1

    def body(i, carry):
        # --- conv as one fused-K matmul: every tap is a contiguous window of the padded input
        if len(taps) == 1:
            slab = x_ref[i, pl.ds(taps[0], mz), :]
        else:
            slab = jnp.concatenate(
                [x_ref[i, pl.ds(t, mz), :] for t in taps], axis=-1)
        acc = jnp.dot(slab, w_ref[...], preferred_element_type=jnp.float32)
        z_ref[...] = jnp.maximum(acc + b_ref[...], 0.0)

        # --- 2x2 max-pool: VPU max of the 4 shifted windows (cheap), cast to bf16 once,
        #     then ONE selection matmul gathers the stride-2 pooled rows and scatters them
        #     into the next stage's zero-bordered padded layout.
        a = z_ref[pl.ds(0, L), :]
        b = z_ref[pl.ds(1, L), :]
        c = z_ref[pl.ds(row_stride, L), :]
        d = z_ref[pl.ds(row_stride + 1, L), :]
        vmax = jnp.maximum(jnp.maximum(a, b), jnp.maximum(c, d)).astype(jnp.bfloat16)
        o_ref[i] = jnp.dot(s_ref[...], vmax,
                           preferred_element_type=jnp.float32).astype(o_ref.dtype)
        return carry

    jax.lax.fori_loop(0, n_img, body, 0)


def conv_stage(x, w, b, s, *, taps, h, row_stride, cout, bt):
    """x: [B, P_in, Cin] bf16; w: [len(taps)*Cin, Cout] bf16; b: [1, Cout] f32; s: [Pout, L] bf16."""
    B, p_in, cin = x.shape
    mz = h * row_stride
    pout = s.shape[0]
    assert B % bt == 0
    assert taps[-1] + mz == p_in, (taps[-1], mz, p_in)
    assert s.shape[1] == mz - row_stride - 1

    kernel = functools.partial(_conv_stage_kernel, taps=taps, mz=mz,
                               row_stride=row_stride, n_img=bt)
    return pl.pallas_call(
        kernel,
        out_shape=jax.ShapeDtypeStruct((B, pout, cout), jnp.bfloat16),
        grid_spec=pltpu.PrefetchScalarGridSpec(
            num_scalar_prefetch=0,
            grid=(B // bt,),
            in_specs=[
                pl.BlockSpec((bt, p_in, cin), lambda g: (g, 0, 0)),
                pl.BlockSpec(w.shape, lambda g: (0, 0)),   # resident across steps
                pl.BlockSpec(b.shape, lambda g: (0, 0)),
                pl.BlockSpec(s.shape, lambda g: (0, 0)),
            ],
            out_specs=pl.BlockSpec((bt, pout, cout), lambda g: (g, 0, 0)),
            scratch_shapes=[pltpu.VMEM((mz, cout), jnp.float32)],
        ),
        compiler_params=pltpu.CompilerParams(
            dimension_semantics=("parallel",),
            vmem_limit_bytes=_VMEM_LIMIT,
        ),
    )(x, w, b, s)


# ---------------------------------------------------------------------------
# Fused FC tail: fc1 + ReLU + fc2(padded to 128 lanes) + log_softmax
# ---------------------------------------------------------------------------
def _fc_head_kernel(x_ref, w1_ref, b1_ref, w2_ref, b2_ref, o_ref):
    h = jnp.dot(x_ref[...], w1_ref[...], preferred_element_type=jnp.float32) + b1_ref[...]
    h = jnp.maximum(h, 0.0).astype(jnp.bfloat16)
    logits = jnp.dot(h, w2_ref[...], preferred_element_type=jnp.float32) + b2_ref[...]
    # padded columns carry a -1e30 bias -> exp() == 0 -> 128-wide log_softmax == 10-wide one
    m = jnp.max(logits, axis=-1, keepdims=True)
    z = logits - m
    lse = jnp.log(jnp.sum(jnp.exp(z), axis=-1, keepdims=True))
    o_ref[...] = (z - lse).astype(o_ref.dtype)


def fc_head(x, w1, b1, w2, b2):
    B, K = x.shape
    N1, N2 = w1.shape[1], w2.shape[1]
    # >= 2 grid steps whenever B > 8 so both v7x TensorCores participate.
    if B <= 8:
        tm = B
    else:
        tm = min(256, ((pl.cdiv(B, 2) + 7) // 8) * 8)
    # NOTE: for a partial last block the unused rows hold garbage and the in-kernel log_softmax
    # may produce non-finite values there; those rows are never written back, so it is harmless.
    return pl.pallas_call(
        _fc_head_kernel,
        out_shape=jax.ShapeDtypeStruct((B, N2), jnp.float32),
        grid_spec=pltpu.PrefetchScalarGridSpec(
            num_scalar_prefetch=0,
            grid=(pl.cdiv(B, tm),),
            in_specs=[
                pl.BlockSpec((tm, K), lambda i: (i, 0)),
                pl.BlockSpec((K, N1), lambda i: (0, 0)),
                pl.BlockSpec((1, N1), lambda i: (0, 0)),
                pl.BlockSpec((N1, N2), lambda i: (0, 0)),
                pl.BlockSpec((1, N2), lambda i: (0, 0)),
            ],
            out_specs=pl.BlockSpec((tm, N2), lambda i: (i, 0)),
        ),
        compiler_params=pltpu.CompilerParams(
            dimension_semantics=("parallel",),
            vmem_limit_bytes=_VMEM_LIMIT,
        ),
    )(x, w1, b1, w2, b2)


# ---------------------------------------------------------------------------
# Parameters (deterministic, PyTorch-default-style uniform init, torch layouts)
# ---------------------------------------------------------------------------
def init_params(key):
    def uniform(k, shape, fan_in):
        bound = 1.0 / float(fan_in) ** 0.5
        return jax.random.uniform(k, shape, jnp.float32, -bound, bound)

    ks = jax.random.split(key, 10)
    return {
        "w1": uniform(ks[0], (32, 3, 3, 3), 3 * 9),
        "b1": uniform(ks[1], (32,), 3 * 9),
        "w2": uniform(ks[2], (64, 32, 3, 3), 32 * 9),
        "b2": uniform(ks[3], (64,), 32 * 9),
        "w3": uniform(ks[4], (128, 64, 3, 3), 64 * 9),
        "b3": uniform(ks[5], (128,), 64 * 9),
        "wfc1": uniform(ks[6], (128, 128 * 3 * 3), 128 * 3 * 3),  # torch Linear layout [out, in]
        "bfc1": uniform(ks[7], (128,), 128 * 3 * 3),
        "wfc2": uniform(ks[8], (10, 128), 128),
        "bfc2": uniform(ks[9], (10,), 128),
    }


def _pool_select(H, W, row_stride, padded_out):
    """One-hot matrix: pooled(ho,wo) <- 2x2-max at flat index 2ho*row_stride+2wo, scattered either
    into the next stage's zero-bordered padded layout (padded_out=True) or the dense Ho*Wo order."""
    Ho, Wo = H // 2, W // 2
    L = H * row_stride - row_stride - 1
    pout = (Ho + 2) * (Wo + 2) + 2 if padded_out else Ho * Wo  # +2 extra zero rows for tap windows
    S = np.zeros((pout, L), np.float32)
    for ho in range(Ho):
        for wo in range(Wo):
            q = 2 * ho * row_stride + 2 * wo
            r = ((ho + 1) * (Wo + 2) + wo + 1) if padded_out else (ho * Wo + wo)
            S[r, q] = 1.0
    return jnp.asarray(S, jnp.bfloat16)


def prepare_params(params):
    """One-time weight re-layout + constant selection matrices (outside the jitted forward)."""
    pp = {}
    # conv1: dense K = 27 (padded to 32) matmul over the wrapper-built im2col slab
    w1 = jnp.transpose(params["w1"], (2, 3, 1, 0)).reshape(27, 32)   # row = (kh*3+kw)*3 + cin
    pp["w1"] = jnp.pad(w1, ((0, 5), (0, 0))).astype(jnp.bfloat16)
    pp["b1"] = params["b1"].reshape(1, 32).astype(jnp.float32)
    # conv2/conv3: fused-tap weights [9*Cin, Cout], row = (kh*3+kw)*Cin + cin
    for name, cin, cout in (("2", 32, 64), ("3", 64, 128)):
        w = jnp.transpose(params["w" + name], (2, 3, 1, 0)).reshape(9 * cin, cout)
        pp["w" + name] = w.astype(jnp.bfloat16)
        pp["b" + name] = params["b" + name].reshape(1, cout).astype(jnp.float32)
    # pooling + scatter-to-next-padded-layout selection matrices (constants, resident in VMEM)
    pp["s1"] = _pool_select(28, 28, 28, padded_out=True)    # [258, 755]
    pp["s2"] = _pool_select(14, 14, 16, padded_out=True)    # [ 83, 207]
    pp["s3"] = _pool_select(7, 7, 9, padded_out=False)      # [  9,  53]
    # fc1: torch columns are ordered (c, h, w) for the NCHW flatten; our activations are (h, w, c).
    wfc1 = params["wfc1"].reshape(128, 128, 9)               # [out, c, p] with p = h*3+w
    pp["wfc1"] = (jnp.transpose(wfc1, (2, 1, 0))             # [p, c, out]
                  .reshape(1152, 128).astype(jnp.bfloat16))
    pp["bfc1"] = params["bfc1"].reshape(1, 128).astype(jnp.float32)
    # fc2: pad 10 -> 128 output lanes (lane-dense store); padded logits get -1e30 bias.
    w2 = jnp.zeros((128, 128), jnp.float32).at[:, :10].set(params["wfc2"].T)
    pp["wfc2"] = w2.astype(jnp.bfloat16)
    pp["bfc2"] = jnp.full((1, 128), -1e30, jnp.float32).at[0, :10].set(params["bfc2"])
    return pp


# ---------------------------------------------------------------------------
# Forward pass (mirrors ConvNet.forward)
# ---------------------------------------------------------------------------
def _pick_bt(B):
    for bt in (8, 4, 2, 1):
        if B % bt == 0:
            return bt
    return 1


def _im2col_28x28(x_nchw):
    """Stage-1 im2col: [B,3,28,28] -> [B, 784, 32] bf16 (27 tap-major columns, zero-padded to 32)."""
    B = x_nchw.shape[0]
    x = jnp.transpose(x_nchw, (0, 2, 3, 1)).astype(jnp.bfloat16)   # [B,28,28,3]
    xp = jnp.pad(x, ((0, 0), (1, 1), (1, 1), (0, 0)))               # [B,30,30,3]
    cols = [xp[:, kh:kh + 28, kw:kw + 28, :] for kh in range(3) for kw in range(3)]
    slab = jnp.concatenate(cols, axis=-1)                           # [B,28,28,27]
    slab = jnp.pad(slab, ((0, 0), (0, 0), (0, 0), (0, 5)))          # K 27 -> 32
    return slab.reshape(B, 28 * 28, 32)


@jax.jit
def convnet_forward(pp, x_nchw):
    B = x_nchw.shape[0]
    bt = _pick_bt(B)
    taps2 = tuple(kh * 16 + kw for kh in range(3) for kw in range(3))
    taps3 = tuple(kh * 9 + kw for kh in range(3) for kw in range(3))

    x = _im2col_28x28(x_nchw)                                                  # [B, 784, 32]
    x = conv_stage(x, pp["w1"], pp["b1"], pp["s1"],
                   taps=(0,), h=28, row_stride=28, cout=32, bt=bt)             # [B, 258, 32]
    x = conv_stage(x, pp["w2"], pp["b2"], pp["s2"],
                   taps=taps2, h=14, row_stride=16, cout=64, bt=bt)            # [B,  83, 64]
    x = conv_stage(x, pp["w3"], pp["b3"], pp["s3"],
                   taps=taps3, h=7, row_stride=9, cout=128, bt=bt)             # [B,   9, 128]
    x = x.reshape(B, 9 * 128)                         # (h, w, c) flatten; fc1 cols pre-permuted
    out = fc_head(x, pp["wfc1"], pp["bfc1"], pp["wfc2"], pp["bfc2"])           # [B, 128] f32
    return out[:, :10]


# ---------------------------------------------------------------------------
# Pure-JAX reference (torch semantics, f32) for a structural correctness check
# ---------------------------------------------------------------------------
def reference_forward(params, x):
    def conv(x, w, b):
        y = jax.lax.conv_general_dilated(
            x, w, window_strides=(1, 1), padding=((1, 1), (1, 1)),
            dimension_numbers=("NCHW", "OIHW", "NCHW"))
        return jax.nn.relu(y + b[None, :, None, None])

    def pool(x):
        return jax.lax.reduce_window(x, -jnp.inf, jax.lax.max,
                                     (1, 1, 2, 2), (1, 1, 2, 2), "VALID")

    x = pool(conv(x, params["w1"], params["b1"]))
    x = pool(conv(x, params["w2"], params["b2"]))
    x = pool(conv(x, params["w3"], params["b3"]))
    x = x.reshape(x.shape[0], -1)                      # NCHW (c,h,w) flatten, like torch
    x = jax.nn.relu(x @ params["wfc1"].T + params["bfc1"])
    x = x @ params["wfc2"].T + params["bfc2"]
    return jax.nn.log_softmax(x, axis=-1)


if __name__ == "__main__":
    key = jax.random.PRNGKey(0)
    pkey, xkey = jax.random.split(key)
    params = init_params(pkey)
    pp = prepare_params(params)

    # Input must be 28x28 so that three stride-2 pools give 3x3 and fc1's 128*3*3 matches.
    x = jax.random.normal(xkey, (2, 3, 28, 28), jnp.float32)

    out = jax.block_until_ready(convnet_forward(pp, x))

    assert out.shape == (2, 10), out.shape
    assert bool(jnp.all(jnp.isfinite(out)))
    # log_softmax rows must (log-)sum to ~0 (padded classes carry exactly 0 probability mass)
    assert bool(jnp.allclose(jnp.exp(out).sum(axis=1), 1.0, atol=1e-3))

    # Structural correctness vs. an f32 XLA reference (bf16 activations => small numeric diffs).
    ref = jax.block_until_ready(jax.jit(reference_forward)(params, x))
    err = float(jnp.max(jnp.abs(out - ref)))
    assert err < 5e-2, f"max |kernel - reference| = {err}"

    print("KERNEL_OK")
</pallas_src>

<mosaic_0001>
module attributes {stable_mosaic.version = 11 : i64} {
  func.func @_conv_stage_kernel(%arg0: i32, %arg1: memref<2x784x32xbf16, #tpu.memory_space<vmem>>, %arg2: memref<32x32xbf16, #tpu.memory_space<vmem>>, %arg3: memref<1x32xf32, #tpu.memory_space<vmem>>, %arg4: memref<258x755xbf16, #tpu.memory_space<vmem>>, %arg5: memref<2x258x32xbf16, #tpu.memory_space<vmem>>, %arg6: memref<784x32xf32, #tpu.memory_space<vmem>>) attributes {dimension_semantics = [#tpu.dimension_semantics<parallel>], iteration_bounds = array<i64: 1>, scalar_prefetch = 0 : i64, scratch_operands = 1 : i64, tpu.core_type = #tpu.core_type<tc>, window_params = [{transform_indices = @transform_0, window_bounds = array<i64: 2, 784, 32>}, {pipeline_mode = #tpu.pipeline_mode<synchronous>, transform_indices = @transform_1, window_bounds = array<i64: 32, 32>}, {pipeline_mode = #tpu.pipeline_mode<synchronous>, transform_indices = @transform_2, window_bounds = array<i64: 1, 32>}, {pipeline_mode = #tpu.pipeline_mode<synchronous>, transform_indices = @transform_3, window_bounds = array<i64: 258, 755>}, {transform_indices = @transform_4, window_bounds = array<i64: 2, 258, 32>}]} {
    %c0_i32 = arith.constant 0 : i32
    %c2_i32 = arith.constant 2 : i32
    %0 = arith.addi %c0_i32, %c2_i32 : i32
    %c1_i32 = arith.constant 1 : i32
    scf.for %arg7 = %c0_i32 to %0 step %c1_i32  : i32 {
      %1 = arith.index_cast %arg7 : i32 to index
      %c0 = arith.constant 0 : index
      %c0_1 = arith.constant 0 : index
      %2 = vector.load %arg1[%1, %c0, %c0_1] : memref<2x784x32xbf16, #tpu.memory_space<vmem>>, vector<1x784x32xbf16>
      %3 = vector.shape_cast %2 : vector<1x784x32xbf16> to vector<784x32xbf16>
      %c0_2 = arith.constant 0 : index
      %c0_3 = arith.constant 0 : index
      %4 = vector.load %arg2[%c0_2, %c0_3] : memref<32x32xbf16, #tpu.memory_space<vmem>>, vector<32x32xbf16>
      %cst = arith.constant dense<0.000000e+00> : vector<784x32xf32>
      %5 = tpu.matmul %3, %4, %cst {dimension_numbers = #tpu.dot_dimension_numbers<[1], [0], [0], [1], [0, 0, 1, 1], [], []>} : vector<784x32xbf16>, vector<32x32xbf16>, vector<784x32xf32> -> vector<784x32xf32>
      %c0_4 = arith.constant 0 : index
      %c0_5 = arith.constant 0 : index
      %6 = vector.load %arg3[%c0_4, %c0_5] : memref<1x32xf32, #tpu.memory_space<vmem>>, vector<1x32xf32>
      %7 = vector.broadcast %6 : vector<1x32xf32> to vector<784x32xf32>
      %8 = arith.addf %5, %7 : vector<784x32xf32>
      %cst_6 = arith.constant 0.000000e+00 : f32
      %9 = vector.broadcast %cst_6 : f32 to vector<784x32xf32>
      %10 = arith.maximumf %8, %9 : vector<784x32xf32>
      %c0_7 = arith.constant 0 : index
      %c0_8 = arith.constant 0 : index
      %11 = vector.load %arg6[%c0_7, %c0_8] : memref<784x32xf32, #tpu.memory_space<vmem>>, vector<784x32xf32>
      tpu.vector_store %arg6[%c0_7, %c0_8], %10 {strides = array<i32>} : memref<784x32xf32, #tpu.memory_space<vmem>>, vector<784x32xf32>,
      %c0_9 = arith.constant 0 : index
      %c0_10 = arith.constant 0 : index
      %12 = vector.load %arg6[%c0_9, %c0_10] : memref<784x32xf32, #tpu.memory_space<vmem>>, vector<755x32xf32>
      %c1 = arith.constant 1 : index
      %c0_11 = arith.constant 0 : index
      %13 = vector.load %arg6[%c1, %c0_11] : memref<784x32xf32, #tpu.memory_space<vmem>>, vector<755x32xf32>
      %c28 = arith.constant 28 : index
      %c0_12 = arith.constant 0 : index
      %14 = vector.load %arg6[%c28, %c0_12] : memref<784x32xf32, #tpu.memory_space<vmem>>, vector<755x32xf32>
      %c29 = arith.constant 29 : index
      %c0_13 = arith.constant 0 : index
      %15 = vector.load %arg6[%c29, %c0_13] : memref<784x32xf32, #tpu.memory_space<vmem>>, vector<755x32xf32>
      %16 = arith.maximumf %12, %13 : vector<755x32xf32>
      %17 = arith.maximumf %14, %15 : vector<755x32xf32>
      %18 = arith.maximumf %16, %17 : vector<755x32xf32>
      %19 = arith.truncf %18 : vector<755x32xf32> to vector<755x32xbf16>
      %c0_14 = arith.constant 0 : index
      %c0_15 = arith.constant 0 : index
      %20 = vector.load %arg4[%c0_14, %c0_15] : memref<258x755xbf16, #tpu.memory_space<vmem>>, vector<258x755xbf16>
      %cst_16 = arith.constant dense<0.000000e+00> : vector<258x32xf32>
      %21 = tpu.matmul %20, %19, %cst_16 {dimension_numbers = #tpu.dot_dimension_numbers<[1], [0], [0], [1], [0, 0, 1, 1], [], []>} : vector<258x755xbf16>, vector<755x32xbf16>, vector<258x32xf32> -> vector<258x32xf32>
      %22 = arith.truncf %21 : vector<258x32xf32> to vector<258x32xbf16>
      %23 = arith.index_cast %arg7 : i32 to index
      %c0_17 = arith.constant 0 : index
      %c0_18 = arith.constant 0 : index
      %24 = vector.load %arg5[%23, %c0_17, %c0_18] : memref<2x258x32xbf16, #tpu.memory_space<vmem>>, vector<1x258x32xbf16>
      %25 = vector.shape_cast %24 : vector<1x258x32xbf16> to vector<258x32xbf16>
      %26 = vector.shape_cast %22 : vector<258x32xbf16> to vector<1x258x32xbf16>
      tpu.vector_store %arg5[%23, %c0_17, %c0_18], %26 {strides = array<i32>} : memref<2x258x32xbf16, #tpu.memory_space<vmem>>, vector<1x258x32xbf16>,
    }
    %c2_i32_0 = arith.constant 2 : i32
    return
  }
  func.func @transform_0(%arg0: i32) -> (i32, i32, i32) {
    %c0_i32 = arith.constant 0 : i32
    %c0_i32_0 = arith.constant 0 : i32
    %c0_i32_1 = arith.constant 0 : i32
    return %arg0, %c0_i32, %c0_i32_0 : i32, i32, i32
  }
  func.func @transform_1(%arg0: i32) -> (i32, i32) {
    %c0_i32 = arith.constant 0 : i32
    %c0_i32_0 = arith.constant 0 : i32
    %c0_i32_1 = arith.constant 0 : i32
    return %c0_i32, %c0_i32_0 : i32, i32
  }
  func.func @transform_2(%arg0: i32) -> (i32, i32) {
    %c0_i32 = arith.constant 0 : i32
    %c0_i32_0 = arith.constant 0 : i32
    %c0_i32_1 = arith.constant 0 : i32
    return %c0_i32, %c0_i32_0 : i32, i32
  }
  func.func @transform_3(%arg0: i32) -> (i32, i32) {
    %c0_i32 = arith.constant 0 : i32
    %c0_i32_0 = arith.constant 0 : i32
    %c0_i32_1 = arith.constant 0 : i32
    return %c0_i32, %c0_i32_0 : i32, i32
  }
  func.func @transform_4(%arg0: i32) -> (i32, i32, i32) {
    %c0_i32 = arith.constant 0 : i32
    %c0_i32_0 = arith.constant 0 : i32
    %c0_i32_1 = arith.constant 0 : i32
    return %arg0, %c0_i32, %c0_i32_0 : i32, i32, i32
  }
}

module attributes {stable_mosaic.version = 11 : i64} {
  func.func @_conv_stage_kernel(%arg0: i32, %arg1: memref<2x258x32xbf16, #tpu.memory_space<vmem>>, %arg2: memref<288x64xbf16, #tpu.memory_space<vmem>>, %arg3: memref<1x64xf32, #tpu.memory_space<vmem>>, %arg4: memref<83x207xbf16, #tpu.memory_space<vmem>>, %arg5: memref<2x83x64xbf16, #tpu.memory_space<vmem>>, %arg6: memref<224x64xf32, #tpu.memory_space<vmem>>) attributes {dimension_semantics = [#tpu.dimension_semantics<parallel>], iteration_bounds = array<i64: 1>, scalar_prefetch = 0 : i64, scratch_operands = 1 : i64, tpu.core_type = #tpu.core_type<tc>, window_params = [{transform_indices = @transform_0, window_bounds = array<i64: 2, 258, 32>}, {pipeline_mode = #tpu.pipeline_mode<synchronous>, transform_indices = @transform_1, window_bounds = array<i64: 288, 64>}, {pipeline_mode = #tpu.pipeline_mode<synchronous>, transform_indices = @transform_2, window_bounds = array<i64: 1, 64>}, {pipeline_mode = #tpu.pipeline_mode<synchronous>, transform_indices = @transform_3, window_bounds = array<i64: 83, 207>}, {transform_indices = @transform_4, window_bounds = array<i64: 2, 83, 64>}]} {
    %c0_i32 = arith.constant 0 : i32
    %c2_i32 = arith.constant 2 : i32
    %0 = arith.addi %c0_i32, %c2_i32 : i32
    %c1_i32 = arith.constant 1 : i32
    scf.for %arg7 = %c0_i32 to %0 step %c1_i32  : i32 {
      %1 = arith.index_cast %arg7 : i32 to index
      %c0 = arith.constant 0 : index
      %c0_1 = arith.constant 0 : index
      %2 = vector.load %arg1[%1, %c0, %c0_1] : memref<2x258x32xbf16, #tpu.memory_space<vmem>>, vector<1x224x32xbf16>
      %3 = vector.shape_cast %2 : vector<1x224x32xbf16> to vector<224x32xbf16>
      %4 = arith.index_cast %arg7 : i32 to index
      %c1 = arith.constant 1 : index
      %c0_2 = arith.constant 0 : index
      %5 = vector.load %arg1[%4, %c1, %c0_2] : memref<2x258x32xbf16, #tpu.memory_space<vmem>>, vector<1x224x32xbf16>
      %6 = vector.shape_cast %5 : vector<1x224x32xbf16> to vector<224x32xbf16>
      %7 = arith.index_cast %arg7 : i32 to index
      %c2 = arith.constant 2 : index
      %c0_3 = arith.constant 0 : index
      %8 = vector.load %arg1[%7, %c2, %c0_3] : memref<2x258x32xbf16, #tpu.memory_space<vmem>>, vector<1x224x32xbf16>
      %9 = vector.shape_cast %8 : vector<1x224x32xbf16> to vector<224x32xbf16>
      %10 = arith.index_cast %arg7 : i32 to index
      %c16 = arith.constant 16 : index
      %c0_4 = arith.constant 0 : index
      %11 = vector.load %arg1[%10, %c16, %c0_4] : memref<2x258x32xbf16, #tpu.memory_space<vmem>>, vector<1x224x32xbf16>
      %12 = vector.shape_cast %11 : vector<1x224x32xbf16> to vector<224x32xbf16>
      %13 = arith.index_cast %arg7 : i32 to index
      %c17 = arith.constant 17 : index
      %c0_5 = arith.constant 0 : index
      %14 = vector.load %arg1[%13, %c17, %c0_5] : memref<2x258x32xbf16, #tpu.memory_space<vmem>>, vector<1x224x32xbf16>
      %15 = vector.shape_cast %14 : vector<1x224x32xbf16> to vector<224x32xbf16>
      %16 = arith.index_cast %arg7 : i32 to index
      %c18 = arith.constant 18 : index
      %c0_6 = arith.constant 0 : index
      %17 = vector.load %arg1[%16, %c18, %c0_6] : memref<2x258x32xbf16, #tpu.memory_space<vmem>>, vector<1x224x32xbf16>
      %18 = vector.shape_cast %17 : vector<1x224x32xbf16> to vector<224x32xbf16>
      %19 = arith.index_cast %arg7 : i32 to index
      %c32 = arith.constant 32 : index
      %c0_7 = arith.constant 0 : index
      %20 = vector.load %arg1[%19, %c32, %c0_7] : memref<2x258x32xbf16, #tpu.memory_space<vmem>>, vector<1x224x32xbf16>
      %21 = vector.shape_cast %20 : vector<1x224x32xbf16> to vector<224x32xbf16>
      %22 = arith.index_cast %arg7 : i32 to index
      %c33 = arith.constant 33 : index
      %c0_8 = arith.constant 0 : index
      %23 = vector.load %arg1[%22, %c33, %c0_8] : memref<2x258x32xbf16, #tpu.memory_space<vmem>>, vector<1x224x32xbf16>
      %24 = vector.shape_cast %23 : vector<1x224x32xbf16> to vector<224x32xbf16>
      %25 = arith.index_cast %arg7 : i32 to index
      %c34 = arith.constant 34 : index
      %c0_9 = arith.constant 0 : index
      %26 = vector.load %arg1[%25, %c34, %c0_9] : memref<2x258x32xbf16, #tpu.memory_space<vmem>>, vector<1x224x32xbf16>
      %27 = vector.shape_cast %26 : vector<1x224x32xbf16> to vector<224x32xbf16>
      %28 = tpu.concatenate %3, %6, %9, %12, %15, %18, %21, %24, %27 in 1 : vector<224x32xbf16>, vector<224x32xbf16>, vector<224x32xbf16>, vector<224x32xbf16>, vector<224x32xbf16>, vector<224x32xbf16>, vector<224x32xbf16>, vector<224x32xbf16>, vector<224x32xbf16> -> vector<224x288xbf16>
      %c0_10 = arith.constant 0 : index
      %c0_11 = arith.constant 0 : index
      %29 = vector.load %arg2[%c0_10, %c0_11] : memref<288x64xbf16, #tpu.memory_space<vmem>>, vector<288x64xbf16>
      %cst = arith.constant dense<0.000000e+00> : vector<224x64xf32>
      %30 = tpu.matmul %28, %29, %cst {dimension_numbers = #tpu.dot_dimension_numbers<[1], [0], [0], [1], [0, 0, 1, 1], [], []>} : vector<224x288xbf16>, vector<288x64xbf16>, vector<224x64xf32> -> vector<224x64xf32>
      %c0_12 = arith.constant 0 : index
      %c0_13 = arith.constant 0 : index
      %31 = vector.load %arg3[%c0_12, %c0_13] : memref<1x64xf32, #tpu.memory_space<vmem>>, vector<1x64xf32>
      %32 = vector.broadcast %31 : vector<1x64xf32> to vector<224x64xf32>
      %33 = arith.addf %30, %32 : vector<224x64xf32>
      %cst_14 = arith.constant 0.000000e+00 : f32
      %34 = vector.broadcast %cst_14 : f32 to vector<224x64xf32>
      %35 = arith.maximumf %33, %34 : vector<224x64xf32>
      %c0_15 = arith.constant 0 : index
      %c0_16 = arith.constant 0 : index
      %36 = vector.load %arg6[%c0_15, %c0_16] : memref<224x64xf32, #tpu.memory_space<vmem>>, vector<224x64xf32>
      tpu.vector_store %arg6[%c0_15, %c0_16], %35 {strides = array<i32>} : memref<224x64xf32, #tpu.memory_space<vmem>>, vector<224x64xf32>,
      %c0_17 = arith.constant 0 : index
      %c0_18 = arith.constant 0 : index
      %37 = vector.load %arg6[%c0_17, %c0_18] : memref<224x64xf32, #tpu.memory_space<vmem>>, vector<207x64xf32>
      %c1_19 = arith.constant 1 : index
      %c0_20 = arith.constant 0 : index
      %38 = vector.load %arg6[%c1_19, %c0_20] : memref<224x64xf32, #tpu.memory_space<vmem>>, vector<207x64xf32>
      %c16_21 = arith.constant 16 : index
      %c0_22 = arith.constant 0 : index
      %39 = vector.load %arg6[%c16_21, %c0_22] : memref<224x64xf32, #tpu.memory_space<vmem>>, vector<207x64xf32>
      %c17_23 = arith.constant 17 : index
      %c0_24 = arith.constant 0 : index
      %40 = vector.load %arg6[%c17_23, %c0_24] : memref<224x64xf32, #tpu.memory_space<vmem>>, vector<207x64xf32>
      %41 = arith.maximumf %37, %38 : vector<207x64xf32>
      %42 = arith.maximumf %39, %40 : vector<207x64xf32>
      %43 = arith.maximumf %41, %42 : vector<207x64xf32>
      %44 = arith.truncf %43 : vector<207x64xf32> to vector<207x64xbf16>
      %c0_25 = arith.constant 0 : index
      %c0_26 = arith.constant 0 : index
      %45 = vector.load %arg4[%c0_25, %c0_26] : memref<83x207xbf16, #tpu.memory_space<vmem>>, vector<83x207xbf16>
      %cst_27 = arith.constant dense<0.000000e+00> : vector<83x64xf32>
      %46 = tpu.matmul %45, %44, %cst_27 {dimension_numbers = #tpu.dot_dimension_numbers<[1], [0], [0], [1], [0, 0, 1, 1], [], []>} : vector<83x207xbf16>, vector<207x64xbf16>, vector<83x64xf32> -> vector<83x64xf32>
      %47 = arith.truncf %46 : vector<83x64xf32> to vector<83x64xbf16>
      %48 = arith.index_cast %arg7 : i32 to index
      %c0_28 = arith.constant 0 : index
      %c0_29 = arith.constant 0 : index
      %49 = vector.load %arg5[%48, %c0_28, %c0_29] : memref<2x83x64xbf16, #tpu.memory_space<vmem>>, vector<1x83x64xbf16>
      %50 = vector.shape_cast %49 : vector<1x83x64xbf16> to vector<83x64xbf16>
      %51 = vector.shape_cast %47 : vector<83x64xbf16> to vector<1x83x64xbf16>
      tpu.vector_store %arg5[%48, %c0_28, %c0_29], %51 {strides = array<i32>} : memref<2x83x64xbf16, #tpu.memory_space<vmem>>, vector<1x83x64xbf16>,
    }
    %c2_i32_0 = arith.constant 2 : i32
    return
  }
  func.func @transform_0(%arg0: i32) -> (i32, i32, i32) {
    %c0_i32 = arith.constant 0 : i32
    %c0_i32_0 = arith.constant 0 : i32
    %c0_i32_1 = arith.constant 0 : i32
    return %arg0, %c0_i32, %c0_i32_0 : i32, i32, i32
  }
  func.func @transform_1(%arg0: i32) -> (i32, i32) {
    %c0_i32 = arith.constant 0 : i32
    %c0_i32_0 = arith.constant 0 : i32
    %c0_i32_1 = arith.constant 0 : i32
    return %c0_i32, %c0_i32_0 : i32, i32
  }
  func.func @transform_2(%arg0: i32) -> (i32, i32) {
    %c0_i32 = arith.constant 0 : i32
    %c0_i32_0 = arith.constant 0 : i32
    %c0_i32_1 = arith.constant 0 : i32
    return %c0_i32, %c0_i32_0 : i32, i32
  }
  func.func @transform_3(%arg0: i32) -> (i32, i32) {
    %c0_i32 = arith.constant 0 : i32
    %c0_i32_0 = arith.constant 0 : i32
    %c0_i32_1 = arith.constant 0 : i32
    return %c0_i32, %c0_i32_0 : i32, i32
  }
  func.func @transform_4(%arg0: i32) -> (i32, i32, i32) {
    %c0_i32 = arith.constant 0 : i32
    %c0_i32_0 = arith.constant 0 : i32
    %c0_i32_1 = arith.constant 0 : i32
    return %arg0, %c0_i32, %c0_i32_0 : i32, i32, i32
  }
}

module attributes {stable_mosaic.version = 11 : i64} {
  func.func @_conv_stage_kernel(%arg0: i32, %arg1: memref<2x83x64xbf16, #tpu.memory_space<vmem>>, %arg2: memref<576x128xbf16, #tpu.memory_space<vmem>>, %arg3: memref<1x128xf32, #tpu.memory_space<vmem>>, %arg4: memref<9x53xbf16, #tpu.memory_space<vmem>>, %arg5: memref<2x9x128xbf16, #tpu.memory_space<vmem>>, %arg6: memref<63x128xf32, #tpu.memory_space<vmem>>) attributes {dimension_semantics = [#tpu.dimension_semantics<parallel>], iteration_bounds = array<i64: 1>, scalar_prefetch = 0 : i64, scratch_operands = 1 : i64, tpu.core_type = #tpu.core_type<tc>, window_params = [{transform_indices = @transform_0, window_bounds = array<i64: 2, 83, 64>}, {pipeline_mode = #tpu.pipeline_mode<synchronous>, transform_indices = @transform_1, window_bounds = array<i64: 576, 128>}, {pipeline_mode = #tpu.pipeline_mode<synchronous>, transform_indices = @transform_2, window_bounds = array<i64: 1, 128>}, {pipeline_mode = #tpu.pipeline_mode<synchronous>, transform_indices = @transform_3, window_bounds = array<i64: 9, 53>}, {transform_indices = @transform_4, window_bounds = array<i64: 2, 9, 128>}]} {
    %c0_i32 = arith.constant 0 : i32
    %c2_i32 = arith.constant 2 : i32
    %0 = arith.addi %c0_i32, %c2_i32 : i32
    %c1_i32 = arith.constant 1 : i32
    scf.for %arg7 = %c0_i32 to %0 step %c1_i32  : i32 {
      %1 = arith.index_cast %arg7 : i32 to index
      %c0 = arith.constant 0 : index
      %c0_1 = arith.constant 0 : index
      %2 = vector.load %arg1[%1, %c0, %c0_1] : memref<2x83x64xbf16, #tpu.memory_space<vmem>>, vector<1x63x64xbf16>
      %3 = vector.shape_cast %2 : vector<1x63x64xbf16> to vector<63x64xbf16>
      %4 = arith.index_cast %arg7 : i32 to index
      %c1 = arith.constant 1 : index
      %c0_2 = arith.constant 0 : index
      %5 = vector.load %arg1[%4, %c1, %c0_2] : memref<2x83x64xbf16, #tpu.memory_space<vmem>>, vector<1x63x64xbf16>
      %6 = vector.shape_cast %5 : vector<1x63x64xbf16> to vector<63x64xbf16>
      %7 = arith.index_cast %arg7 : i32 to index
      %c2 = arith.constant 2 : index
      %c0_3 = arith.constant 0 : index
      %8 = vector.load %arg1[%7, %c2, %c0_3] : memref<2x83x64xbf16, #tpu.memory_space<vmem>>, vector<1x63x64xbf16>
      %9 = vector.shape_cast %8 : vector<1x63x64xbf16> to vector<63x64xbf16>
      %10 = arith.index_cast %arg7 : i32 to index
      %c9 = arith.constant 9 : index
      %c0_4 = arith.constant 0 : index
      %11 = vector.load %arg1[%10, %c9, %c0_4] : memref<2x83x64xbf16, #tpu.memory_space<vmem>>, vector<1x63x64xbf16>
      %12 = vector.shape_cast %11 : vector<1x63x64xbf16> to vector<63x64xbf16>
      %13 = arith.index_cast %arg7 : i32 to index
      %c10 = arith.constant 10 : index
      %c0_5 = arith.constant 0 : index
      %14 = vector.load %arg1[%13, %c10, %c0_5] : memref<2x83x64xbf16, #tpu.memory_space<vmem>>, vector<1x63x64xbf16>
      %15 = vector.shape_cast %14 : vector<1x63x64xbf16> to vector<63x64xbf16>
      %16 = arith.index_cast %arg7 : i32 to index
      %c11 = arith.constant 11 : index
      %c0_6 = arith.constant 0 : index
      %17 = vector.load %arg1[%16, %c11, %c0_6] : memref<2x83x64xbf16, #tpu.memory_space<vmem>>, vector<1x63x64xbf16>
      %18 = vector.shape_cast %17 : vector<1x63x64xbf16> to vector<63x64xbf16>
      %19 = arith.index_cast %arg7 : i32 to index
      %c18 = arith.constant 18 : index
      %c0_7 = arith.constant 0 : index
      %20 = vector.load %arg1[%19, %c18, %c0_7] : memref<2x83x64xbf16, #tpu.memory_space<vmem>>, vector<1x63x64xbf16>
      %21 = vector.shape_cast %20 : vector<1x63x64xbf16> to vector<63x64xbf16>
      %22 = arith.index_cast %arg7 : i32 to index
      %c19 = arith.constant 19 : index
      %c0_8 = arith.constant 0 : index
      %23 = vector.load %arg1[%22, %c19, %c0_8] : memref<2x83x64xbf16, #tpu.memory_space<vmem>>, vector<1x63x64xbf16>
      %24 = vector.shape_cast %23 : vector<1x63x64xbf16> to vector<63x64xbf16>
      %25 = arith.index_cast %arg7 : i32 to index
      %c20 = arith.constant 20 : index
      %c0_9 = arith.constant 0 : index
      %26 = vector.load %arg1[%25, %c20, %c0_9] : memref<2x83x64xbf16, #tpu.memory_space<vmem>>, vector<1x63x64xbf16>
      %27 = vector.shape_cast %26 : vector<1x63x64xbf16> to vector<63x64xbf16>
      %28 = tpu.concatenate %3, %6, %9, %12, %15, %18, %21, %24, %27 in 1 : vector<63x64xbf16>, vector<63x64xbf16>, vector<63x64xbf16>, vector<63x64xbf16>, vector<63x64xbf16>, vector<63x64xbf16>, vector<63x64xbf16>, vector<63x64xbf16>, vector<63x64xbf16> -> vector<63x576xbf16>
      %c0_10 = arith.constant 0 : index
      %c0_11 = arith.constant 0 : index
      %29 = vector.load %arg2[%c0_10, %c0_11] : memref<576x128xbf16, #tpu.memory_space<vmem>>, vector<576x128xbf16>
      %cst = arith.constant dense<0.000000e+00> : vector<63x128xf32>
      %30 = tpu.matmul %28, %29, %cst {dimension_numbers = #tpu.dot_dimension_numbers<[1], [0], [0], [1], [0, 0, 1, 1], [], []>} : vector<63x576xbf16>, vector<576x128xbf16>, vector<63x128xf32> -> vector<63x128xf32>
      %c0_12 = arith.constant 0 : index
      %c0_13 = arith.constant 0 : index
      %31 = vector.load %arg3[%c0_12, %c0_13] : memref<1x128xf32, #tpu.memory_space<vmem>>, vector<1x128xf32>
      %32 = vector.broadcast %31 : vector<1x128xf32> to vector<63x128xf32>
      %33 = arith.addf %30, %32 : vector<63x128xf32>
      %cst_14 = arith.constant 0.000000e+00 : f32
      %34 = vector.broadcast %cst_14 : f32 to vector<63x128xf32>
      %35 = arith.maximumf %33, %34 : vector<63x128xf32>
      %c0_15 = arith.constant 0 : index
      %c0_16 = arith.constant 0 : index
      %36 = vector.load %arg6[%c0_15, %c0_16] : memref<63x128xf32, #tpu.memory_space<vmem>>, vector<63x128xf32>
      tpu.vector_store %arg6[%c0_15, %c0_16], %35 {strides = array<i32>} : memref<63x128xf32, #tpu.memory_space<vmem>>, vector<63x128xf32>,
      %c0_17 = arith.constant 0 : index
      %c0_18 = arith.constant 0 : index
      %37 = vector.load %arg6[%c0_17, %c0_18] : memref<63x128xf32, #tpu.memory_space<vmem>>, vector<53x128xf32>
      %c1_19 = arith.constant 1 : index
      %c0_20 = arith.constant 0 : index
      %38 = vector.load %arg6[%c1_19, %c0_20] : memref<63x128xf32, #tpu.memory_space<vmem>>, vector<53x128xf32>
      %c9_21 = arith.constant 9 : index
      %c0_22 = arith.constant 0 : index
      %39 = vector.load %arg6[%c9_21, %c0_22] : memref<63x128xf32, #tpu.memory_space<vmem>>, vector<53x128xf32>
      %c10_23 = arith.constant 10 : index
      %c0_24 = arith.constant 0 : index
      %40 = vector.load %arg6[%c10_23, %c0_24] : memref<63x128xf32, #tpu.memory_space<vmem>>, vector<53x128xf32>
      %41 = arith.maximumf %37, %38 : vector<53x128xf32>
      %42 = arith.maximumf %39, %40 : vector<53x128xf32>
      %43 = arith.maximumf %41, %42 : vector<53x128xf32>
      %44 = arith.truncf %43 : vector<53x128xf32> to vector<53x128xbf16>
      %c0_25 = arith.constant 0 : index
      %c0_26 = arith.constant 0 : index
      %45 = vector.load %arg4[%c0_25, %c0_26] : memref<9x53xbf16, #tpu.memory_space<vmem>>, vector<9x53xbf16>
      %cst_27 = arith.constant dense<0.000000e+00> : vector<9x128xf32>
      %46 = tpu.matmul %45, %44, %cst_27 {dimension_numbers = #tpu.dot_dimension_numbers<[1], [0], [0], [1], [0, 0, 1, 1], [], []>} : vector<9x53xbf16>, vector<53x128xbf16>, vector<9x128xf32> -> vector<9x128xf32>
      %47 = arith.truncf %46 : vector<9x128xf32> to vector<9x128xbf16>
      %48 = arith.index_cast %arg7 : i32 to index
      %c0_28 = arith.constant 0 : index
      %c0_29 = arith.constant 0 : index
      %49 = vector.load %arg5[%48, %c0_28, %c0_29] : memref<2x9x128xbf16, #tpu.memory_space<vmem>>, vector<1x9x128xbf16>
      %50 = vector.shape_cast %49 : vector<1x9x128xbf16> to vector<9x128xbf16>
      %51 = vector.shape_cast %47 : vector<9x128xbf16> to vector<1x9x128xbf16>
      tpu.vector_store %arg5[%48, %c0_28, %c0_29], %51 {strides = array<i32>} : memref<2x9x128xbf16, #tpu.memory_space<vmem>>, vector<1x9x128xbf16>,
    }
    %c2_i32_0 = arith.constant 2 : i32
    return
  }
  func.func @transform_0(%arg0: i32) -> (i32, i32, i32) {
    %c0_i32 = arith.constant 0 : i32
    %c0_i32_0 = arith.constant 0 : i32
    %c0_i32_1 = arith.constant 0 : i32
    return %arg0, %c0_i32, %c0_i32_0 : i32, i32, i32
  }
  func.func @transform_1(%arg0: i32) -> (i32, i32) {
    %c0_i32 = arith.constant 0 : i32
    %c0_i32_0 = arith.constant 0 : i32
    %c0_i32_1 = arith.constant 0 : i32
    return %c0_i32, %c0_i32_0 : i32, i32
  }
  func.func @transform_2(%arg0: i32) -> (i32, i32) {
    %c0_i32 = arith.constant 0 : i32
    %c0_i32_0 = arith.constant 0 : i32
    %c0_i32_1 = arith.constant 0 : i32
    return %c0_i32, %c0_i32_0 : i32, i32
  }
  func.func @transform_3(%arg0: i32) -> (i32, i32) {
    %c0_i32 = arith.constant 0 : i32
    %c0_i32_0 = arith.constant 0 : i32
    %c0_i32_1 = arith.constant 0 : i32
    return %c0_i32, %c0_i32_0 : i32, i32
  }
  func.func @transform_4(%arg0: i32) -> (i32, i32, i32) {
    %c0_i32 = arith.constant 0 : i32
    %c0_i32_0 = arith.constant 0 : i32
    %c0_i32_1 = arith.constant 0 : i32
    return %arg0, %c0_i32, %c0_i32_0 : i32, i32, i32
  }
}

module attributes {stable_mosaic.version = 11 : i64} {
  func.func @_fc_head_kernel(%arg0: i32, %arg1: memref<2x1152xbf16, #tpu.memory_space<vmem>>, %arg2: memref<1152x128xbf16, #tpu.memory_space<vmem>>, %arg3: memref<1x128xf32, #tpu.memory_space<vmem>>, %arg4: memref<128x128xbf16, #tpu.memory_space<vmem>>, %arg5: memref<1x128xf32, #tpu.memory_space<vmem>>, %arg6: memref<2x128xf32, #tpu.memory_space<vmem>>) attributes {dimension_semantics = [#tpu.dimension_semantics<parallel>], iteration_bounds = array<i64: 1>, scalar_prefetch = 0 : i64, scratch_operands = 0 : i64, tpu.core_type = #tpu.core_type<tc>, window_params = [{transform_indices = @transform_0, window_bounds = array<i64: 2, 1152>}, {pipeline_mode = #tpu.pipeline_mode<synchronous>, transform_indices = @transform_1, window_bounds = array<i64: 1152, 128>}, {pipeline_mode = #tpu.pipeline_mode<synchronous>, transform_indices = @transform_2, window_bounds = array<i64: 1, 128>}, {pipeline_mode = #tpu.pipeline_mode<synchronous>, transform_indices = @transform_3, window_bounds = array<i64: 128, 128>}, {pipeline_mode = #tpu.pipeline_mode<synchronous>, transform_indices = @transform_4, window_bounds = array<i64: 1, 128>}, {transform_indices = @transform_5, window_bounds = array<i64: 2, 128>}]} {
    %c0 = arith.constant 0 : index
    %c0_0 = arith.constant 0 : index
    %0 = vector.load %arg1[%c0, %c0_0] : memref<2x1152xbf16, #tpu.memory_space<vmem>>, vector<2x1152xbf16>
    %c0_1 = arith.constant 0 : index
    %c0_2 = arith.constant 0 : index
    %1 = vector.load %arg2[%c0_1, %c0_2] : memref<1152x128xbf16, #tpu.memory_space<vmem>>, vector<1152x128xbf16>
    %cst = arith.constant dense<0.000000e+00> : vector<2x128xf32>
    %2 = tpu.matmul %0, %1, %cst {dimension_numbers = #tpu.dot_dimension_numbers<[1], [0], [0], [1], [0, 0, 1, 1], [], []>} : vector<2x1152xbf16>, vector<1152x128xbf16>, vector<2x128xf32> -> vector<2x128xf32>
    %c0_3 = arith.constant 0 : index
    %c0_4 = arith.constant 0 : index
    %3 = vector.load %arg3[%c0_3, %c0_4] : memref<1x128xf32, #tpu.memory_space<vmem>>, vector<1x128xf32>
    %4 = vector.broadcast %3 : vector<1x128xf32> to vector<2x128xf32>
    %5 = arith.addf %2, %4 : vector<2x128xf32>
    %cst_5 = arith.constant 0.000000e+00 : f32
    %6 = vector.broadcast %cst_5 : f32 to vector<2x128xf32>
    %7 = arith.maximumf %5, %6 : vector<2x128xf32>
    %8 = arith.truncf %7 : vector<2x128xf32> to vector<2x128xbf16>
    %c0_6 = arith.constant 0 : index
    %c0_7 = arith.constant 0 : index
    %9 = vector.load %arg4[%c0_6, %c0_7] : memref<128x128xbf16, #tpu.memory_space<vmem>>, vector<128x128xbf16>
    %cst_8 = arith.constant dense<0.000000e+00> : vector<2x128xf32>
    %10 = tpu.matmul %8, %9, %cst_8 {dimension_numbers = #tpu.dot_dimension_numbers<[1], [0], [0], [1], [0, 0, 1, 1], [], []>} : vector<2x128xbf16>, vector<128x128xbf16>, vector<2x128xf32> -> vector<2x128xf32>
    %c0_9 = arith.constant 0 : index
    %c0_10 = arith.constant 0 : index
    %11 = vector.load %arg5[%c0_9, %c0_10] : memref<1x128xf32, #tpu.memory_space<vmem>>, vector<1x128xf32>
    %12 = vector.broadcast %11 : vector<1x128xf32> to vector<2x128xf32>
    %13 = arith.addf %10, %12 : vector<2x128xf32>
    %cst_11 = arith.constant dense<0xFF800000> : vector<2xf32>
    %14 = vector.multi_reduction <maximumf>, %13, %cst_11 [1] : vector<2x128xf32> to vector<2xf32>
    %15 = vector.shape_cast %14 : vector<2xf32> to vector<2x1xf32>
    %16 = vector.broadcast %15 : vector<2x1xf32> to vector<2x128xf32>
    %17 = arith.subf %13, %16 : vector<2x128xf32>
    %18 = math.exp %17 : vector<2x128xf32>
    %cst_12 = arith.constant dense<0.000000e+00> : vector<2xf32>
    %19 = vector.multi_reduction <add>, %18, %cst_12 [1] : vector<2x128xf32> to vector<2xf32>
    %20 = vector.shape_cast %19 : vector<2xf32> to vector<2x1xf32>
    %21 = math.log %20 : vector<2x1xf32>
    %22 = vector.broadcast %21 : vector<2x1xf32> to vector<2x128xf32>
    %23 = arith.subf %17, %22 : vector<2x128xf32>
    %c0_13 = arith.constant 0 : index
    %c0_14 = arith.constant 0 : index
    %24 = vector.load %arg6[%c0_13, %c0_14] : memref<2x128xf32, #tpu.memory_space<vmem>>, vector<2x128xf32>
    tpu.vector_store %arg6[%c0_13, %c0_14], %23 {strides = array<i32>} : memref<2x128xf32, #tpu.memory_space<vmem>>, vector<2x128xf32>,
    return
  }
  func.func @transform_0(%arg0: i32) -> (i32, i32) {
    %c0_i32 = arith.constant 0 : i32
    %c0_i32_0 = arith.constant 0 : i32
    return %arg0, %c0_i32 : i32, i32
  }
  func.func @transform_1(%arg0: i32) -> (i32, i32) {
    %c0_i32 = arith.constant 0 : i32
    %c0_i32_0 = arith.constant 0 : i32
    %c0_i32_1 = arith.constant 0 : i32
    return %c0_i32, %c0_i32_0 : i32, i32
  }
  func.func @transform_2(%arg0: i32) -> (i32, i32) {
    %c0_i32 = arith.constant 0 : i32
    %c0_i32_0 = arith.constant 0 : i32
    %c0_i32_1 = arith.constant 0 : i32
    return %c0_i32, %c0_i32_0 : i32, i32
  }
  func.func @transform_3(%arg0: i32) -> (i32, i32) {
    %c0_i32 = arith.constant 0 : i32
    %c0_i32_0 = arith.constant 0 : i32
    %c0_i32_1 = arith.constant 0 : i32
    return %c0_i32, %c0_i32_0 : i32, i32
  }
  func.func @transform_4(%arg0: i32) -> (i32, i32) {
    %c0_i32 = arith.constant 0 : i32
    %c0_i32_0 = arith.constant 0 : i32
    %c0_i32_1 = arith.constant 0 : i32
    return %c0_i32, %c0_i32_0 : i32, i32
  }
  func.func @transform_5(%arg0: i32) -> (i32, i32) {
    %c0_i32 = arith.constant 0 : i32
    %c0_i32_0 = arith.constant 0 : i32
    return %arg0, %c0_i32 : i32, i32
  }
}

</mosaic_0001>

<llo_original>
// kernel: convnet_forward.6
$region0: #{convnet_forward.6}
  #allocation0 [shape = 'u32[]', space=smem, size = 0x4, offset = 0x4, fixed_abs, tag = 'smem constant byte address 0x4 - core index']
  #allocation1 [shape = 'u32[72,128]{1,0:T(1,128)}', space=vmem, size = 0x9000, scoped, tag = 'internal scratch']
  #allocation2 [shape = 'f32[63,128]{1,0:T(8,128)}', space=vmem, size = 0x8000, scoped, tag = 'scratch operand']
  %s0 = inlined_call_operand.vmem [shape: bf16[2,83,64], index: 0, kind: input, shape index: {}]
  %s1 = inlined_call_operand.vmem [shape: bf16[576,128], index: 1, kind: input, shape index: {}]
  %s2 = inlined_call_operand.vmem [shape: f32[1,128], index: 2, kind: input, shape index: {}]
  %s3 = inlined_call_operand.vmem [shape: bf16[9,53], index: 3, kind: input, shape index: {}]
  %s4 = inlined_call_operand.vmem [shape: bf16[2,9,128], index: 4, kind: output, shape index: {}]
  %s5 = sld [smem:[#allocation0]]
  $region33: #{convnet_forward.6} parent=0
    _
  %s7 = ssub.s32 1, %s5
  %s8 = scalar_select 0, %s7, %s5
  // Predicated region
  $region2: #{convnet_forward.6} parent=0 // pred_check
    _
  $region3: #{convnet_forward.6} parent=0 // pred_check_branch
    %10 = sbr.rel (0) target = $region5
  $region4: #{convnet_forward.6} parent=0 // pred_region
    _
  $region5: #{convnet_forward.6} parent=0 // pred_fallthru
    _
  // Predicated region
  $region6: #{convnet_forward.6} parent=0 // pred_check
    _
  $region7: #{convnet_forward.6} parent=0 // pred_check_branch
    %12 = sbr.rel (0) target = $region9
  $region8: #{convnet_forward.6} parent=0 // pred_region
    _
  $region9: #{convnet_forward.6} parent=0 // pred_fallthru
    _
  // Predicated region
  $region10: #{convnet_forward.6} parent=0 // pred_check
    _
  $region11: #{convnet_forward.6} parent=0 // pred_check_branch
    %14 = sbr.rel (0) target = $region13
  $region12: #{convnet_forward.6} parent=0 // pred_region
    _
  $region13: #{convnet_forward.6} parent=0 // pred_fallthru
    _
  // Predicated region
  $region14: #{convnet_forward.6} parent=0 // pred_check
    _
  $region15: #{convnet_forward.6} parent=0 // pred_check_branch
    %16 = sbr.rel (0) target = $region17
  $region16: #{convnet_forward.6} parent=0 // pred_region
    _
  $region17: #{convnet_forward.6} parent=0 // pred_fallthru
    _
  loop: start=0, step=1, limit=2
  $region18: #{convnet_forward.6} parent=0 // loop_pre_header
    _
  $region19: #{convnet_forward.6} parent=0 // loop_header
    %s19 = sphi 0, %s23
    %p20 = scmp.ge.s32.totalorder %s19, 2
  $region20: #{convnet_forward.6} parent=0 // loop_header_branch
    %22 = sbr.rel (%p20) target = $region24
  $region21: #{convnet_forward.6} parent=0 // loop_body
    %s24 = smul.u32 %s19, 11
    %s25 = smul.addr %s24, 4
    %s26 = scalar_lea.vmem %s0, %s25
    %v27 = vld [vmem:[%s26] sm:$0xf]
    %v28 = vld [vmem:[%s26 + $0x4] sm:$0xf]
    %v29 = vld [vmem:[%s26 + $0x8] sm:$0xf]
    %v30 = vld [vmem:[%s26 + $0xc] sm:$0xf]
    %v31 = vld [vmem:[%s26 + $0x10] sm:$0xf]
    %v32 = vld [vmem:[%s26 + $0x14] sm:$0xf]
    %v33 = vld [vmem:[%s26 + $0x18] sm:$0xf]
    %v34 = vld [vmem:[%s26 + $0x1c] sm:$0xf]
    %v35 = vld [vmem:[%s26] sm:$0xe]
    %v36 = vld [vmem:[%s26 + $0x20] sm:$0x1]
    %v37 = vld [vmem:[%s26 + $0x20] sm:$0xf]
    %v38 = vld [vmem:[%s26 + $0x4] sm:$0xe]
    %v39 = vld [vmem:[%s26 + $0x24] sm:$0x1]
    %v40 = vld [vmem:[%s26 + $0x8] sm:$0xe]
    %v41 = vld [vmem:[%s26 + $0x24] sm:$0xf]
    %v42 = vld [vmem:[%s26 + $0x28] sm:$0x1]
    %v43 = vld [vmem:[%s26 + $0x8] sm:$0xc]
    %v44 = vld [vmem:[%s26 + $0x28] sm:$0x3]
    %v53 = vunpack.c.l.b16 %v27
    %v54 = vunpack.c.l.b16 %v28
    %v55 = vunpack.c.l.b16 %v29
    %v56 = vunpack.c.l.b16 %v30
    %v57 = vunpack.c.l.b16 %v31
    %v58 = vunpack.c.l.b16 %v32
    %v59 = vunpack.c.l.b16 %v33
    %v60 = vunpack.c.l.b16 %v34
    %v61 = vpack.c.b16 %v54, %v53
    %v62 = vpack.c.b16 %v56, %v55
    %v63 = vpack.c.b16 %v58, %v57
    %v64 = vpack.c.b16 %v60, %v59
    %vm65 = vsmask.f32 7424
    %v67 = vshrl.u32 %v61, 16
    %v69 = vshll.u32 %v61, 16
    %v71 = vrot.slane %v69, 1
    %v72 = vor.u32 %v67, %v71
    %v74 = vshll.u32 %v62, 16
    %v76 = vrot.slane %v74, 1
    %v77 = vsel %vm65, %v72, %v76
    %v78 = vshrl.u32 %v62, 16
    %v80 = vor.u32 %v78, %v76
    %v82 = vshll.u32 %v63, 16
    %v84 = vrot.slane %v82, 1
    %v85 = vsel %vm65, %v80, %v84
    %v86 = vshrl.u32 %v63, 16
    %v88 = vor.u32 %v86, %v84
    %v90 = vshll.u32 %v64, 16
    %v92 = vrot.slane %v90, 1
    %v93 = vsel %vm65, %v88, %v92
    %v94 = vshrl.u32 %v64, 16
    %v96 = vor.u32 %v94, %v92
    %97 = vrot.lane.b32.xlu0 %v77, 64
    %v98 = vpop.permute.xlu0 %97
    %99 = vrot.lane.b32.xlu0 %v85, 64
    %v100 = vpop.permute.xlu0 %99
    %101 = vrot.lane.b32.xlu0 %v93, 64
    %v102 = vpop.permute.xlu0 %101
    %103 = vrot.lane.b32.xlu0 %v96, 64
    %v104 = vpop.permute.xlu0 %103
    %v107 = vunpack.c.l.b16 %v35
    %v108 = vunpack.c.l.b16 %v36
    %v109 = vpack.c.b16 %v54, %v107
    %v110 = vpack.c.b16 %v108, %v108
    %vm111 = vcmask 1046528
    %v112 = vrot.slane %v109, 1
    %v113 = vrot.slane %v62, 1
    %v114 = vsel %vm111, %v112, %v113
    %v115 = vrot.slane %v63, 1
    %v116 = vsel %vm111, %v113, %v115
    %v117 = vrot.slane %v64, 1
    %v118 = vsel %vm111, %v115, %v117
    %v119 = vrot.slane %v110, 1
    %v120 = vsel %vm111, %v117, %v119
    %v122 = vunpack.c.l.b16 %v37
    %v123 = vpack.c.b16 %v55, %v54
    %v124 = vpack.c.b16 %v57, %v56
    %v125 = vpack.c.b16 %v59, %v58
    %v126 = vpack.c.b16 %v122, %v60
    %v128 = vshrl.u32 %v123, 16
    %v130 = vshll.u32 %v123, 16
    %v132 = vrot.slane %v130, 1
    %v133 = vor.u32 %v128, %v132
    %v135 = vshll.u32 %v124, 16
    %v137 = vrot.slane %v135, 1
    %v138 = vsel %vm65, %v133, %v137
    %v139 = vshrl.u32 %v124, 16
    %v141 = vor.u32 %v139, %v137
    %v143 = vshll.u32 %v125, 16
    %v145 = vrot.slane %v143, 1
    %v146 = vsel %vm65, %v141, %v145
    %v147 = vshrl.u32 %v125, 16
    %v149 = vor.u32 %v147, %v145
    %v151 = vshll.u32 %v126, 16
    %v153 = vrot.slane %v151, 1
    %v154 = vsel %vm65, %v149, %v153
    %v155 = vshrl.u32 %v126, 16
    %v157 = vor.u32 %v155, %v153
    %158 = vrot.lane.b32.xlu0 %v138, 64
    %v159 = vpop.permute.xlu0 %158
    %160 = vrot.lane.b32.xlu0 %v146, 64
    %v161 = vpop.permute.xlu0 %160
    %162 = vrot.lane.b32.xlu0 %v154, 64
    %v163 = vpop.permute.xlu0 %162
    %164 = vrot.lane.b32.xlu0 %v157, 64
    %v165 = vpop.permute.xlu0 %164
    %v168 = vunpack.c.l.b16 %v38
    %v169 = vunpack.c.l.b16 %v39
    %v170 = vpack.c.b16 %v55, %v168
    %v171 = vpack.c.b16 %v169, %v169
    %v172 = vrot.slane %v170, 1
    %v173 = vrot.slane %v124, 1
    %v174 = vsel %vm111, %v172, %v173
    %v175 = vrot.slane %v125, 1
    %v176 = vsel %vm111, %v173, %v175
    %v177 = vrot.slane %v126, 1
    %v178 = vsel %vm111, %v175, %v177
    %v179 = vrot.slane %v171, 1
    %v180 = vsel %vm111, %v177, %v179
    %vm181 = vsmask.f32 6400
    %v183 = vshrl.u32 %v170, 16
    %v185 = vrot.slane %v183, 1
    %v186 = vshll.u32 %v170, 16
    %v188 = vrot.slane %v186, 2
    %v189 = vor.u32 %v185, %v188
    %v190 = vrot.slane %v139, 1
    %v191 = vrot.slane %v135, 2
    %v192 = vor.u32 %v190, %v191
    %v193 = vsel %vm181, %v189, %v192
    %v194 = vrot.slane %v147, 1
    %v195 = vrot.slane %v143, 2
    %v196 = vor.u32 %v194, %v195
    %v197 = vsel %vm181, %v192, %v196
    %v198 = vrot.slane %v155, 1
    %v199 = vrot.slane %v151, 2
    %v200 = vor.u32 %v198, %v199
    %v201 = vsel %vm181, %v196, %v200
    %v203 = vshrl.u32 %v171, 16
    %v205 = vrot.slane %v203, 1
    %v206 = vshll.u32 %v171, 16
    %v208 = vrot.slane %v206, 2
    %v209 = vor.u32 %v205, %v208
    %v210 = vsel %vm181, %v200, %v209
    %211 = vrot.lane.b32.xlu0 %v193, 64
    %v212 = vpop.permute.xlu0 %211
    %213 = vrot.lane.b32.xlu0 %v197, 64
    %v214 = vpop.permute.xlu0 %213
    %215 = vrot.lane.b32.xlu0 %v201, 64
    %v216 = vpop.permute.xlu0 %215
    %217 = vrot.lane.b32.xlu0 %v210, 64
    %v218 = vpop.permute.xlu0 %217
    %v222 = vunpack.c.l.b16 %v40
    %v223 = vunpack.c.l.b16 %v41
    %v224 = vunpack.c.l.b16 %v42
    %v225 = vpack.c.b16 %v56, %v222
    %v226 = vpack.c.b16 %v223, %v122
    %v227 = vpack.c.b16 %v224, %v224
    %v228 = vrot.slane %v225, 1
    %v229 = vsel %vm111, %v228, %v115
    %v230 = vrot.slane %v226, 1
    %v231 = vsel %vm111, %v117, %v230
    %v232 = vrot.slane %v227, 1
    %v233 = vsel %vm111, %v230, %v232
    %v235 = vshrl.u32 %v225, 16
    %v237 = vrot.slane %v235, 1
    %v238 = vshll.u32 %v225, 16
    %v240 = vrot.slane %v238, 2
    %v241 = vor.u32 %v237, %v240
    %v242 = vrot.slane %v86, 1
    %v243 = vrot.slane %v82, 2
    %v244 = vor.u32 %v242, %v243
    %v245 = vsel %vm181, %v241, %v244
    %v246 = vrot.slane %v94, 1
    %v247 = vrot.slane %v90, 2
    %v248 = vor.u32 %v246, %v247
    %v249 = vsel %vm181, %v244, %v248
    %v251 = vshrl.u32 %v226, 16
    %v253 = vrot.slane %v251, 1
    %v254 = vshll.u32 %v226, 16
    %v256 = vrot.slane %v254, 2
    %v257 = vor.u32 %v253, %v256
    %v258 = vsel %vm181, %v248, %v257
    %v260 = vshrl.u32 %v227, 16
    %v262 = vrot.slane %v260, 1
    %v263 = vshll.u32 %v227, 16
    %v265 = vrot.slane %v263, 2
    %v266 = vor.u32 %v262, %v265
    %v267 = vsel %vm181, %v257, %v266
    %268 = vrot.lane.b32.xlu0 %v245, 64
    %v269 = vpop.permute.xlu0 %268
    %270 = vrot.lane.b32.xlu0 %v249, 64
    %v271 = vpop.permute.xlu0 %270
    %272 = vrot.lane.b32.xlu0 %v258, 64
    %v273 = vpop.permute.xlu0 %272
    %274 = vrot.lane.b32.xlu0 %v267, 64
    %v275 = vpop.permute.xlu0 %274
    %v278 = vunpack.c.l.b16 %v43
    %v279 = vunpack.c.l.b16 %v44
    %v280 = vpack.c.b16 %v56, %v278
    %v281 = vpack.c.b16 %v279, %v279
    %vm282 = vcmask 1045504
    %v283 = vrot.slane %v280, 2
    %v284 = vrot.slane %v63, 2
    %v285 = vsel %vm282, %v283, %v284
    %v286 = vrot.slane %v64, 2
    %v287 = vsel %vm282, %v284, %v286
    %v288 = vrot.slane %v226, 2
    %v289 = vsel %vm282, %v286, %v288
    %v290 = vrot.slane %v281, 2
    %v291 = vsel %vm282, %v288, %v290
    %vm292 = vcmask 523264
    %v294 = vsel %vm292, %v61, %v98
    %v297 = vsel %vm292, %v62, %v100
    %v300 = vsel %vm292, %v63, %v102
    %v303 = vsel %vm292, %v64, %v104
    %v307 = vsel %vm292, %v114, %v159
    %v311 = vsel %vm292, %v116, %v161
    %v315 = vsel %vm292, %v118, %v163
    %v319 = vsel %vm292, %v120, %v165
    %v323 = vsel %vm292, %v174, %v212
    %v327 = vsel %vm292, %v176, %v214
    %v331 = vsel %vm292, %v178, %v216
    %v335 = vsel %vm292, %v180, %v218
    %v339 = vsel %vm292, %v229, %v269
    %v342 = vsel %vm292, %v118, %v271
    %v346 = vsel %vm292, %v231, %v273
    %v350 = vsel %vm292, %v233, %v275
    %v352 = vld [vmem:[%s1] sm:$0xf]
    %v353 = vld [vmem:[%s1 + $0x4] sm:$0xf]
    %v354 = vld [vmem:[%s1 + $0x8] sm:$0xf]
    %v355 = vld [vmem:[%s1 + $0xc] sm:$0xf]
    %v356 = vld [vmem:[%s1 + $0x10] sm:$0xf]
    %v357 = vld [vmem:[%s1 + $0x14] sm:$0xf]
    %v358 = vld [vmem:[%s1 + $0x18] sm:$0xf]
    %v359 = vld [vmem:[%s1 + $0x1c] sm:$0xf]
    %v360 = vld [vmem:[%s1 + $0x20] sm:$0xf]
    %v361 = vld [vmem:[%s1 + $0x24] sm:$0xf]
    %v362 = vld [vmem:[%s1 + $0x28] sm:$0xf]
    %v363 = vld [vmem:[%s1 + $0x2c] sm:$0xf]
    %v364 = vld [vmem:[%s1 + $0x30] sm:$0xf]
    %v365 = vld [vmem:[%s1 + $0x34] sm:$0xf]
    %v366 = vld [vmem:[%s1 + $0x38] sm:$0xf]
    %v367 = vld [vmem:[%s1 + $0x3c] sm:$0xf]
    %v368 = vld [vmem:[%s1 + $0x40] sm:$0xf]
    %v369 = vld [vmem:[%s1 + $0x44] sm:$0xf]
    %v370 = vld [vmem:[%s1 + $0x48] sm:$0xf]
    %v371 = vld [vmem:[%s1 + $0x4c] sm:$0xf]
    %v372 = vld [vmem:[%s1 + $0x50] sm:$0xf]
    %v373 = vld [vmem:[%s1 + $0x54] sm:$0xf]
    %v374 = vld [vmem:[%s1 + $0x58] sm:$0xf]
    %v375 = vld [vmem:[%s1 + $0x5c] sm:$0xf]
    %v376 = vld [vmem:[%s1 + $0x60] sm:$0xf]
    %v377 = vld [vmem:[%s1 + $0x64] sm:$0xf]
    %v378 = vld [vmem:[%s1 + $0x68] sm:$0xf]
    %v379 = vld [vmem:[%s1 + $0x6c] sm:$0xf]
    %v380 = vld [vmem:[%s1 + $0x70] sm:$0xf]
    %v381 = vld [vmem:[%s1 + $0x74] sm:$0xf]
    %v382 = vld [vmem:[%s1 + $0x78] sm:$0xf]
    %v383 = vld [vmem:[%s1 + $0x7c] sm:$0xf]
    %v384 = vld [vmem:[%s1 + $0x80] sm:$0xf]
    %v385 = vld [vmem:[%s1 + $0x84] sm:$0xf]
    %v386 = vld [vmem:[%s1 + $0x88] sm:$0xf]
    %v387 = vld [vmem:[%s1 + $0x8c] sm:$0xf]
    %v388 = vld [vmem:[%s1 + $0x90] sm:$0xf]
    %v389 = vld [vmem:[%s1 + $0x94] sm:$0xf]
    %v390 = vld [vmem:[%s1 + $0x98] sm:$0xf]
    %v391 = vld [vmem:[%s1 + $0x9c] sm:$0xf]
    %v392 = vld [vmem:[%s1 + $0xa0] sm:$0xf]
    %v393 = vld [vmem:[%s1 + $0xa4] sm:$0xf]
    %v394 = vld [vmem:[%s1 + $0xa8] sm:$0xf]
    %v395 = vld [vmem:[%s1 + $0xac] sm:$0xf]
    %v396 = vld [vmem:[%s1 + $0xb0] sm:$0xf]
    %v397 = vld [vmem:[%s1 + $0xb4] sm:$0xf]
    %v398 = vld [vmem:[%s1 + $0xb8] sm:$0xf]
    %v399 = vld [vmem:[%s1 + $0xbc] sm:$0xf]
    %v400 = vld [vmem:[%s1 + $0xc0] sm:$0xf]
    %v401 = vld [vmem:[%s1 + $0xc4] sm:$0xf]
    %v402 = vld [vmem:[%s1 + $0xc8] sm:$0xf]
    %v403 = vld [vmem:[%s1 + $0xcc] sm:$0xf]
    %v404 = vld [vmem:[%s1 + $0xd0] sm:$0xf]
    %v405 = vld [vmem:[%s1 + $0xd4] sm:$0xf]
    %v406 = vld [vmem:[%s1 + $0xd8] sm:$0xf]
    %v407 = vld [vmem:[%s1 + $0xdc] sm:$0xf]
    %v408 = vld [vmem:[%s1 + $0xe0] sm:$0xf]
    %v409 = vld [vmem:[%s1 + $0xe4] sm:$0xf]
    %v410 = vld [vmem:[%s1 + $0xe8] sm:$0xf]
    %v411 = vld [vmem:[%s1 + $0xec] sm:$0xf]
    %v412 = vld [vmem:[%s1 + $0xf0] sm:$0xf]
    %v413 = vld [vmem:[%s1 + $0xf4] sm:$0xf]
    %v414 = vld [vmem:[%s1 + $0xf8] sm:$0xf]
    %v415 = vld [vmem:[%s1 + $0xfc] sm:$0xf]
    %v416 = vld [vmem:[%s1 + $0x100] sm:$0xf]
    %v417 = vld [vmem:[%s1 + $0x104] sm:$0xf]
    %v418 = vld [vmem:[%s1 + $0x108] sm:$0xf]
    %v419 = vld [vmem:[%s1 + $0x10c] sm:$0xf]
    %v420 = vld [vmem:[%s1 + $0x110] sm:$0xf]
    %v421 = vld [vmem:[%s1 + $0x114] sm:$0xf]
    %v422 = vld [vmem:[%s1 + $0x118] sm:$0xf]
    %v423 = vld [vmem:[%s1 + $0x11c] sm:$0xf]
    %v424 = vld [vmem:[%s2] sm:$0x1]
    %v426 = vperm.slane %v424, 0
    %v500 = vunpack.c.l.b16 %v352
    %v501 = vunpack.c.l.b16 %v353
    %v502 = vunpack.c.l.b16 %v354
    %v503 = vunpack.c.l.b16 %v355
    %v504 = vunpack.c.l.b16 %v356
    %v505 = vunpack.c.l.b16 %v357
    %v506 = vunpack.c.l.b16 %v358
    %v507 = vunpack.c.l.b16 %v359
    %v508 = vunpack.c.l.b16 %v360
    %v509 = vunpack.c.l.b16 %v361
    %v510 = vunpack.c.l.b16 %v362
    %v511 = vunpack.c.l.b16 %v363
    %v512 = vunpack.c.l.b16 %v364
    %v513 = vunpack.c.l.b16 %v365
    %v514 = vunpack.c.l.b16 %v366
    %v515 = vunpack.c.l.b16 %v367
    %v516 = vunpack.c.l.b16 %v368
    %v517 = vunpack.c.l.b16 %v369
    %v518 = vunpack.c.l.b16 %v370
    %v519 = vunpack.c.l.b16 %v371
    %v520 = vunpack.c.l.b16 %v372
    %v521 = vunpack.c.l.b16 %v373
    %v522 = vunpack.c.l.b16 %v374
    %v523 = vunpack.c.l.b16 %v375
    %v524 = vunpack.c.l.b16 %v376
    %v525 = vunpack.c.l.b16 %v377
    %v526 = vunpack.c.l.b16 %v378
    %v527 = vunpack.c.l.b16 %v379
    %v528 = vunpack.c.l.b16 %v380
    %v529 = vunpack.c.l.b16 %v381
    %v530 = vunpack.c.l.b16 %v382
    %v531 = vunpack.c.l.b16 %v383
    %v532 = vunpack.c.l.b16 %v384
    %v533 = vunpack.c.l.b16 %v385
    %v534 = vunpack.c.l.b16 %v386
    %v535 = vunpack.c.l.b16 %v387
    %v536 = vunpack.c.l.b16 %v388
    %v537 = vunpack.c.l.b16 %v389
    %v538 = vunpack.c.l.b16 %v390
    %v539 = vunpack.c.l.b16 %v391
    %v540 = vunpack.c.l.b16 %v392
    %v541 = vunpack.c.l.b16 %v393
    %v542 = vunpack.c.l.b16 %v394
    %v543 = vunpack.c.l.b16 %v395
    %v544 = vunpack.c.l.b16 %v396
    %v545 = vunpack.c.l.b16 %v397
    %v546 = vunpack.c.l.b16 %v398
    %v547 = vunpack.c.l.b16 %v399
    %v548 = vunpack.c.l.b16 %v400
    %v549 = vunpack.c.l.b16 %v401
    %v550 = vunpack.c.l.b16 %v402
    %v551 = vunpack.c.l.b16 %v403
    %v552 = vunpack.c.l.b16 %v404
    %v553 = vunpack.c.l.b16 %v405
    %v554 = vunpack.c.l.b16 %v406
    %v555 = vunpack.c.l.b16 %v407
    %v556 = vunpack.c.l.b16 %v408
    %v557 = vunpack.c.l.b16 %v409
    %v558 = vunpack.c.l.b16 %v410
    %v559 = vunpack.c.l.b16 %v411
    %v560 = vunpack.c.l.b16 %v412
    %v561 = vunpack.c.l.b16 %v413
    %v562 = vunpack.c.l.b16 %v414
    %v563 = vunpack.c.l.b16 %v415
    %v564 = vunpack.c.l.b16 %v416
    %v565 = vunpack.c.l.b16 %v417
    %v566 = vunpack.c.l.b16 %v418
    %v567 = vunpack.c.l.b16 %v419
    %v568 = vunpack.c.l.b16 %v420
    %v569 = vunpack.c.l.b16 %v421
    %v570 = vunpack.c.l.b16 %v422
    %v571 = vunpack.c.l.b16 %v423
    %v572 = vpack.c.b16 %v501, %v500
    %v573 = vpack.c.b16 %v503, %v502
    %v574 = vpack.c.b16 %v505, %v504
    %v575 = vpack.c.b16 %v507, %v506
    %v576 = vpack.c.b16 %v509, %v508
    %v577 = vpack.c.b16 %v511, %v510
    %v578 = vpack.c.b16 %v513, %v512
    %v579 = vpack.c.b16 %v515, %v514
    %v580 = vpack.c.b16 %v517, %v516
    %v581 = vpack.c.b16 %v519, %v518
    %v582 = vpack.c.b16 %v521, %v520
    %v583 = vpack.c.b16 %v523, %v522
    %v584 = vpack.c.b16 %v525, %v524
    %v585 = vpack.c.b16 %v527, %v526
    %v586 = vpack.c.b16 %v529, %v528
    %v587 = vpack.c.b16 %v531, %v530
    %v588 = vpack.c.b16 %v533, %v532
    %v589 = vpack.c.b16 %v535, %v534
    %v590 = vpack.c.b16 %v537, %v536
    %v591 = vpack.c.b16 %v539, %v538
    %v592 = vpack.c.b16 %v541, %v540
    %v593 = vpack.c.b16 %v543, %v542
    %v594 = vpack.c.b16 %v545, %v544
    %v595 = vpack.c.b16 %v547, %v546
    %v596 = vpack.c.b16 %v549, %v548
    %v597 = vpack.c.b16 %v551, %v550
    %v598 = vpack.c.b16 %v553, %v552
    %v599 = vpack.c.b16 %v555, %v554
    %v600 = vpack.c.b16 %v557, %v556
    %v601 = vpack.c.b16 %v559, %v558
    %v602 = vpack.c.b16 %v561, %v560
    %v603 = vpack.c.b16 %v563, %v562
    %v604 = vpack.c.b16 %v565, %v564
    %v605 = vpack.c.b16 %v567, %v566
    %v606 = vpack.c.b16 %v569, %v568
    %v607 = vpack.c.b16 %v571, %v570
    %v645 = vsel %vm292, %v285, 0
    %v648 = vsel %vm292, %v287, 0
    %v651 = vsel %vm292, %v289, 0
    %v654 = vsel %vm292, %v291, 0
    %656 = vmatpush.bf16.msra.mxu0 %v579
    %657 = vmatpush.bf16.msra.mxu0 %v578
    %658 = vmatpush.bf16.msra.mxu0 %v577
    %659 = vmatpush.bf16.msra.mxu0 %v576
    %660 = vmatpush.bf16.msra.mxu0 %v575
    %661 = vmatpush.bf16.msra.mxu0 %v574
    %662 = vmatpush.bf16.msra.mxu0 %v573
    %663 = vmatpush.bf16.msra.mxu0 %v572
    %664 = vmatmul.bf16.gmra.mxu0 %v294
    %v665 = vpop.f32.mrf.mxu0
    %v666 = vadd.f32 %v426, %v665
    %v667 = vpop.f32.mrf.mxu0
    %v668 = vadd.f32 %v426, %v667
    %669 = vmatmul.bf16.gmra.mxu0 %v297
    %v670 = vpop.f32.mrf.mxu0
    %v671 = vadd.f32 %v426, %v670
    %v672 = vpop.f32.mrf.mxu0
    %v673 = vadd.f32 %v426, %v672
    %674 = vmatmul.bf16.gmra.mxu0 %v300
    %v675 = vpop.f32.mrf.mxu0
    %v676 = vadd.f32 %v426, %v675
    %v677 = vpop.f32.mrf.mxu0
    %v678 = vadd.f32 %v426, %v677
    %679 = vmatmul.bf16.gmra.mxu0 %v303
    %v680 = vpop.f32.mrf.mxu0
    %v681 = vadd.f32 %v426, %v680
    %v682 = vpop.f32.mrf.mxu0
    %v683 = vadd.f32 %v426, %v682
    %684 = vdwg.mxu0
    %685 = vmatpush.bf16.msra.mxu0 %v587
    %686 = vmatpush.bf16.msra.mxu0 %v586
    %687 = vmatpush.bf16.msra.mxu0 %v585
    %688 = vmatpush.bf16.msra.mxu0 %v584
    %689 = vmatpush.bf16.msra.mxu0 %v583
    %690 = vmatpush.bf16.msra.mxu0 %v582
    %691 = vmatpush.bf16.msra.mxu0 %v581
    %692 = vmatpush.bf16.msra.mxu0 %v580
    %693 = vmatmul.bf16.gmra.mxu0 %v307
    %v694 = vpop.f32.mrf.mxu0
    %v695 = vadd.f32 %v666, %v694
    %v696 = vpop.f32.mrf.mxu0
    %v697 = vadd.f32 %v668, %v696
    %698 = vmatmul.bf16.gmra.mxu0 %v311
    %v699 = vpop.f32.mrf.mxu0
    %v700 = vadd.f32 %v671, %v699
    %v701 = vpop.f32.mrf.mxu0
    %v702 = vadd.f32 %v673, %v701
    %703 = vmatmul.bf16.gmra.mxu0 %v315
    %v704 = vpop.f32.mrf.mxu0
    %v705 = vadd.f32 %v676, %v704
    %v706 = vpop.f32.mrf.mxu0
    %v707 = vadd.f32 %v678, %v706
    %708 = vmatmul.bf16.gmra.mxu0 %v319
    %v709 = vpop.f32.mrf.mxu0
    %v710 = vadd.f32 %v681, %v709
    %v711 = vpop.f32.mrf.mxu0
    %v712 = vadd.f32 %v683, %v711
    %713 = vdwg.mxu0
    %714 = vmatpush.bf16.msra.mxu0 %v595
    %715 = vmatpush.bf16.msra.mxu0 %v594
    %716 = vmatpush.bf16.msra.mxu0 %v593
    %717 = vmatpush.bf16.msra.mxu0 %v592
    %718 = vmatpush.bf16.msra.mxu0 %v591
    %719 = vmatpush.bf16.msra.mxu0 %v590
    %720 = vmatpush.bf16.msra.mxu0 %v589
    %721 = vmatpush.bf16.msra.mxu0 %v588
    %722 = vmatmul.bf16.gmra.mxu0 %v323
    %v723 = vpop.f32.mrf.mxu0
    %v724 = vadd.f32 %v695, %v723
    %v725 = vpop.f32.mrf.mxu0
    %v726 = vadd.f32 %v697, %v725
    %727 = vmatmul.bf16.gmra.mxu0 %v327
    %v728 = vpop.f32.mrf.mxu0
    %v729 = vadd.f32 %v700, %v728
    %v730 = vpop.f32.mrf.mxu0
    %v731 = vadd.f32 %v702, %v730
    %732 = vmatmul.bf16.gmra.mxu0 %v331
    %v733 = vpop.f32.mrf.mxu0
    %v734 = vadd.f32 %v705, %v733
    %v735 = vpop.f32.mrf.mxu0
    %v736 = vadd.f32 %v707, %v735
    %737 = vmatmul.bf16.gmra.mxu0 %v335
    %v738 = vpop.f32.mrf.mxu0
    %v739 = vadd.f32 %v710, %v738
    %v740 = vpop.f32.mrf.mxu0
    %v741 = vadd.f32 %v712, %v740
    %742 = vdwg.mxu0
    %743 = vmatpush.bf16.msra.mxu0 %v603
    %744 = vmatpush.bf16.msra.mxu0 %v602
    %745 = vmatpush.bf16.msra.mxu0 %v601
    %746 = vmatpush.bf16.msra.mxu0 %v600
    %747 = vmatpush.bf16.msra.mxu0 %v599
    %748 = vmatpush.bf16.msra.mxu0 %v598
    %749 = vmatpush.bf16.msra.mxu0 %v597
    %750 = vmatpush.bf16.msra.mxu0 %v596
    %751 = vmatmul.bf16.gmra.mxu0 %v339
    %v752 = vpop.f32.mrf.mxu0
    %v753 = vadd.f32 %v724, %v752
    %v754 = vpop.f32.mrf.mxu0
    %v755 = vadd.f32 %v726, %v754
    %756 = vmatmul.bf16.gmra.mxu0 %v342
    %v757 = vpop.f32.mrf.mxu0
    %v758 = vadd.f32 %v729, %v757
    %v759 = vpop.f32.mrf.mxu0
    %v760 = vadd.f32 %v731, %v759
    %761 = vmatmul.bf16.gmra.mxu0 %v346
    %v762 = vpop.f32.mrf.mxu0
    %v763 = vadd.f32 %v734, %v762
    %v764 = vpop.f32.mrf.mxu0
    %v765 = vadd.f32 %v736, %v764
    %766 = vmatmul.bf16.gmra.mxu0 %v350
    %v767 = vpop.f32.mrf.mxu0
    %v768 = vadd.f32 %v739, %v767
    %v769 = vpop.f32.mrf.mxu0
    %v770 = vadd.f32 %v741, %v769
    %771 = vdwg.mxu0
    %772 = vmatpush.bf16.msra.mxu0 0
    %773 = vmatpush.bf16.msra.mxu0 0
    %774 = vmatpush.bf16.msra.mxu0 0
    %775 = vmatpush.bf16.msra.mxu0 0
    %776 = vmatpush.bf16.msra.mxu0 %v607
    %777 = vmatpush.bf16.msra.mxu0 %v606
    %778 = vmatpush.bf16.msra.mxu0 %v605
    %779 = vmatpush.bf16.msra.mxu0 %v604
    %780 = vmatmul.bf16.gmra.mxu0 %v645
    %v781 = vpop.f32.mrf.mxu0
    %v782 = vadd.f32 %v753, %v781
    %v783 = vpop.f32.mrf.mxu0
    %v784 = vadd.f32 %v755, %v783
    %785 = vmatmul.bf16.gmra.mxu0 %v648
    %v786 = vpop.f32.mrf.mxu0
    %v787 = vadd.f32 %v758, %v786
    %v788 = vpop.f32.mrf.mxu0
    %v789 = vadd.f32 %v760, %v788
    %790 = vmatmul.bf16.gmra.mxu0 %v651
    %v791 = vpop.f32.mrf.mxu0
    %v792 = vadd.f32 %v763, %v791
    %v793 = vpop.f32.mrf.mxu0
    %v794 = vadd.f32 %v765, %v793
    %795 = vmatmul.bf16.gmra.mxu0 %v654
    %v796 = vpop.f32.mrf.mxu0
    %v797 = vadd.f32 %v768, %v796
    %v798 = vpop.f32.mrf.mxu0
    %v799 = vadd.f32 %v770, %v798
    %800 = vdwg.mxu0
    %v801 = vmax.f32 %v782, 0.0
    %v802 = vmax.f32 %v784, 0.0
    %v803 = vmax.f32 %v787, 0.0
    %v804 = vmax.f32 %v789, 0.0
    %v805 = vmax.f32 %v792, 0.0
    %v806 = vmax.f32 %v794, 0.0
    %v807 = vmax.f32 %v797, 0.0
    %v808 = vmax.f32 %v799, 0.0
    %809 = vst [vmem:[#allocation2] sm:$0xff] %v801
    %810 = vst [vmem:[#allocation2 + $0x8] sm:$0xff] %v802
    %811 = vst [vmem:[#allocation2 + $0x10] sm:$0xff] %v803
    %812 = vst [vmem:[#allocation2 + $0x18] sm:$0xff] %v804
    %813 = vst [vmem:[#allocation2 + $0x20] sm:$0xff] %v805
    %814 = vst [vmem:[#allocation2 + $0x28] sm:$0xff] %v806
    %815 = vst [vmem:[#allocation2 + $0x30] sm:$0xff] %v807
    %816 = vst [vmem:[#allocation2 + $0x38] sm:$0x7f] %v808
    %v817 = vld [vmem:[#allocation2] sm:$0xff]
    %v818 = vld [vmem:[#allocation2 + $0x8] sm:$0xff]
    %v819 = vld [vmem:[#allocation2 + $0x10] sm:$0xff]
    %v820 = vld [vmem:[#allocation2 + $0x18] sm:$0xff]
    %v821 = vld [vmem:[#allocation2 + $0x20] sm:$0xff]
    %v822 = vld [vmem:[#allocation2 + $0x28] sm:$0xff]
    %v823 = vld [vmem:[#allocation2 + $0x30] sm:$0x1f]
    %v824 = vld [vmem:[#allocation2 + $0x1] sm:$0xff]
    %v825 = vld [vmem:[#allocation2 + $0x9] sm:$0xff]
    %v826 = vld [vmem:[#allocation2 + $0x11] sm:$0xff]
    %v827 = vld [vmem:[#allocation2 + $0x19] sm:$0xff]
    %v828 = vld [vmem:[#allocation2 + $0x21] sm:$0xff]
    %v829 = vld [vmem:[#allocation2 + $0x29] sm:$0xff]
    %v830 = vld [vmem:[#allocation2 + $0x31] sm:$0x1f]
    %v831 = vld [vmem:[#allocation2 + $0x31] sm:$0xff]
    %v832 = vld [vmem:[#allocation2 + $0x39] sm:$0x1f]
    %v833 = vld [vmem:[#allocation2 + $0xa] sm:$0xff]
    %v834 = vld [vmem:[#allocation2 + $0x12] sm:$0xff]
    %v835 = vld [vmem:[#allocation2 + $0x1a] sm:$0xff]
    %v836 = vld [vmem:[#allocation2 + $0x22] sm:$0xff]
    %v837 = vld [vmem:[#allocation2 + $0x2a] sm:$0xff]
    %v838 = vld [vmem:[#allocation2 + $0x32] sm:$0xff]
    %v839 = vld [vmem:[#allocation2 + $0x3a] sm:$0x1f]
    %v840 = vmax.f32 %v817, %v824
    %v841 = vmax.f32 %v818, %v825
    %v842 = vmax.f32 %v819, %v826
    %v843 = vmax.f32 %v820, %v827
    %v844 = vmax.f32 %v821, %v828
    %v845 = vmax.f32 %v822, %v829
    %v846 = vmax.f32 %v823, %v830
    %v847 = vmax.f32 %v825, %v833
    %v848 = vmax.f32 %v826, %v834
    %v849 = vmax.f32 %v827, %v835
    %v850 = vmax.f32 %v828, %v836
    %v851 = vmax.f32 %v829, %v837
    %v852 = vmax.f32 %v831, %v838
    %v853 = vmax.f32 %v832, %v839
    %v854 = vmax.f32 %v840, %v847
    %v855 = vmax.f32 %v841, %v848
    %v856 = vmax.f32 %v842, %v849
    %v857 = vmax.f32 %v843, %v850
    %v858 = vmax.f32 %v844, %v851
    %v859 = vmax.f32 %v845, %v852
    %v860 = vmax.f32 %v846, %v853
    %v861 = vpack.c.bf16 %v855, %v854
    %v862 = vpack.c.bf16 %v857, %v856
    %v863 = vpack.c.bf16 %v859, %v858
    %v864 = vpack.c.bf16 %v860, %v860
    %v865 = vld [vmem:[%s3] sm:$0xf]
    %v866 = vld [vmem:[%s3 + $0x4] sm:$0x1]
    %v869 = vunpack.c.l.b16 %v865
    %v870 = vunpack.c.l.b16 %v866
    %v871 = vpack.c.b16 %v870, %v869
    %vm872 = vcmask 433152
    %v874 = vsel %vm872, %v871, 0
    %vm876 = vcmask 1041408
    %vm877 = vcmask 1042432
    %v878 = vsel %vm876, 4294967295, 65535
    %v879 = vsel %vm877, %v878, 0
    %v881 = vand.u32 %v864, %v879
    %883 = vmatpush.bf16.msra.mxu0 0
    %884 = vmatpush.bf16.msra.mxu0 0
    %885 = vmatpush.bf16.msra.mxu0 0
    %886 = vmatpush.bf16.msra.mxu0 0
    %887 = vmatpush.bf16.msra.mxu0 %v881
    %888 = vmatpush.bf16.msra.mxu0 %v863
    %889 = vmatpush.bf16.msra.mxu0 %v862
    %890 = vmatpush.bf16.msra.mxu0 %v861
    %891 = vmatmul.bf16.gmra.mxu0 %v874
    %v892 = vpop.f32.mrf.mxu0
    %v893 = vadd.f32 0.0, %v892
    %v894 = vpop.f32.mrf.mxu0
    %v895 = vadd.f32 0.0, %v894
    %896 = vdwg.mxu0
    %v897 = vpack.c.bf16 %v893, %v893
    %v898 = vpack.c.bf16 %v895, %v895
    %s899 = smul.u32 %s19, 2
    %s900 = smul.addr %s899, 4
    %s901 = scalar_lea.vmem %s4, %s900
    %902 = vst [vmem:[%s901] sm:$0xf] %v897
    %vm903 = vcmask 1040384
    %vm904 = vsmask.f32 256
    %vm905 = vmand %vm903, %vm904
    %v906 = vld [vmem:[%s901 + $0x4] sm:$0x1]
    %v907 = vsel %vm905, %v898, %v906
    %908 = vst [vmem:[%s901 + $0x4] sm:$0x1] %v907
  $region22: #{convnet_forward.6} parent=0 // loop_footer
    %s23 = sadd.s32 1, %s19
  $region23: #{convnet_forward.6} parent=0 // loop_footer_branch
    %18 = sbr.rel target = $region19
  $region24: #{convnet_forward.6} parent=0 // loop_exit
    _
  // Predicated region
  $region25: #{convnet_forward.6} parent=0 // pred_check
    _
  $region26: #{convnet_forward.6} parent=0 // pred_check_branch
    %910 = sbr.rel (0) target = $region28
  $region27: #{convnet_forward.6} parent=0 // pred_region
    _
  $region28: #{convnet_forward.6} parent=0 // pred_fallthru
    _
  // Predicated region
  $region29: #{convnet_forward.6} parent=0 // pred_check
    _
  $region30: #{convnet_forward.6} parent=0 // pred_check_branch
    %912 = sbr.rel (0) target = $region32
  $region31: #{convnet_forward.6} parent=0 // pred_region
    _
  $region32: #{convnet_forward.6} parent=0 // pred_fallthru
    _

// kernel: convnet_forward.7
$region0: #{convnet_forward.7}
  #allocation0 [shape = 'u32[]', space=smem, size = 0x4, offset = 0x4, fixed_abs, tag = 'smem constant byte address 0x4 - core index']
  #allocation1 [shape = 'u32[72,128]{1,0:T(1,128)}', space=vmem, size = 0x9000, scoped, tag = 'internal scratch']
  %s0 = inlined_call_operand.vmem [shape: bf16[2,1152], index: 0, kind: input, shape index: {}]
  %s1 = inlined_call_operand.vmem [shape: bf16[1152,128], index: 1, kind: input, shape index: {}]
  %s2 = inlined_call_operand.vmem [shape: f32[1,128], index: 2, kind: input, shape index: {}]
  %s3 = inlined_call_operand.vmem [shape: bf16[128,128], index: 3, kind: input, shape index: {}]
  %s4 = inlined_call_operand.vmem [shape: f32[1,128], index: 4, kind: input, shape index: {}]
  %s5 = inlined_call_operand.hbm [shape: f32[2,128], index: 5, kind: output, shape index: {}]
  %s6 = sld [smem:[#allocation0]]
  $region30: #{convnet_forward.7} parent=0
    _
  %s8 = ssub.s32 1, %s6
  %s9 = scalar_select 0, %s8, %s6
  $region1: #{convnet_forward.7} parent=0
    #allocation2 [shape = 'u8[1024]{0}', space=vmem, size = 0x400, scoped, tag = 'output window, operand 0, single buffered']
    #allocation3 [shape = 's32[1]{0}', space=sflag, size = 0x4, scoped, tag = 'scoped memory for convnet_forward.7']
    %10 = vsyncpa [#allocation3], 0
    // Predicated region
    $region2: #{convnet_forward.7} parent=1 // pred_check
      _
    $region3: #{convnet_forward.7} parent=1 // pred_check_branch
      %12 = sbr.rel (0) target = $region5
    $region4: #{convnet_forward.7} parent=1 // pred_region
      _
    $region5: #{convnet_forward.7} parent=1 // pred_fallthru
      _
    // Predicated region
    $region6: #{convnet_forward.7} parent=1 // pred_check
      _
    $region7: #{convnet_forward.7} parent=1 // pred_check_branch
      %14 = sbr.rel (0) target = $region9
    $region8: #{convnet_forward.7} parent=1 // pred_region
      _
    $region9: #{convnet_forward.7} parent=1 // pred_fallthru
      _
    // Predicated region
    $region10: #{convnet_forward.7} parent=1 // pred_check
      _
    $region11: #{convnet_forward.7} parent=1 // pred_check_branch
      %16 = sbr.rel (0) target = $region13
    $region12: #{convnet_forward.7} parent=1 // pred_region
      _
    $region13: #{convnet_forward.7} parent=1 // pred_fallthru
      _
    // Predicated region
    $region14: #{convnet_forward.7} parent=1 // pred_check
      _
    $region15: #{convnet_forward.7} parent=1 // pred_check_branch
      %18 = sbr.rel (0) target = $region17
    $region16: #{convnet_forward.7} parent=1 // pred_region
      _
    $region17: #{convnet_forward.7} parent=1 // pred_fallthru
      _
    // Predicated region
    $region18: #{convnet_forward.7} parent=1 // pred_check
      _
    $region19: #{convnet_forward.7} parent=1 // pred_check_branch
      %20 = sbr.rel (0) target = $region21
    $region20: #{convnet_forward.7} parent=1 // pred_region
      _
    $region21: #{convnet_forward.7} parent=1 // pred_fallthru
      _
    %v21 = vld [vmem:[%s0] sm:$0xff]
    %v22 = vld [vmem:[%s0 + $0x8] sm:$0x1]
    %v23 = vld [vmem:[%s1] sm:$0xf]
    %v24 = vld [vmem:[%s1 + $0x4] sm:$0xf]
    %v25 = vld [vmem:[%s1 + $0x8] sm:$0xf]
    %v26 = vld [vmem:[%s1 + $0xc] sm:$0xf]
    %v27 = vld [vmem:[%s1 + $0x10] sm:$0xf]
    %v28 = vld [vmem:[%s1 + $0x14] sm:$0xf]
    %v29 = vld [vmem:[%s1 + $0x18] sm:$0xf]
    %v30 = vld [vmem:[%s1 + $0x1c] sm:$0xf]
    %v31 = vld [vmem:[%s1 + $0x20] sm:$0xf]
    %v32 = vld [vmem:[%s1 + $0x24] sm:$0xf]
    %v33 = vld [vmem:[%s1 + $0x28] sm:$0xf]
    %v34 = vld [vmem:[%s1 + $0x2c] sm:$0xf]
    %v35 = vld [vmem:[%s1 + $0x30] sm:$0xf]
    %v36 = vld [vmem:[%s1 + $0x34] sm:$0xf]
    %v37 = vld [vmem:[%s1 + $0x38] sm:$0xf]
    %v38 = vld [vmem:[%s1 + $0x3c] sm:$0xf]
    %v39 = vld [vmem:[%s1 + $0x40] sm:$0xf]
    %v40 = vld [vmem:[%s1 + $0x44] sm:$0xf]
    %v41 = vld [vmem:[%s1 + $0x48] sm:$0xf]
    %v42 = vld [vmem:[%s1 + $0x4c] sm:$0xf]
    %v43 = vld [vmem:[%s1 + $0x50] sm:$0xf]
    %v44 = vld [vmem:[%s1 + $0x54] sm:$0xf]
    %v45 = vld [vmem:[%s1 + $0x58] sm:$0xf]
    %v46 = vld [vmem:[%s1 + $0x5c] sm:$0xf]
    %v47 = vld [vmem:[%s1 + $0x60] sm:$0xf]
    %v48 = vld [vmem:[%s1 + $0x64] sm:$0xf]
    %v49 = vld [vmem:[%s1 + $0x68] sm:$0xf]
    %v50 = vld [vmem:[%s1 + $0x6c] sm:$0xf]
    %v51 = vld [vmem:[%s1 + $0x70] sm:$0xf]
    %v52 = vld [vmem:[%s1 + $0x74] sm:$0xf]
    %v53 = vld [vmem:[%s1 + $0x78] sm:$0xf]
    %v54 = vld [vmem:[%s1 + $0x7c] sm:$0xf]
    %v55 = vld [vmem:[%s1 + $0x80] sm:$0xf]
    %v56 = vld [vmem:[%s1 + $0x84] sm:$0xf]
    %v57 = vld [vmem:[%s1 + $0x88] sm:$0xf]
    %v58 = vld [vmem:[%s1 + $0x8c] sm:$0xf]
    %v59 = vld [vmem:[%s1 + $0x90] sm:$0xf]
    %v60 = vld [vmem:[%s1 + $0x94] sm:$0xf]
    %v61 = vld [vmem:[%s1 + $0x98] sm:$0xf]
    %v62 = vld [vmem:[%s1 + $0x9c] sm:$0xf]
    %v63 = vld [vmem:[%s1 + $0xa0] sm:$0xf]
    %v64 = vld [vmem:[%s1 + $0xa4] sm:$0xf]
    %v65 = vld [vmem:[%s1 + $0xa8] sm:$0xf]
    %v66 = vld [vmem:[%s1 + $0xac] sm:$0xf]
    %v67 = vld [vmem:[%s1 + $0xb0] sm:$0xf]
    %v68 = vld [vmem:[%s1 + $0xb4] sm:$0xf]
    %v69 = vld [vmem:[%s1 + $0xb8] sm:$0xf]
    %v70 = vld [vmem:[%s1 + $0xbc] sm:$0xf]
    %v71 = vld [vmem:[%s1 + $0xc0] sm:$0xf]
    %v72 = vld [vmem:[%s1 + $0xc4] sm:$0xf]
    %v73 = vld [vmem:[%s1 + $0xc8] sm:$0xf]
    %v74 = vld [vmem:[%s1 + $0xcc] sm:$0xf]
    %v75 = vld [vmem:[%s1 + $0xd0] sm:$0xf]
    %v76 = vld [vmem:[%s1 + $0xd4] sm:$0xf]
    %v77 = vld [vmem:[%s1 + $0xd8] sm:$0xf]
    %v78 = vld [vmem:[%s1 + $0xdc] sm:$0xf]
    %v79 = vld [vmem:[%s1 + $0xe0] sm:$0xf]
    %v80 = vld [vmem:[%s1 + $0xe4] sm:$0xf]
    %v81 = vld [vmem:[%s1 + $0xe8] sm:$0xf]
    %v82 = vld [vmem:[%s1 + $0xec] sm:$0xf]
    %v83 = vld [vmem:[%s1 + $0xf0] sm:$0xf]
    %v84 = vld [vmem:[%s1 + $0xf4] sm:$0xf]
    %v85 = vld [vmem:[%s1 + $0xf8] sm:$0xf]
    %v86 = vld [vmem:[%s1 + $0xfc] sm:$0xf]
    %v87 = vld [vmem:[%s1 + $0x100] sm:$0xf]
    %v88 = vld [vmem:[%s1 + $0x104] sm:$0xf]
    %v89 = vld [vmem:[%s1 + $0x108] sm:$0xf]
    %v90 = vld [vmem:[%s1 + $0x10c] sm:$0xf]
    %v91 = vld [vmem:[%s1 + $0x110] sm:$0xf]
    %v92 = vld [vmem:[%s1 + $0x114] sm:$0xf]
    %v93 = vld [vmem:[%s1 + $0x118] sm:$0xf]
    %v94 = vld [vmem:[%s1 + $0x11c] sm:$0xf]
    %v95 = vld [vmem:[%s1 + $0x120] sm:$0xf]
    %v96 = vld [vmem:[%s1 + $0x124] sm:$0xf]
    %v97 = vld [vmem:[%s1 + $0x128] sm:$0xf]
    %v98 = vld [vmem:[%s1 + $0x12c] sm:$0xf]
    %v99 = vld [vmem:[%s1 + $0x130] sm:$0xf]
    %v100 = vld [vmem:[%s1 + $0x134] sm:$0xf]
    %v101 = vld [vmem:[%s1 + $0x138] sm:$0xf]
    %v102 = vld [vmem:[%s1 + $0x13c] sm:$0xf]
    %v103 = vld [vmem:[%s1 + $0x140] sm:$0xf]
    %v104 = vld [vmem:[%s1 + $0x144] sm:$0xf]
    %v105 = vld [vmem:[%s1 + $0x148] sm:$0xf]
    %v106 = vld [vmem:[%s1 + $0x14c] sm:$0xf]
    %v107 = vld [vmem:[%s1 + $0x150] sm:$0xf]
    %v108 = vld [vmem:[%s1 + $0x154] sm:$0xf]
    %v109 = vld [vmem:[%s1 + $0x158] sm:$0xf]
    %v110 = vld [vmem:[%s1 + $0x15c] sm:$0xf]
    %v111 = vld [vmem:[%s1 + $0x160] sm:$0xf]
    %v112 = vld [vmem:[%s1 + $0x164] sm:$0xf]
    %v113 = vld [vmem:[%s1 + $0x168] sm:$0xf]
    %v114 = vld [vmem:[%s1 + $0x16c] sm:$0xf]
    %v115 = vld [vmem:[%s1 + $0x170] sm:$0xf]
    %v116 = vld [vmem:[%s1 + $0x174] sm:$0xf]
    %v117 = vld [vmem:[%s1 + $0x178] sm:$0xf]
    %v118 = vld [vmem:[%s1 + $0x17c] sm:$0xf]
    %v119 = vld [vmem:[%s1 + $0x180] sm:$0xf]
    %v120 = vld [vmem:[%s1 + $0x184] sm:$0xf]
    %v121 = vld [vmem:[%s1 + $0x188] sm:$0xf]
    %v122 = vld [vmem:[%s1 + $0x18c] sm:$0xf]
    %v123 = vld [vmem:[%s1 + $0x190] sm:$0xf]
    %v124 = vld [vmem:[%s1 + $0x194] sm:$0xf]
    %v125 = vld [vmem:[%s1 + $0x198] sm:$0xf]
    %v126 = vld [vmem:[%s1 + $0x19c] sm:$0xf]
    %v127 = vld [vmem:[%s1 + $0x1a0] sm:$0xf]
    %v128 = vld [vmem:[%s1 + $0x1a4] sm:$0xf]
    %v129 = vld [vmem:[%s1 + $0x1a8] sm:$0xf]
    %v130 = vld [vmem:[%s1 + $0x1ac] sm:$0xf]
    %v131 = vld [vmem:[%s1 + $0x1b0] sm:$0xf]
    %v132 = vld [vmem:[%s1 + $0x1b4] sm:$0xf]
    %v133 = vld [vmem:[%s1 + $0x1b8] sm:$0xf]
    %v134 = vld [vmem:[%s1 + $0x1bc] sm:$0xf]
    %v135 = vld [vmem:[%s1 + $0x1c0] sm:$0xf]
    %v136 = vld [vmem:[%s1 + $0x1c4] sm:$0xf]
    %v137 = vld [vmem:[%s1 + $0x1c8] sm:$0xf]
    %v138 = vld [vmem:[%s1 + $0x1cc] sm:$0xf]
    %v139 = vld [vmem:[%s1 + $0x1d0] sm:$0xf]
    %v140 = vld [vmem:[%s1 + $0x1d4] sm:$0xf]
    %v141 = vld [vmem:[%s1 + $0x1d8] sm:$0xf]
    %v142 = vld [vmem:[%s1 + $0x1dc] sm:$0xf]
    %v143 = vld [vmem:[%s1 + $0x1e0] sm:$0xf]
    %v144 = vld [vmem:[%s1 + $0x1e4] sm:$0xf]
    %v145 = vld [vmem:[%s1 + $0x1e8] sm:$0xf]
    %v146 = vld [vmem:[%s1 + $0x1ec] sm:$0xf]
    %v147 = vld [vmem:[%s1 + $0x1f0] sm:$0xf]
    %v148 = vld [vmem:[%s1 + $0x1f4] sm:$0xf]
    %v149 = vld [vmem:[%s1 + $0x1f8] sm:$0xf]
    %v150 = vld [vmem:[%s1 + $0x1fc] sm:$0xf]
    %v151 = vld [vmem:[%s1 + $0x200] sm:$0xf]
    %v152 = vld [vmem:[%s1 + $0x204] sm:$0xf]
    %v153 = vld [vmem:[%s1 + $0x208] sm:$0xf]
    %v154 = vld [vmem:[%s1 + $0x20c] sm:$0xf]
    %v155 = vld [vmem:[%s1 + $0x210] sm:$0xf]
    %v156 = vld [vmem:[%s1 + $0x214] sm:$0xf]
    %v157 = vld [vmem:[%s1 + $0x218] sm:$0xf]
    %v158 = vld [vmem:[%s1 + $0x21c] sm:$0xf]
    %v159 = vld [vmem:[%s1 + $0x220] sm:$0xf]
    %v160 = vld [vmem:[%s1 + $0x224] sm:$0xf]
    %v161 = vld [vmem:[%s1 + $0x228] sm:$0xf]
    %v162 = vld [vmem:[%s1 + $0x22c] sm:$0xf]
    %v163 = vld [vmem:[%s1 + $0x230] sm:$0xf]
    %v164 = vld [vmem:[%s1 + $0x234] sm:$0xf]
    %v165 = vld [vmem:[%s1 + $0x238] sm:$0xf]
    %v166 = vld [vmem:[%s1 + $0x23c] sm:$0xf]
    %v167 = vld [vmem:[%s2] sm:$0x1]
    %v169 = vperm.slane %v167, 0
    %172 = vst [vmem:[#allocation1] ss:$9 sm:$0xff] %v21
    %v173 = vld [vmem:[#allocation1] sm:$0xff]
    %v174 = vld [vmem:[#allocation1 + $0x9] sm:$0xff]
    %v175 = vld [vmem:[#allocation1 + $0x12] sm:$0xff]
    %v176 = vld [vmem:[#allocation1 + $0x1b] sm:$0xff]
    %v177 = vld [vmem:[#allocation1 + $0x24] sm:$0xff]
    %v178 = vld [vmem:[#allocation1 + $0x2d] sm:$0xff]
    %v179 = vld [vmem:[#allocation1 + $0x36] sm:$0xff]
    %v180 = vld [vmem:[#allocation1 + $0x3f] sm:$0xff]
    %182 = vst [vmem:[#allocation1] ss:$9 sm:$0xff] %v22
    %v183 = vld [vmem:[#allocation1] sm:$0xff]
    %v337 = vunpack.c.l.b16 %v23
    %v338 = vunpack.c.l.b16 %v24
    %v339 = vunpack.c.l.b16 %v25
    %v340 = vunpack.c.l.b16 %v26
    %v341 = vunpack.c.l.b16 %v27
    %v342 = vunpack.c.l.b16 %v28
    %v343 = vunpack.c.l.b16 %v29
    %v344 = vunpack.c.l.b16 %v30
    %v345 = vunpack.c.l.b16 %v31
    %v346 = vunpack.c.l.b16 %v32
    %v347 = vunpack.c.l.b16 %v33
    %v348 = vunpack.c.l.b16 %v34
    %v349 = vunpack.c.l.b16 %v35
    %v350 = vunpack.c.l.b16 %v36
    %v351 = vunpack.c.l.b16 %v37
    %v352 = vunpack.c.l.b16 %v38
    %v353 = vunpack.c.l.b16 %v39
    %v354 = vunpack.c.l.b16 %v40
    %v355 = vunpack.c.l.b16 %v41
    %v356 = vunpack.c.l.b16 %v42
    %v357 = vunpack.c.l.b16 %v43
    %v358 = vunpack.c.l.b16 %v44
    %v359 = vunpack.c.l.b16 %v45
    %v360 = vunpack.c.l.b16 %v46
    %v361 = vunpack.c.l.b16 %v47
    %v362 = vunpack.c.l.b16 %v48
    %v363 = vunpack.c.l.b16 %v49
    %v364 = vunpack.c.l.b16 %v50
    %v365 = vunpack.c.l.b16 %v51
    %v366 = vunpack.c.l.b16 %v52
    %v367 = vunpack.c.l.b16 %v53
    %v368 = vunpack.c.l.b16 %v54
    %v369 = vunpack.c.l.b16 %v55
    %v370 = vunpack.c.l.b16 %v56
    %v371 = vunpack.c.l.b16 %v57
    %v372 = vunpack.c.l.b16 %v58
    %v373 = vunpack.c.l.b16 %v59
    %v374 = vunpack.c.l.b16 %v60
    %v375 = vunpack.c.l.b16 %v61
    %v376 = vunpack.c.l.b16 %v62
    %v377 = vunpack.c.l.b16 %v63
    %v378 = vunpack.c.l.b16 %v64
    %v379 = vunpack.c.l.b16 %v65
    %v380 = vunpack.c.l.b16 %v66
    %v381 = vunpack.c.l.b16 %v67
    %v382 = vunpack.c.l.b16 %v68
    %v383 = vunpack.c.l.b16 %v69
    %v384 = vunpack.c.l.b16 %v70
    %v385 = vunpack.c.l.b16 %v71
    %v386 = vunpack.c.l.b16 %v72
    %v387 = vunpack.c.l.b16 %v73
    %v388 = vunpack.c.l.b16 %v74
    %v389 = vunpack.c.l.b16 %v75
    %v390 = vunpack.c.l.b16 %v76
    %v391 = vunpack.c.l.b16 %v77
    %v392 = vunpack.c.l.b16 %v78
    %v393 = vunpack.c.l.b16 %v79
    %v394 = vunpack.c.l.b16 %v80
    %v395 = vunpack.c.l.b16 %v81
    %v396 = vunpack.c.l.b16 %v82
    %v397 = vunpack.c.l.b16 %v83
    %v398 = vunpack.c.l.b16 %v84
    %v399 = vunpack.c.l.b16 %v85
    %v400 = vunpack.c.l.b16 %v86
    %v401 = vunpack.c.l.b16 %v87
    %v402 = vunpack.c.l.b16 %v88
    %v403 = vunpack.c.l.b16 %v89
    %v404 = vunpack.c.l.b16 %v90
    %v405 = vunpack.c.l.b16 %v91
    %v406 = vunpack.c.l.b16 %v92
    %v407 = vunpack.c.l.b16 %v93
    %v408 = vunpack.c.l.b16 %v94
    %v409 = vunpack.c.l.b16 %v95
    %v410 = vunpack.c.l.b16 %v96
    %v411 = vunpack.c.l.b16 %v97
    %v412 = vunpack.c.l.b16 %v98
    %v413 = vunpack.c.l.b16 %v99
    %v414 = vunpack.c.l.b16 %v100
    %v415 = vunpack.c.l.b16 %v101
    %v416 = vunpack.c.l.b16 %v102
    %v417 = vunpack.c.l.b16 %v103
    %v418 = vunpack.c.l.b16 %v104
    %v419 = vunpack.c.l.b16 %v105
    %v420 = vunpack.c.l.b16 %v106
    %v421 = vunpack.c.l.b16 %v107
    %v422 = vunpack.c.l.b16 %v108
    %v423 = vunpack.c.l.b16 %v109
    %v424 = vunpack.c.l.b16 %v110
    %v425 = vunpack.c.l.b16 %v111
    %v426 = vunpack.c.l.b16 %v112
    %v427 = vunpack.c.l.b16 %v113
    %v428 = vunpack.c.l.b16 %v114
    %v429 = vunpack.c.l.b16 %v115
    %v430 = vunpack.c.l.b16 %v116
    %v431 = vunpack.c.l.b16 %v117
    %v432 = vunpack.c.l.b16 %v118
    %v433 = vunpack.c.l.b16 %v119
    %v434 = vunpack.c.l.b16 %v120
    %v435 = vunpack.c.l.b16 %v121
    %v436 = vunpack.c.l.b16 %v122
    %v437 = vunpack.c.l.b16 %v123
    %v438 = vunpack.c.l.b16 %v124
    %v439 = vunpack.c.l.b16 %v125
    %v440 = vunpack.c.l.b16 %v126
    %v441 = vunpack.c.l.b16 %v127
    %v442 = vunpack.c.l.b16 %v128
    %v443 = vunpack.c.l.b16 %v129
    %v444 = vunpack.c.l.b16 %v130
    %v445 = vunpack.c.l.b16 %v131
    %v446 = vunpack.c.l.b16 %v132
    %v447 = vunpack.c.l.b16 %v133
    %v448 = vunpack.c.l.b16 %v134
    %v449 = vunpack.c.l.b16 %v135
    %v450 = vunpack.c.l.b16 %v136
    %v451 = vunpack.c.l.b16 %v137
    %v452 = vunpack.c.l.b16 %v138
    %v453 = vunpack.c.l.b16 %v139
    %v454 = vunpack.c.l.b16 %v140
    %v455 = vunpack.c.l.b16 %v141
    %v456 = vunpack.c.l.b16 %v142
    %v457 = vunpack.c.l.b16 %v143
    %v458 = vunpack.c.l.b16 %v144
    %v459 = vunpack.c.l.b16 %v145
    %v460 = vunpack.c.l.b16 %v146
    %v461 = vunpack.c.l.b16 %v147
    %v462 = vunpack.c.l.b16 %v148
    %v463 = vunpack.c.l.b16 %v149
    %v464 = vunpack.c.l.b16 %v150
    %v465 = vunpack.c.l.b16 %v151
    %v466 = vunpack.c.l.b16 %v152
    %v467 = vunpack.c.l.b16 %v153
    %v468 = vunpack.c.l.b16 %v154
    %v469 = vunpack.c.l.b16 %v155
    %v470 = vunpack.c.l.b16 %v156
    %v471 = vunpack.c.l.b16 %v157
    %v472 = vunpack.c.l.b16 %v158
    %v473 = vunpack.c.l.b16 %v159
    %v474 = vunpack.c.l.b16 %v160
    %v475 = vunpack.c.l.b16 %v161
    %v476 = vunpack.c.l.b16 %v162
    %v477 = vunpack.c.l.b16 %v163
    %v478 = vunpack.c.l.b16 %v164
    %v479 = vunpack.c.l.b16 %v165
    %v480 = vunpack.c.l.b16 %v166
    %v481 = vpack.c.b16 %v338, %v337
    %v482 = vpack.c.b16 %v340, %v339
    %v483 = vpack.c.b16 %v342, %v341
    %v484 = vpack.c.b16 %v344, %v343
    %v485 = vpack.c.b16 %v346, %v345
    %v486 = vpack.c.b16 %v348, %v347
    %v487 = vpack.c.b16 %v350, %v349
    %v488 = vpack.c.b16 %v352, %v351
    %v489 = vpack.c.b16 %v354, %v353
    %v490 = vpack.c.b16 %v356, %v355
    %v491 = vpack.c.b16 %v358, %v357
    %v492 = vpack.c.b16 %v360, %v359
    %v493 = vpack.c.b16 %v362, %v361
    %v494 = vpack.c.b16 %v364, %v363
    %v495 = vpack.c.b16 %v366, %v365
    %v496 = vpack.c.b16 %v368, %v367
    %v497 = vpack.c.b16 %v370, %v369
    %v498 = vpack.c.b16 %v372, %v371
    %v499 = vpack.c.b16 %v374, %v373
    %v500 = vpack.c.b16 %v376, %v375
    %v501 = vpack.c.b16 %v378, %v377
    %v502 = vpack.c.b16 %v380, %v379
    %v503 = vpack.c.b16 %v382, %v381
    %v504 = vpack.c.b16 %v384, %v383
    %v505 = vpack.c.b16 %v386, %v385
    %v506 = vpack.c.b16 %v388, %v387
    %v507 = vpack.c.b16 %v390, %v389
    %v508 = vpack.c.b16 %v392, %v391
    %v509 = vpack.c.b16 %v394, %v393
    %v510 = vpack.c.b16 %v396, %v395
    %v511 = vpack.c.b16 %v398, %v397
    %v512 = vpack.c.b16 %v400, %v399
    %v513 = vpack.c.b16 %v402, %v401
    %v514 = vpack.c.b16 %v404, %v403
    %v515 = vpack.c.b16 %v406, %v405
    %v516 = vpack.c.b16 %v408, %v407
    %v517 = vpack.c.b16 %v410, %v409
    %v518 = vpack.c.b16 %v412, %v411
    %v519 = vpack.c.b16 %v414, %v413
    %v520 = vpack.c.b16 %v416, %v415
    %v521 = vpack.c.b16 %v418, %v417
    %v522 = vpack.c.b16 %v420, %v419
    %v523 = vpack.c.b16 %v422, %v421
    %v524 = vpack.c.b16 %v424, %v423
    %v525 = vpack.c.b16 %v426, %v425
    %v526 = vpack.c.b16 %v428, %v427
    %v527 = vpack.c.b16 %v430, %v429
    %v528 = vpack.c.b16 %v432, %v431
    %v529 = vpack.c.b16 %v434, %v433
    %v530 = vpack.c.b16 %v436, %v435
    %v531 = vpack.c.b16 %v438, %v437
    %v532 = vpack.c.b16 %v440, %v439
    %v533 = vpack.c.b16 %v442, %v441
    %v534 = vpack.c.b16 %v444, %v443
    %v535 = vpack.c.b16 %v446, %v445
    %v536 = vpack.c.b16 %v448, %v447
    %v537 = vpack.c.b16 %v450, %v449
    %v538 = vpack.c.b16 %v452, %v451
    %v539 = vpack.c.b16 %v454, %v453
    %v540 = vpack.c.b16 %v456, %v455
    %v541 = vpack.c.b16 %v458, %v457
    %v542 = vpack.c.b16 %v460, %v459
    %v543 = vpack.c.b16 %v462, %v461
    %v544 = vpack.c.b16 %v464, %v463
    %v545 = vpack.c.b16 %v466, %v465
    %v546 = vpack.c.b16 %v468, %v467
    %v547 = vpack.c.b16 %v470, %v469
    %v548 = vpack.c.b16 %v472, %v471
    %v549 = vpack.c.b16 %v474, %v473
    %v550 = vpack.c.b16 %v476, %v475
    %v551 = vpack.c.b16 %v478, %v477
    %v552 = vpack.c.b16 %v480, %v479
    %625 = vmatpush.bf16.msra.mxu0 %v488
    %626 = vmatpush.bf16.msra.mxu0 %v487
    %627 = vmatpush.bf16.msra.mxu0 %v486
    %628 = vmatpush.bf16.msra.mxu0 %v485
    %629 = vmatpush.bf16.msra.mxu0 %v484
    %630 = vmatpush.bf16.msra.mxu0 %v483
    %631 = vmatpush.bf16.msra.mxu0 %v482
    %632 = vmatpush.bf16.msra.mxu0 %v481
    %633 = vmatmul.bf16.gmra.mxu0 %v173
    %v634 = vpop.f32.mrf.mxu0
    %v635 = vadd.f32 %v169, %v634
    %v636 = vpop.f32.mrf.mxu0
    %637 = vdwg.mxu0
    %638 = vmatpush.bf16.msra.mxu0 %v496
    %639 = vmatpush.bf16.msra.mxu0 %v495
    %640 = vmatpush.bf16.msra.mxu0 %v494
    %641 = vmatpush.bf16.msra.mxu0 %v493
    %642 = vmatpush.bf16.msra.mxu0 %v492
    %643 = vmatpush.bf16.msra.mxu0 %v491
    %644 = vmatpush.bf16.msra.mxu0 %v490
    %645 = vmatpush.bf16.msra.mxu0 %v489
    %646 = vmatmul.bf16.gmra.mxu0 %v174
    %v647 = vpop.f32.mrf.mxu0
    %v648 = vadd.f32 %v635, %v647
    %v649 = vpop.f32.mrf.mxu0
    %650 = vdwg.mxu0
    %651 = vmatpush.bf16.msra.mxu0 %v504
    %652 = vmatpush.bf16.msra.mxu0 %v503
    %653 = vmatpush.bf16.msra.mxu0 %v502
    %654 = vmatpush.bf16.msra.mxu0 %v501
    %655 = vmatpush.bf16.msra.mxu0 %v500
    %656 = vmatpush.bf16.msra.mxu0 %v499
    %657 = vmatpush.bf16.msra.mxu0 %v498
    %658 = vmatpush.bf16.msra.mxu0 %v497
    %659 = vmatmul.bf16.gmra.mxu0 %v175
    %v660 = vpop.f32.mrf.mxu0
    %v661 = vadd.f32 %v648, %v660
    %v662 = vpop.f32.mrf.mxu0
    %663 = vdwg.mxu0
    %664 = vmatpush.bf16.msra.mxu0 %v512
    %665 = vmatpush.bf16.msra.mxu0 %v511
    %666 = vmatpush.bf16.msra.mxu0 %v510
    %667 = vmatpush.bf16.msra.mxu0 %v509
    %668 = vmatpush.bf16.msra.mxu0 %v508
    %669 = vmatpush.bf16.msra.mxu0 %v507
    %670 = vmatpush.bf16.msra.mxu0 %v506
    %671 = vmatpush.bf16.msra.mxu0 %v505
    %672 = vmatmul.bf16.gmra.mxu0 %v176
    %v673 = vpop.f32.mrf.mxu0
    %v674 = vadd.f32 %v661, %v673
    %v675 = vpop.f32.mrf.mxu0
    %676 = vdwg.mxu0
    %677 = vmatpush.bf16.msra.mxu0 %v520
    %678 = vmatpush.bf16.msra.mxu0 %v519
    %679 = vmatpush.bf16.msra.mxu0 %v518
    %680 = vmatpush.bf16.msra.mxu0 %v517
    %681 = vmatpush.bf16.msra.mxu0 %v516
    %682 = vmatpush.bf16.msra.mxu0 %v515
    %683 = vmatpush.bf16.msra.mxu0 %v514
    %684 = vmatpush.bf16.msra.mxu0 %v513
    %685 = vmatmul.bf16.gmra.mxu0 %v177
    %v686 = vpop.f32.mrf.mxu0
    %v687 = vadd.f32 %v674, %v686
    %v688 = vpop.f32.mrf.mxu0
    %689 = vdwg.mxu0
    %690 = vmatpush.bf16.msra.mxu0 %v528
    %691 = vmatpush.bf16.msra.mxu0 %v527
    %692 = vmatpush.bf16.msra.mxu0 %v526
    %693 = vmatpush.bf16.msra.mxu0 %v525
    %694 = vmatpush.bf16.msra.mxu0 %v524
    %695 = vmatpush.bf16.msra.mxu0 %v523
    %696 = vmatpush.bf16.msra.mxu0 %v522
    %697 = vmatpush.bf16.msra.mxu0 %v521
    %698 = vmatmul.bf16.gmra.mxu0 %v178
    %v699 = vpop.f32.mrf.mxu0
    %v700 = vadd.f32 %v687, %v699
    %v701 = vpop.f32.mrf.mxu0
    %702 = vdwg.mxu0
    %703 = vmatpush.bf16.msra.mxu0 %v536
    %704 = vmatpush.bf16.msra.mxu0 %v535
    %705 = vmatpush.bf16.msra.mxu0 %v534
    %706 = vmatpush.bf16.msra.mxu0 %v533
    %707 = vmatpush.bf16.msra.mxu0 %v532
    %708 = vmatpush.bf16.msra.mxu0 %v531
    %709 = vmatpush.bf16.msra.mxu0 %v530
    %710 = vmatpush.bf16.msra.mxu0 %v529
    %711 = vmatmul.bf16.gmra.mxu0 %v179
    %v712 = vpop.f32.mrf.mxu0
    %v713 = vadd.f32 %v700, %v712
    %v714 = vpop.f32.mrf.mxu0
    %715 = vdwg.mxu0
    %716 = vmatpush.bf16.msra.mxu0 %v544
    %717 = vmatpush.bf16.msra.mxu0 %v543
    %718 = vmatpush.bf16.msra.mxu0 %v542
    %719 = vmatpush.bf16.msra.mxu0 %v541
    %720 = vmatpush.bf16.msra.mxu0 %v540
    %721 = vmatpush.bf16.msra.mxu0 %v539
    %722 = vmatpush.bf16.msra.mxu0 %v538
    %723 = vmatpush.bf16.msra.mxu0 %v537
    %724 = vmatmul.bf16.gmra.mxu0 %v180
    %v725 = vpop.f32.mrf.mxu0
    %v726 = vadd.f32 %v713, %v725
    %v727 = vpop.f32.mrf.mxu0
    %728 = vdwg.mxu0
    %729 = vmatpush.bf16.msra.mxu0 %v552
    %730 = vmatpush.bf16.msra.mxu0 %v551
    %731 = vmatpush.bf16.msra.mxu0 %v550
    %732 = vmatpush.bf16.msra.mxu0 %v549
    %733 = vmatpush.bf16.msra.mxu0 %v548
    %734 = vmatpush.bf16.msra.mxu0 %v547
    %735 = vmatpush.bf16.msra.mxu0 %v546
    %736 = vmatpush.bf16.msra.mxu0 %v545
    %737 = vmatmul.bf16.gmra.mxu0 %v183
    %v738 = vpop.f32.mrf.mxu0
    %v739 = vadd.f32 %v726, %v738
    %v740 = vpop.f32.mrf.mxu0
    %741 = vdwg.mxu0
    %v742 = vmax.f32 %v739, 0.0
    %v743 = vpack.c.bf16 %v742, %v742
    %v744 = vld [vmem:[%s3] sm:$0xf]
    %v745 = vld [vmem:[%s3 + $0x4] sm:$0xf]
    %v746 = vld [vmem:[%s3 + $0x8] sm:$0xf]
    %v747 = vld [vmem:[%s3 + $0xc] sm:$0xf]
    %v748 = vld [vmem:[%s3 + $0x10] sm:$0xf]
    %v749 = vld [vmem:[%s3 + $0x14] sm:$0xf]
    %v750 = vld [vmem:[%s3 + $0x18] sm:$0xf]
    %v751 = vld [vmem:[%s3 + $0x1c] sm:$0xf]
    %v752 = vld [vmem:[%s3 + $0x20] sm:$0xf]
    %v753 = vld [vmem:[%s3 + $0x24] sm:$0xf]
    %v754 = vld [vmem:[%s3 + $0x28] sm:$0xf]
    %v755 = vld [vmem:[%s3 + $0x2c] sm:$0xf]
    %v756 = vld [vmem:[%s3 + $0x30] sm:$0xf]
    %v757 = vld [vmem:[%s3 + $0x34] sm:$0xf]
    %v758 = vld [vmem:[%s3 + $0x38] sm:$0xf]
    %v759 = vld [vmem:[%s3 + $0x3c] sm:$0xf]
    %v760 = vld [vmem:[%s4] sm:$0x1]
    %v762 = vperm.slane %v760, 0
    %v780 = vunpack.c.l.b16 %v744
    %v781 = vunpack.c.l.b16 %v745
    %v782 = vunpack.c.l.b16 %v746
    %v783 = vunpack.c.l.b16 %v747
    %v784 = vunpack.c.l.b16 %v748
    %v785 = vunpack.c.l.b16 %v749
    %v786 = vunpack.c.l.b16 %v750
    %v787 = vunpack.c.l.b16 %v751
    %v788 = vunpack.c.l.b16 %v752
    %v789 = vunpack.c.l.b16 %v753
    %v790 = vunpack.c.l.b16 %v754
    %v791 = vunpack.c.l.b16 %v755
    %v792 = vunpack.c.l.b16 %v756
    %v793 = vunpack.c.l.b16 %v757
    %v794 = vunpack.c.l.b16 %v758
    %v795 = vunpack.c.l.b16 %v759
    %v796 = vpack.c.b16 %v781, %v780
    %v797 = vpack.c.b16 %v783, %v782
    %v798 = vpack.c.b16 %v785, %v784
    %v799 = vpack.c.b16 %v787, %v786
    %v800 = vpack.c.b16 %v789, %v788
    %v801 = vpack.c.b16 %v791, %v790
    %v802 = vpack.c.b16 %v793, %v792
    %v803 = vpack.c.b16 %v795, %v794
    %812 = vmatpush.bf16.msra.mxu0 %v803
    %813 = vmatpush.bf16.msra.mxu0 %v802
    %814 = vmatpush.bf16.msra.mxu0 %v801
    %815 = vmatpush.bf16.msra.mxu0 %v800
    %816 = vmatpush.bf16.msra.mxu0 %v799
    %817 = vmatpush.bf16.msra.mxu0 %v798
    %818 = vmatpush.bf16.msra.mxu0 %v797
    %819 = vmatpush.bf16.msra.mxu0 %v796
    %820 = vmatmul.bf16.gmra.mxu0 %v743
    %v821 = vpop.f32.mrf.mxu0
    %v822 = vadd.f32 %v762, %v821
    %v823 = vpop.f32.mrf.mxu0
    %824 = vdwg.mxu0
    %vm825 = vcmask 1041408
    %v826 = vsel %vm825, %v822, -inf
    %827 = vmax.xlane.f32.xlu0 %v826
    %v828 = vpop.xlane.xlu0 %827
    %v829 = vsub.f32 %v822, %v828
    %v830 = vmul.f32 %v829, 1.442695
    %v831 = vpow.pop %v830
    %v832 = vsel %vm825, %v831, 0.0
    %833 = vadd.xlane.f32.xlu0 %v832
    %v834 = vpop.xlane.xlu0 %833
    %v835 = vlog2.pop %v834
    %v836 = vmul.f32 %v835, 0.6931472
    %v837 = vsub.f32 %v829, %v836
    %838 = vst [vmem:[#allocation2] sm:$0x3] %v837
    // Predicated region
    $region22: #{convnet_forward.7} parent=1 // pred_check
      _
    $region23: #{convnet_forward.7} parent=1 // pred_check_branch
      %840 = sbr.rel (0) target = $region25
    $region24: #{convnet_forward.7} parent=1 // pred_region
      %842 = vsyncadd [#allocation3], 0
      %s844 = sshll.u32 [#allocation2], 4
      %s845 = int_to_ptr.vmem [resolvable:$true] %s844
      %s846 = sshll.u32 %s5, 4
      %s847 = int_to_ptr.hbm [resolvable:$true] %s846
      %849 = dma.vmem_to_hbm [thread:$0]  %s845, 32, %s847, [#allocation3]
    $region25: #{convnet_forward.7} parent=1 // pred_fallthru
      _
    // Predicated region
    $region26: #{convnet_forward.7} parent=1 // pred_check
      _
    $region27: #{convnet_forward.7} parent=1 // pred_check_branch
      %851 = sbr.rel (0) target = $region29
    $region28: #{convnet_forward.7} parent=1 // pred_region
      %853 = dma.done [#allocation3], 32
    $region29: #{convnet_forward.7} parent=1 // pred_fallthru
      _
    %854 = vsyncpa [#allocation3], 1

// kernel: convnet_forward.4
$region0: #{convnet_forward.4}
  #allocation0 [shape = 'u32[]', space=smem, size = 0x4, offset = 0x4, fixed_abs, tag = 'smem constant byte address 0x4 - core index']
  #allocation1 [shape = 'u32[72,128]{1,0:T(1,128)}', space=vmem, size = 0x9000, scoped, tag = 'internal scratch']
  #allocation2 [shape = 'f32[784,32]{1,0:T(8,128)}', space=vmem, size = 0x62000, scoped, tag = 'scratch operand']
  %s0 = inlined_call_operand.vmem [shape: bf16[2,784,32], index: 0, kind: input, shape index: {}]
  %s1 = inlined_call_operand.vmem [shape: bf16[32,32], index: 1, kind: input, shape index: {}]
  %s2 = inlined_call_operand.vmem [shape: f32[1,32], index: 2, kind: input, shape index: {}]
  %s3 = inlined_call_operand.vmem [shape: bf16[258,755], index: 3, kind: input, shape index: {}]
  %s4 = inlined_call_operand.vmem [shape: bf16[2,258,32], index: 4, kind: output, shape index: {}]
  %s5 = sld [smem:[#allocation0]]
  $region33: #{convnet_forward.4} parent=0
    _
  %s7 = ssub.s32 1, %s5
  %s8 = scalar_select 0, %s7, %s5
  // Predicated region
  $region2: #{convnet_forward.4} parent=0 // pred_check
    _
  $region3: #{convnet_forward.4} parent=0 // pred_check_branch
    %10 = sbr.rel (0) target = $region5
  $region4: #{convnet_forward.4} parent=0 // pred_region
    _
  $region5: #{convnet_forward.4} parent=0 // pred_fallthru
    _
  // Predicated region
  $region6: #{convnet_forward.4} parent=0 // pred_check
    _
  $region7: #{convnet_forward.4} parent=0 // pred_check_branch
    %12 = sbr.rel (0) target = $region9
  $region8: #{convnet_forward.4} parent=0 // pred_region
    _
  $region9: #{convnet_forward.4} parent=0 // pred_fallthru
    _
  // Predicated region
  $region10: #{convnet_forward.4} parent=0 // pred_check
    _
  $region11: #{convnet_forward.4} parent=0 // pred_check_branch
    %14 = sbr.rel (0) target = $region13
  $region12: #{convnet_forward.4} parent=0 // pred_region
    _
  $region13: #{convnet_forward.4} parent=0 // pred_fallthru
    _
  // Predicated region
  $region14: #{convnet_forward.4} parent=0 // pred_check
    _
  $region15: #{convnet_forward.4} parent=0 // pred_check_branch
    %16 = sbr.rel (0) target = $region17
  $region16: #{convnet_forward.4} parent=0 // pred_region
    _
  $region17: #{convnet_forward.4} parent=0 // pred_fallthru
    _
  loop: start=0, step=1, limit=2
  $region18: #{convnet_forward.4} parent=0 // loop_pre_header
    _
  $region19: #{convnet_forward.4} parent=0 // loop_header
    %s19 = sphi 0, %s23
    %p20 = scmp.ge.s32.totalorder %s19, 2
  $region20: #{convnet_forward.4} parent=0 // loop_header_branch
    %22 = sbr.rel (%p20) target = $region24
  $region21: #{convnet_forward.4} parent=0 // loop_body
    %s24 = smul.u32 %s19, 98
    %s25 = smul.addr %s24, 4
    %s26 = scalar_lea.vmem %s0, %s25
    %v27 = vld [vmem:[%s26] sm:$0xf]
    %v28 = vld [vmem:[%s26 + $0x4] sm:$0xf]
    %v29 = vld [vmem:[%s26 + $0x8] sm:$0xf]
    %v30 = vld [vmem:[%s26 + $0xc] sm:$0xf]
    %v31 = vld [vmem:[%s26 + $0x10] sm:$0xf]
    %v32 = vld [vmem:[%s26 + $0x14] sm:$0xf]
    %v33 = vld [vmem:[%s26 + $0x18] sm:$0xf]
    %v34 = vld [vmem:[%s26 + $0x1c] sm:$0xf]
    %v35 = vld [vmem:[%s26 + $0x20] sm:$0xf]
    %v36 = vld [vmem:[%s26 + $0x24] sm:$0xf]
    %v37 = vld [vmem:[%s26 + $0x28] sm:$0xf]
    %v38 = vld [vmem:[%s26 + $0x2c] sm:$0xf]
    %v39 = vld [vmem:[%s26 + $0x30] sm:$0xf]
    %v40 = vld [vmem:[%s26 + $0x34] sm:$0xf]
    %v41 = vld [vmem:[%s26 + $0x38] sm:$0xf]
    %v42 = vld [vmem:[%s26 + $0x3c] sm:$0xf]
    %v43 = vld [vmem:[%s26 + $0x40] sm:$0xf]
    %v44 = vld [vmem:[%s26 + $0x44] sm:$0xf]
    %v45 = vld [vmem:[%s26 + $0x48] sm:$0xf]
    %v46 = vld [vmem:[%s26 + $0x4c] sm:$0xf]
    %v47 = vld [vmem:[%s26 + $0x50] sm:$0xf]
    %v48 = vld [vmem:[%s26 + $0x54] sm:$0xf]
    %v49 = vld [vmem:[%s26 + $0x58] sm:$0xf]
    %v50 = vld [vmem:[%s26 + $0x5c] sm:$0xf]
    %v51 = vld [vmem:[%s26 + $0x60] sm:$0xf]
    %v52 = vld [vmem:[%s26 + $0x64] sm:$0xf]
    %v53 = vld [vmem:[%s26 + $0x68] sm:$0xf]
    %v54 = vld [vmem:[%s26 + $0x6c] sm:$0xf]
    %v55 = vld [vmem:[%s26 + $0x70] sm:$0xf]
    %v56 = vld [vmem:[%s26 + $0x74] sm:$0xf]
    %v57 = vld [vmem:[%s26 + $0x78] sm:$0xf]
    %v58 = vld [vmem:[%s26 + $0x7c] sm:$0xf]
    %v59 = vld [vmem:[%s26 + $0x80] sm:$0xf]
    %v60 = vld [vmem:[%s26 + $0x84] sm:$0xf]
    %v61 = vld [vmem:[%s26 + $0x88] sm:$0xf]
    %v62 = vld [vmem:[%s26 + $0x8c] sm:$0xf]
    %v63 = vld [vmem:[%s26 + $0x90] sm:$0xf]
    %v64 = vld [vmem:[%s26 + $0x94] sm:$0xf]
    %v65 = vld [vmem:[%s26 + $0x98] sm:$0xf]
    %v66 = vld [vmem:[%s26 + $0x9c] sm:$0xf]
    %v67 = vld [vmem:[%s26 + $0xa0] sm:$0xf]
    %v68 = vld [vmem:[%s26 + $0xa4] sm:$0xf]
    %v69 = vld [vmem:[%s26 + $0xa8] sm:$0xf]
    %v70 = vld [vmem:[%s26 + $0xac] sm:$0xf]
    %v71 = vld [vmem:[%s26 + $0xb0] sm:$0xf]
    %v72 = vld [vmem:[%s26 + $0xb4] sm:$0xf]
    %v73 = vld [vmem:[%s26 + $0xb8] sm:$0xf]
    %v74 = vld [vmem:[%s26 + $0xbc] sm:$0xf]
    %v75 = vld [vmem:[%s26 + $0xc0] sm:$0xf]
    %v76 = vld [vmem:[%s26 + $0xc4] sm:$0xf]
    %v77 = vld [vmem:[%s26 + $0xc8] sm:$0xf]
    %v78 = vld [vmem:[%s26 + $0xcc] sm:$0xf]
    %v79 = vld [vmem:[%s26 + $0xd0] sm:$0xf]
    %v80 = vld [vmem:[%s26 + $0xd4] sm:$0xf]
    %v81 = vld [vmem:[%s26 + $0xd8] sm:$0xf]
    %v82 = vld [vmem:[%s26 + $0xdc] sm:$0xf]
    %v83 = vld [vmem:[%s26 + $0xe0] sm:$0xf]
    %v84 = vld [vmem:[%s26 + $0xe4] sm:$0xf]
    %v85 = vld [vmem:[%s26 + $0xe8] sm:$0xf]
    %v86 = vld [vmem:[%s26 + $0xec] sm:$0xf]
    %v87 = vld [vmem:[%s26 + $0xf0] sm:$0xf]
    %v88 = vld [vmem:[%s26 + $0xf4] sm:$0xf]
    %v89 = vld [vmem:[%s26 + $0xf8] sm:$0xf]
    %v90 = vld [vmem:[%s26 + $0xfc] sm:$0xf]
    %v91 = vld [vmem:[%s26 + $0x100] sm:$0xf]
    %v92 = vld [vmem:[%s26 + $0x104] sm:$0xf]
    %v93 = vld [vmem:[%s26 + $0x108] sm:$0xf]
    %v94 = vld [vmem:[%s26 + $0x10c] sm:$0xf]
    %v95 = vld [vmem:[%s26 + $0x110] sm:$0xf]
    %v96 = vld [vmem:[%s26 + $0x114] sm:$0xf]
    %v97 = vld [vmem:[%s26 + $0x118] sm:$0xf]
    %v98 = vld [vmem:[%s26 + $0x11c] sm:$0xf]
    %v99 = vld [vmem:[%s26 + $0x120] sm:$0xf]
    %v100 = vld [vmem:[%s26 + $0x124] sm:$0xf]
    %v101 = vld [vmem:[%s26 + $0x128] sm:$0xf]
    %v102 = vld [vmem:[%s26 + $0x12c] sm:$0xf]
    %v103 = vld [vmem:[%s26 + $0x130] sm:$0xf]
    %v104 = vld [vmem:[%s26 + $0x134] sm:$0xf]
    %v105 = vld [vmem:[%s26 + $0x138] sm:$0xf]
    %v106 = vld [vmem:[%s26 + $0x13c] sm:$0xf]
    %v107 = vld [vmem:[%s26 + $0x140] sm:$0xf]
    %v108 = vld [vmem:[%s26 + $0x144] sm:$0xf]
    %v109 = vld [vmem:[%s26 + $0x148] sm:$0xf]
    %v110 = vld [vmem:[%s26 + $0x14c] sm:$0xf]
    %v111 = vld [vmem:[%s26 + $0x150] sm:$0xf]
    %v112 = vld [vmem:[%s26 + $0x154] sm:$0xf]
    %v113 = vld [vmem:[%s26 + $0x158] sm:$0xf]
    %v114 = vld [vmem:[%s26 + $0x15c] sm:$0xf]
    %v115 = vld [vmem:[%s26 + $0x160] sm:$0xf]
    %v116 = vld [vmem:[%s26 + $0x164] sm:$0xf]
    %v117 = vld [vmem:[%s26 + $0x168] sm:$0xf]
    %v118 = vld [vmem:[%s26 + $0x16c] sm:$0xf]
    %v119 = vld [vmem:[%s26 + $0x170] sm:$0xf]
    %v120 = vld [vmem:[%s26 + $0x174] sm:$0xf]
    %v121 = vld [vmem:[%s26 + $0x178] sm:$0xf]
    %v122 = vld [vmem:[%s26 + $0x17c] sm:$0xf]
    %v123 = vld [vmem:[%s26 + $0x180] sm:$0xf]
    %v124 = vld [vmem:[%s26 + $0x184] sm:$0xf]
    %v125 = vld [vmem:[%s1] sm:$0xf]
    %v126 = vld [vmem:[%s1 + $0x4] sm:$0xf]
    %v127 = vld [vmem:[%s1 + $0x8] sm:$0xf]
    %v128 = vld [vmem:[%s1 + $0xc] sm:$0xf]
    %v129 = vld [vmem:[%s2] sm:$0x1]
    %v131 = vperm.slane %v129, 0
    %v231 = vunpack.c.l.b16 %v27
    %v232 = vunpack.c.l.b16 %v28
    %v233 = vunpack.c.l.b16 %v29
    %v234 = vunpack.c.l.b16 %v30
    %v235 = vunpack.c.l.b16 %v31
    %v236 = vunpack.c.l.b16 %v32
    %v237 = vunpack.c.l.b16 %v33
    %v238 = vunpack.c.l.b16 %v34
    %v239 = vunpack.c.l.b16 %v35
    %v240 = vunpack.c.l.b16 %v36
    %v241 = vunpack.c.l.b16 %v37
    %v242 = vunpack.c.l.b16 %v38
    %v243 = vunpack.c.l.b16 %v39
    %v244 = vunpack.c.l.b16 %v40
    %v245 = vunpack.c.l.b16 %v41
    %v246 = vunpack.c.l.b16 %v42
    %v247 = vunpack.c.l.b16 %v43
    %v248 = vunpack.c.l.b16 %v44
    %v249 = vunpack.c.l.b16 %v45
    %v250 = vunpack.c.l.b16 %v46
    %v251 = vunpack.c.l.b16 %v47
    %v252 = vunpack.c.l.b16 %v48
    %v253 = vunpack.c.l.b16 %v49
    %v254 = vunpack.c.l.b16 %v50
    %v255 = vunpack.c.l.b16 %v51
    %v256 = vunpack.c.l.b16 %v52
    %v257 = vunpack.c.l.b16 %v53
    %v258 = vunpack.c.l.b16 %v54
    %v259 = vunpack.c.l.b16 %v55
    %v260 = vunpack.c.l.b16 %v56
    %v261 = vunpack.c.l.b16 %v57
    %v262 = vunpack.c.l.b16 %v58
    %v263 = vunpack.c.l.b16 %v59
    %v264 = vunpack.c.l.b16 %v60
    %v265 = vunpack.c.l.b16 %v61
    %v266 = vunpack.c.l.b16 %v62
    %v267 = vunpack.c.l.b16 %v63
    %v268 = vunpack.c.l.b16 %v64
    %v269 = vunpack.c.l.b16 %v65
    %v270 = vunpack.c.l.b16 %v66
    %v271 = vunpack.c.l.b16 %v67
    %v272 = vunpack.c.l.b16 %v68
    %v273 = vunpack.c.l.b16 %v69
    %v274 = vunpack.c.l.b16 %v70
    %v275 = vunpack.c.l.b16 %v71
    %v276 = vunpack.c.l.b16 %v72
    %v277 = vunpack.c.l.b16 %v73
    %v278 = vunpack.c.l.b16 %v74
    %v279 = vunpack.c.l.b16 %v75
    %v280 = vunpack.c.l.b16 %v76
    %v281 = vunpack.c.l.b16 %v77
    %v282 = vunpack.c.l.b16 %v78
    %v283 = vunpack.c.l.b16 %v79
    %v284 = vunpack.c.l.b16 %v80
    %v285 = vunpack.c.l.b16 %v81
    %v286 = vunpack.c.l.b16 %v82
    %v287 = vunpack.c.l.b16 %v83
    %v288 = vunpack.c.l.b16 %v84
    %v289 = vunpack.c.l.b16 %v85
    %v290 = vunpack.c.l.b16 %v86
    %v291 = vunpack.c.l.b16 %v87
    %v292 = vunpack.c.l.b16 %v88
    %v293 = vunpack.c.l.b16 %v89
    %v294 = vunpack.c.l.b16 %v90
    %v295 = vunpack.c.l.b16 %v91
    %v296 = vunpack.c.l.b16 %v92
    %v297 = vunpack.c.l.b16 %v93
    %v298 = vunpack.c.l.b16 %v94
    %v299 = vunpack.c.l.b16 %v95
    %v300 = vunpack.c.l.b16 %v96
    %v301 = vunpack.c.l.b16 %v97
    %v302 = vunpack.c.l.b16 %v98
    %v303 = vunpack.c.l.b16 %v99
    %v304 = vunpack.c.l.b16 %v100
    %v305 = vunpack.c.l.b16 %v101
    %v306 = vunpack.c.l.b16 %v102
    %v307 = vunpack.c.l.b16 %v103
    %v308 = vunpack.c.l.b16 %v104
    %v309 = vunpack.c.l.b16 %v105
    %v310 = vunpack.c.l.b16 %v106
    %v311 = vunpack.c.l.b16 %v107
    %v312 = vunpack.c.l.b16 %v108
    %v313 = vunpack.c.l.b16 %v109
    %v314 = vunpack.c.l.b16 %v110
    %v315 = vunpack.c.l.b16 %v111
    %v316 = vunpack.c.l.b16 %v112
    %v317 = vunpack.c.l.b16 %v113
    %v318 = vunpack.c.l.b16 %v114
    %v319 = vunpack.c.l.b16 %v115
    %v320 = vunpack.c.l.b16 %v116
    %v321 = vunpack.c.l.b16 %v117
    %v322 = vunpack.c.l.b16 %v118
    %v323 = vunpack.c.l.b16 %v119
    %v324 = vunpack.c.l.b16 %v120
    %v325 = vunpack.c.l.b16 %v121
    %v326 = vunpack.c.l.b16 %v122
    %v327 = vunpack.c.l.b16 %v123
    %v328 = vunpack.c.l.b16 %v124
    %v329 = vpack.c.b16 %v232, %v231
    %v330 = vpack.c.b16 %v234, %v233
    %v331 = vpack.c.b16 %v236, %v235
    %v332 = vpack.c.b16 %v238, %v237
    %v333 = vpack.c.b16 %v240, %v239
    %v334 = vpack.c.b16 %v242, %v241
    %v335 = vpack.c.b16 %v244, %v243
    %v336 = vpack.c.b16 %v246, %v245
    %v337 = vpack.c.b16 %v248, %v247
    %v338 = vpack.c.b16 %v250, %v249
    %v339 = vpack.c.b16 %v252, %v251
    %v340 = vpack.c.b16 %v254, %v253
    %v341 = vpack.c.b16 %v256, %v255
    %v342 = vpack.c.b16 %v258, %v257
    %v343 = vpack.c.b16 %v260, %v259
    %v344 = vpack.c.b16 %v262, %v261
    %v345 = vpack.c.b16 %v264, %v263
    %v346 = vpack.c.b16 %v266, %v265
    %v347 = vpack.c.b16 %v268, %v267
    %v348 = vpack.c.b16 %v270, %v269
    %v349 = vpack.c.b16 %v272, %v271
    %v350 = vpack.c.b16 %v274, %v273
    %v351 = vpack.c.b16 %v276, %v275
    %v352 = vpack.c.b16 %v278, %v277
    %v353 = vpack.c.b16 %v280, %v279
    %v354 = vpack.c.b16 %v282, %v281
    %v355 = vpack.c.b16 %v284, %v283
    %v356 = vpack.c.b16 %v286, %v285
    %v357 = vpack.c.b16 %v288, %v287
    %v358 = vpack.c.b16 %v290, %v289
    %v359 = vpack.c.b16 %v292, %v291
    %v360 = vpack.c.b16 %v294, %v293
    %v361 = vpack.c.b16 %v296, %v295
    %v362 = vpack.c.b16 %v298, %v297
    %v363 = vpack.c.b16 %v300, %v299
    %v364 = vpack.c.b16 %v302, %v301
    %v365 = vpack.c.b16 %v304, %v303
    %v366 = vpack.c.b16 %v306, %v305
    %v367 = vpack.c.b16 %v308, %v307
    %v368 = vpack.c.b16 %v310, %v309
    %v369 = vpack.c.b16 %v312, %v311
    %v370 = vpack.c.b16 %v314, %v313
    %v371 = vpack.c.b16 %v316, %v315
    %v372 = vpack.c.b16 %v318, %v317
    %v373 = vpack.c.b16 %v320, %v319
    %v374 = vpack.c.b16 %v322, %v321
    %v375 = vpack.c.b16 %v324, %v323
    %v376 = vpack.c.b16 %v326, %v325
    %v377 = vpack.c.b16 %v328, %v327
    %v382 = vunpack.c.l.b16 %v125
    %v383 = vunpack.c.l.b16 %v126
    %v384 = vunpack.c.l.b16 %v127
    %v385 = vunpack.c.l.b16 %v128
    %v386 = vpack.c.b16 %v383, %v382
    %v387 = vpack.c.b16 %v385, %v384
    %vm390 = vcmask 261120
    %v392 = vsel %vm390, %v329, 0
    %v395 = vsel %vm390, %v330, 0
    %v398 = vsel %vm390, %v331, 0
    %v401 = vsel %vm390, %v332, 0
    %v404 = vsel %vm390, %v333, 0
    %v407 = vsel %vm390, %v334, 0
    %v410 = vsel %vm390, %v335, 0
    %v413 = vsel %vm390, %v336, 0
    %v416 = vsel %vm390, %v337, 0
    %v419 = vsel %vm390, %v338, 0
    %v422 = vsel %vm390, %v339, 0
    %v425 = vsel %vm390, %v340, 0
    %v428 = vsel %vm390, %v341, 0
    %v431 = vsel %vm390, %v342, 0
    %v434 = vsel %vm390, %v343, 0
    %v437 = vsel %vm390, %v344, 0
    %v440 = vsel %vm390, %v345, 0
    %v443 = vsel %vm390, %v346, 0
    %v446 = vsel %vm390, %v347, 0
    %v449 = vsel %vm390, %v348, 0
    %v452 = vsel %vm390, %v349, 0
    %v455 = vsel %vm390, %v350, 0
    %v458 = vsel %vm390, %v351, 0
    %v461 = vsel %vm390, %v352, 0
    %v464 = vsel %vm390, %v353, 0
    %v467 = vsel %vm390, %v354, 0
    %v470 = vsel %vm390, %v355, 0
    %v473 = vsel %vm390, %v356, 0
    %v476 = vsel %vm390, %v357, 0
    %v479 = vsel %vm390, %v358, 0
    %v482 = vsel %vm390, %v359, 0
    %v485 = vsel %vm390, %v360, 0
    %v488 = vsel %vm390, %v361, 0
    %v491 = vsel %vm390, %v362, 0
    %v494 = vsel %vm390, %v363, 0
    %v497 = vsel %vm390, %v364, 0
    %v500 = vsel %vm390, %v365, 0
    %v503 = vsel %vm390, %v366, 0
    %v506 = vsel %vm390, %v367, 0
    %v509 = vsel %vm390, %v368, 0
    %v512 = vsel %vm390, %v369, 0
    %v515 = vsel %vm390, %v370, 0
    %v518 = vsel %vm390, %v371, 0
    %v521 = vsel %vm390, %v372, 0
    %v524 = vsel %vm390, %v373, 0
    %v527 = vsel %vm390, %v374, 0
    %v530 = vsel %vm390, %v375, 0
    %v533 = vsel %vm390, %v376, 0
    %v536 = vsel %vm390, %v377, 0
    %538 = vmatpush.bf16.msra.mxu0 0
    %539 = vmatpush.bf16.msra.mxu0 0
    %540 = vmatpush.bf16.msra.mxu0 0
    %541 = vmatpush.bf16.msra.mxu0 0
    %542 = vmatpush.bf16.msra.mxu0 0
    %543 = vmatpush.bf16.msra.mxu0 0
    %544 = vmatpush.bf16.msra.mxu0 %v387
    %545 = vmatpush.bf16.msra.mxu0 %v386
    %546 = vmatmul.bf16.gmra.mxu0 %v392
    %v547 = vpop.f32.mrf.mxu0
    %v548 = vadd.f32 %v131, %v547
    %v549 = vpop.f32.mrf.mxu0
    %v550 = vadd.f32 %v131, %v549
    %551 = vmatmul.bf16.gmra.mxu0 %v395
    %v552 = vpop.f32.mrf.mxu0
    %v553 = vadd.f32 %v131, %v552
    %v554 = vpop.f32.mrf.mxu0
    %v555 = vadd.f32 %v131, %v554
    %556 = vmatmul.bf16.gmra.mxu0 %v398
    %v557 = vpop.f32.mrf.mxu0
    %v558 = vadd.f32 %v131, %v557
    %v559 = vpop.f32.mrf.mxu0
    %v560 = vadd.f32 %v131, %v559
    %561 = vmatmul.bf16.gmra.mxu0 %v401
    %v562 = vpop.f32.mrf.mxu0
    %v563 = vadd.f32 %v131, %v562
    %v564 = vpop.f32.mrf.mxu0
    %v565 = vadd.f32 %v131, %v564
    %566 = vmatmul.bf16.gmra.mxu0 %v404
    %v567 = vpop.f32.mrf.mxu0
    %v568 = vadd.f32 %v131, %v567
    %v569 = vpop.f32.mrf.mxu0
    %v570 = vadd.f32 %v131, %v569
    %571 = vmatmul.bf16.gmra.mxu0 %v407
    %v572 = vpop.f32.mrf.mxu0
    %v573 = vadd.f32 %v131, %v572
    %v574 = vpop.f32.mrf.mxu0
    %v575 = vadd.f32 %v131, %v574
    %576 = vmatmul.bf16.gmra.mxu0 %v410
    %v577 = vpop.f32.mrf.mxu0
    %v578 = vadd.f32 %v131, %v577
    %v579 = vpop.f32.mrf.mxu0
    %v580 = vadd.f32 %v131, %v579
    %581 = vmatmul.bf16.gmra.mxu0 %v413
    %v582 = vpop.f32.mrf.mxu0
    %v583 = vadd.f32 %v131, %v582
    %v584 = vpop.f32.mrf.mxu0
    %v585 = vadd.f32 %v131, %v584
    %586 = vmatmul.bf16.gmra.mxu0 %v416
    %v587 = vpop.f32.mrf.mxu0
    %v588 = vadd.f32 %v131, %v587
    %v589 = vpop.f32.mrf.mxu0
    %v590 = vadd.f32 %v131, %v589
    %591 = vmatmul.bf16.gmra.mxu0 %v419
    %v592 = vpop.f32.mrf.mxu0
    %v593 = vadd.f32 %v131, %v592
    %v594 = vpop.f32.mrf.mxu0
    %v595 = vadd.f32 %v131, %v594
    %596 = vmatmul.bf16.gmra.mxu0 %v422
    %v597 = vpop.f32.mrf.mxu0
    %v598 = vadd.f32 %v131, %v597
    %v599 = vpop.f32.mrf.mxu0
    %v600 = vadd.f32 %v131, %v599
    %601 = vmatmul.bf16.gmra.mxu0 %v425
    %v602 = vpop.f32.mrf.mxu0
    %v603 = vadd.f32 %v131, %v602
    %v604 = vpop.f32.mrf.mxu0
    %v605 = vadd.f32 %v131, %v604
    %606 = vmatmul.bf16.gmra.mxu0 %v428
    %v607 = vpop.f32.mrf.mxu0
    %v608 = vadd.f32 %v131, %v607
    %v609 = vpop.f32.mrf.mxu0
    %v610 = vadd.f32 %v131, %v609
    %611 = vmatmul.bf16.gmra.mxu0 %v431
    %v612 = vpop.f32.mrf.mxu0
    %v613 = vadd.f32 %v131, %v612
    %v614 = vpop.f32.mrf.mxu0
    %v615 = vadd.f32 %v131, %v614
    %616 = vmatmul.bf16.gmra.mxu0 %v434
    %v617 = vpop.f32.mrf.mxu0
    %v618 = vadd.f32 %v131, %v617
    %v619 = vpop.f32.mrf.mxu0
    %v620 = vadd.f32 %v131, %v619
    %621 = vmatmul.bf16.gmra.mxu0 %v437
    %v622 = vpop.f32.mrf.mxu0
    %v623 = vadd.f32 %v131, %v622
    %v624 = vpop.f32.mrf.mxu0
    %v625 = vadd.f32 %v131, %v624
    %626 = vmatmul.bf16.gmra.mxu0 %v440
    %v627 = vpop.f32.mrf.mxu0
    %v628 = vadd.f32 %v131, %v627
    %v629 = vpop.f32.mrf.mxu0
    %v630 = vadd.f32 %v131, %v629
    %631 = vmatmul.bf16.gmra.mxu0 %v443
    %v632 = vpop.f32.mrf.mxu0
    %v633 = vadd.f32 %v131, %v632
    %v634 = vpop.f32.mrf.mxu0
    %v635 = vadd.f32 %v131, %v634
    %636 = vmatmul.bf16.gmra.mxu0 %v446
    %v637 = vpop.f32.mrf.mxu0
    %v638 = vadd.f32 %v131, %v637
    %v639 = vpop.f32.mrf.mxu0
    %v640 = vadd.f32 %v131, %v639
    %641 = vmatmul.bf16.gmra.mxu0 %v449
    %v642 = vpop.f32.mrf.mxu0
    %v643 = vadd.f32 %v131, %v642
    %v644 = vpop.f32.mrf.mxu0
    %v645 = vadd.f32 %v131, %v644
    %646 = vmatmul.bf16.gmra.mxu0 %v452
    %v647 = vpop.f32.mrf.mxu0
    %v648 = vadd.f32 %v131, %v647
    %v649 = vpop.f32.mrf.mxu0
    %v650 = vadd.f32 %v131, %v649
    %651 = vmatmul.bf16.gmra.mxu0 %v455
    %v652 = vpop.f32.mrf.mxu0
    %v653 = vadd.f32 %v131, %v652
    %v654 = vpop.f32.mrf.mxu0
    %v655 = vadd.f32 %v131, %v654
    %656 = vmatmul.bf16.gmra.mxu0 %v458
    %v657 = vpop.f32.mrf.mxu0
    %v658 = vadd.f32 %v131, %v657
    %v659 = vpop.f32.mrf.mxu0
    %v660 = vadd.f32 %v131, %v659
    %661 = vmatmul.bf16.gmra.mxu0 %v461
    %v662 = vpop.f32.mrf.mxu0
    %v663 = vadd.f32 %v131, %v662
    %v664 = vpop.f32.mrf.mxu0
    %v665 = vadd.f32 %v131, %v664
    %666 = vmatmul.bf16.gmra.mxu0 %v464
    %v667 = vpop.f32.mrf.mxu0
    %v668 = vadd.f32 %v131, %v667
    %v669 = vpop.f32.mrf.mxu0
    %v670 = vadd.f32 %v131, %v669
    %671 = vmatmul.bf16.gmra.mxu0 %v467
    %v672 = vpop.f32.mrf.mxu0
    %v673 = vadd.f32 %v131, %v672
    %v674 = vpop.f32.mrf.mxu0
    %v675 = vadd.f32 %v131, %v674
    %676 = vmatmul.bf16.gmra.mxu0 %v470
    %v677 = vpop.f32.mrf.mxu0
    %v678 = vadd.f32 %v131, %v677
    %v679 = vpop.f32.mrf.mxu0
    %v680 = vadd.f32 %v131, %v679
    %681 = vmatmul.bf16.gmra.mxu0 %v473
    %v682 = vpop.f32.mrf.mxu0
    %v683 = vadd.f32 %v131, %v682
    %v684 = vpop.f32.mrf.mxu0
    %v685 = vadd.f32 %v131, %v684
    %686 = vmatmul.bf16.gmra.mxu0 %v476
    %v687 = vpop.f32.mrf.mxu0
    %v688 = vadd.f32 %v131, %v687
    %v689 = vpop.f32.mrf.mxu0
    %v690 = vadd.f32 %v131, %v689
    %691 = vmatmul.bf16.gmra.mxu0 %v479
    %v692 = vpop.f32.mrf.mxu0
    %v693 = vadd.f32 %v131, %v692
    %v694 = vpop.f32.mrf.mxu0
    %v695 = vadd.f32 %v131, %v694
    %696 = vmatmul.bf16.gmra.mxu0 %v482
    %v697 = vpop.f32.mrf.mxu0
    %v698 = vadd.f32 %v131, %v697
    %v699 = vpop.f32.mrf.mxu0
    %v700 = vadd.f32 %v131, %v699
    %701 = vmatmul.bf16.gmra.mxu0 %v485
    %v702 = vpop.f32.mrf.mxu0
    %v703 = vadd.f32 %v131, %v702
    %v704 = vpop.f32.mrf.mxu0
    %v705 = vadd.f32 %v131, %v704
    %706 = vmatmul.bf16.gmra.mxu0 %v488
    %v707 = vpop.f32.mrf.mxu0
    %v708 = vadd.f32 %v131, %v707
    %v709 = vpop.f32.mrf.mxu0
    %v710 = vadd.f32 %v131, %v709
    %711 = vmatmul.bf16.gmra.mxu0 %v491
    %v712 = vpop.f32.mrf.mxu0
    %v713 = vadd.f32 %v131, %v712
    %v714 = vpop.f32.mrf.mxu0
    %v715 = vadd.f32 %v131, %v714
    %716 = vmatmul.bf16.gmra.mxu0 %v494
    %v717 = vpop.f32.mrf.mxu0
    %v718 = vadd.f32 %v131, %v717
    %v719 = vpop.f32.mrf.mxu0
    %v720 = vadd.f32 %v131, %v719
    %721 = vmatmul.bf16.gmra.mxu0 %v497
    %v722 = vpop.f32.mrf.mxu0
    %v723 = vadd.f32 %v131, %v722
    %v724 = vpop.f32.mrf.mxu0
    %v725 = vadd.f32 %v131, %v724
    %726 = vmatmul.bf16.gmra.mxu0 %v500
    %v727 = vpop.f32.mrf.mxu0
    %v728 = vadd.f32 %v131, %v727
    %v729 = vpop.f32.mrf.mxu0
    %v730 = vadd.f32 %v131, %v729
    %731 = vmatmul.bf16.gmra.mxu0 %v503
    %v732 = vpop.f32.mrf.mxu0
    %v733 = vadd.f32 %v131, %v732
    %v734 = vpop.f32.mrf.mxu0
    %v735 = vadd.f32 %v131, %v734
    %736 = vmatmul.bf16.gmra.mxu0 %v506
    %v737 = vpop.f32.mrf.mxu0
    %v738 = vadd.f32 %v131, %v737
    %v739 = vpop.f32.mrf.mxu0
    %v740 = vadd.f32 %v131, %v739
    %741 = vmatmul.bf16.gmra.mxu0 %v509
    %v742 = vpop.f32.mrf.mxu0
    %v743 = vadd.f32 %v131, %v742
    %v744 = vpop.f32.mrf.mxu0
    %v745 = vadd.f32 %v131, %v744
    %746 = vmatmul.bf16.gmra.mxu0 %v512
    %v747 = vpop.f32.mrf.mxu0
    %v748 = vadd.f32 %v131, %v747
    %v749 = vpop.f32.mrf.mxu0
    %v750 = vadd.f32 %v131, %v749
    %751 = vmatmul.bf16.gmra.mxu0 %v515
    %v752 = vpop.f32.mrf.mxu0
    %v753 = vadd.f32 %v131, %v752
    %v754 = vpop.f32.mrf.mxu0
    %v755 = vadd.f32 %v131, %v754
    %756 = vmatmul.bf16.gmra.mxu0 %v518
    %v757 = vpop.f32.mrf.mxu0
    %v758 = vadd.f32 %v131, %v757
    %v759 = vpop.f32.mrf.mxu0
    %v760 = vadd.f32 %v131, %v759
    %761 = vmatmul.bf16.gmra.mxu0 %v521
    %v762 = vpop.f32.mrf.mxu0
    %v763 = vadd.f32 %v131, %v762
    %v764 = vpop.f32.mrf.mxu0
    %v765 = vadd.f32 %v131, %v764
    %766 = vmatmul.bf16.gmra.mxu0 %v524
    %v767 = vpop.f32.mrf.mxu0
    %v768 = vadd.f32 %v131, %v767
    %v769 = vpop.f32.mrf.mxu0
    %v770 = vadd.f32 %v131, %v769
    %771 = vmatmul.bf16.gmra.mxu0 %v527
    %v772 = vpop.f32.mrf.mxu0
    %v773 = vadd.f32 %v131, %v772
    %v774 = vpop.f32.mrf.mxu0
    %v775 = vadd.f32 %v131, %v774
    %776 = vmatmul.bf16.gmra.mxu0 %v530
    %v777 = vpop.f32.mrf.mxu0
    %v778 = vadd.f32 %v131, %v777
    %v779 = vpop.f32.mrf.mxu0
    %v780 = vadd.f32 %v131, %v779
    %781 = vmatmul.bf16.gmra.mxu0 %v533
    %v782 = vpop.f32.mrf.mxu0
    %v783 = vadd.f32 %v131, %v782
    %v784 = vpop.f32.mrf.mxu0
    %v785 = vadd.f32 %v131, %v784
    %786 = vmatmul.bf16.gmra.mxu0 %v536
    %v787 = vpop.f32.mrf.mxu0
    %v788 = vadd.f32 %v131, %v787
    %v789 = vpop.f32.mrf.mxu0
    %v790 = vadd.f32 %v131, %v789
    %791 = vdwg.mxu0
    %v792 = vmax.f32 %v548, 0.0
    %v793 = vmax.f32 %v550, 0.0
    %v794 = vmax.f32 %v553, 0.0
    %v795 = vmax.f32 %v555, 0.0
    %v796 = vmax.f32 %v558, 0.0
    %v797 = vmax.f32 %v560, 0.0
    %v798 = vmax.f32 %v563, 0.0
    %v799 = vmax.f32 %v565, 0.0
    %v800 = vmax.f32 %v568, 0.0
    %v801 = vmax.f32 %v570, 0.0
    %v802 = vmax.f32 %v573, 0.0
    %v803 = vmax.f32 %v575, 0.0
    %v804 = vmax.f32 %v578, 0.0
    %v805 = vmax.f32 %v580, 0.0
    %v806 = vmax.f32 %v583, 0.0
    %v807 = vmax.f32 %v585, 0.0
    %v808 = vmax.f32 %v588, 0.0
    %v809 = vmax.f32 %v590, 0.0
    %v810 = vmax.f32 %v593, 0.0
    %v811 = vmax.f32 %v595, 0.0
    %v812 = vmax.f32 %v598, 0.0
    %v813 = vmax.f32 %v600, 0.0
    %v814 = vmax.f32 %v603, 0.0
    %v815 = vmax.f32 %v605, 0.0
    %v816 = vmax.f32 %v608, 0.0
    %v817 = vmax.f32 %v610, 0.0
    %v818 = vmax.f32 %v613, 0.0
    %v819 = vmax.f32 %v615, 0.0
    %v820 = vmax.f32 %v618, 0.0
    %v821 = vmax.f32 %v620, 0.0
    %v822 = vmax.f32 %v623, 0.0
    %v823 = vmax.f32 %v625, 0.0
    %v824 = vmax.f32 %v628, 0.0
    %v825 = vmax.f32 %v630, 0.0
    %v826 = vmax.f32 %v633, 0.0
    %v827 = vmax.f32 %v635, 0.0
    %v828 = vmax.f32 %v638, 0.0
    %v829 = vmax.f32 %v640, 0.0
    %v830 = vmax.f32 %v643, 0.0
    %v831 = vmax.f32 %v645, 0.0
    %v832 = vmax.f32 %v648, 0.0
    %v833 = vmax.f32 %v650, 0.0
    %v834 = vmax.f32 %v653, 0.0
    %v835 = vmax.f32 %v655, 0.0
    %v836 = vmax.f32 %v658, 0.0
    %v837 = vmax.f32 %v660, 0.0
    %v838 = vmax.f32 %v663, 0.0
    %v839 = vmax.f32 %v665, 0.0
    %v840 = vmax.f32 %v668, 0.0
    %v841 = vmax.f32 %v670, 0.0
    %v842 = vmax.f32 %v673, 0.0
    %v843 = vmax.f32 %v675, 0.0
    %v844 = vmax.f32 %v678, 0.0
    %v845 = vmax.f32 %v680, 0.0
    %v846 = vmax.f32 %v683, 0.0
    %v847 = vmax.f32 %v685, 0.0
    %v848 = vmax.f32 %v688, 0.0
    %v849 = vmax.f32 %v690, 0.0
    %v850 = vmax.f32 %v693, 0.0
    %v851 = vmax.f32 %v695, 0.0
    %v852 = vmax.f32 %v698, 0.0
    %v853 = vmax.f32 %v700, 0.0
    %v854 = vmax.f32 %v703, 0.0
    %v855 = vmax.f32 %v705, 0.0
    %v856 = vmax.f32 %v708, 0.0
    %v857 = vmax.f32 %v710, 0.0
    %v858 = vmax.f32 %v713, 0.0
    %v859 = vmax.f32 %v715, 0.0
    %v860 = vmax.f32 %v718, 0.0
    %v861 = vmax.f32 %v720, 0.0
    %v862 = vmax.f32 %v723, 0.0
    %v863 = vmax.f32 %v725, 0.0
    %v864 = vmax.f32 %v728, 0.0
    %v865 = vmax.f32 %v730, 0.0
    %v866 = vmax.f32 %v733, 0.0
    %v867 = vmax.f32 %v735, 0.0
    %v868 = vmax.f32 %v738, 0.0
    %v869 = vmax.f32 %v740, 0.0
    %v870 = vmax.f32 %v743, 0.0
    %v871 = vmax.f32 %v745, 0.0
    %v872 = vmax.f32 %v748, 0.0
    %v873 = vmax.f32 %v750, 0.0
    %v874 = vmax.f32 %v753, 0.0
    %v875 = vmax.f32 %v755, 0.0
    %v876 = vmax.f32 %v758, 0.0
    %v877 = vmax.f32 %v760, 0.0
    %v878 = vmax.f32 %v763, 0.0
    %v879 = vmax.f32 %v765, 0.0
    %v880 = vmax.f32 %v768, 0.0
    %v881 = vmax.f32 %v770, 0.0
    %v882 = vmax.f32 %v773, 0.0
    %v883 = vmax.f32 %v775, 0.0
    %v884 = vmax.f32 %v778, 0.0
    %v885 = vmax.f32 %v780, 0.0
    %v886 = vmax.f32 %v783, 0.0
    %v887 = vmax.f32 %v785, 0.0
    %v888 = vmax.f32 %v788, 0.0
    %v889 = vmax.f32 %v790, 0.0
    %890 = vst.msk [vmem:[#allocation2] sm:$0xff] %vm390, %v792
    %891 = vst.msk [vmem:[#allocation2 + $0x8] sm:$0xff] %vm390, %v793
    %892 = vst.msk [vmem:[#allocation2 + $0x10] sm:$0xff] %vm390, %v794
    %893 = vst.msk [vmem:[#allocation2 + $0x18] sm:$0xff] %vm390, %v795
    %894 = vst.msk [vmem:[#allocation2 + $0x20] sm:$0xff] %vm390, %v796
    %895 = vst.msk [vmem:[#allocation2 + $0x28] sm:$0xff] %vm390, %v797
    %896 = vst.msk [vmem:[#allocation2 + $0x30] sm:$0xff] %vm390, %v798
    %897 = vst.msk [vmem:[#allocation2 + $0x38] sm:$0xff] %vm390, %v799
    %898 = vst.msk [vmem:[#allocation2 + $0x40] sm:$0xff] %vm390, %v800
    %899 = vst.msk [vmem:[#allocation2 + $0x48] sm:$0xff] %vm390, %v801
    %900 = vst.msk [vmem:[#allocation2 + $0x50] sm:$0xff] %vm390, %v802
    %901 = vst.msk [vmem:[#allocation2 + $0x58] sm:$0xff] %vm390, %v803
    %902 = vst.msk [vmem:[#allocation2 + $0x60] sm:$0xff] %vm390, %v804
    %903 = vst.msk [vmem:[#allocation2 + $0x68] sm:$0xff] %vm390, %v805
    %904 = vst.msk [vmem:[#allocation2 + $0x70] sm:$0xff] %vm390, %v806
    %905 = vst.msk [vmem:[#allocation2 + $0x78] sm:$0xff] %vm390, %v807
    %906 = vst.msk [vmem:[#allocation2 + $0x80] sm:$0xff] %vm390, %v808
    %907 = vst.msk [vmem:[#allocation2 + $0x88] sm:$0xff] %vm390, %v809
    %908 = vst.msk [vmem:[#allocation2 + $0x90] sm:$0xff] %vm390, %v810
    %909 = vst.msk [vmem:[#allocation2 + $0x98] sm:$0xff] %vm390, %v811
    %910 = vst.msk [vmem:[#allocation2 + $0xa0] sm:$0xff] %vm390, %v812
    %911 = vst.msk [vmem:[#allocation2 + $0xa8] sm:$0xff] %vm390, %v813
    %912 = vst.msk [vmem:[#allocation2 + $0xb0] sm:$0xff] %vm390, %v814
    %913 = vst.msk [vmem:[#allocation2 + $0xb8] sm:$0xff] %vm390, %v815
    %914 = vst.msk [vmem:[#allocation2 + $0xc0] sm:$0xff] %vm390, %v816
    %915 = vst.msk [vmem:[#allocation2 + $0xc8] sm:$0xff] %vm390, %v817
    %916 = vst.msk [vmem:[#allocation2 + $0xd0] sm:$0xff] %vm390, %v818
    %917 = vst.msk [vmem:[#allocation2 + $0xd8] sm:$0xff] %vm390, %v819
    %918 = vst.msk [vmem:[#allocation2 + $0xe0] sm:$0xff] %vm390, %v820
    %919 = vst.msk [vmem:[#allocation2 + $0xe8] sm:$0xff] %vm390, %v821
    %920 = vst.msk [vmem:[#allocation2 + $0xf0] sm:$0xff] %vm390, %v822
    %921 = vst.msk [vmem:[#allocation2 + $0xf8] sm:$0xff] %vm390, %v823
    %922 = vst.msk [vmem:[#allocation2 + $0x100] sm:$0xff] %vm390, %v824
    %923 = vst.msk [vmem:[#allocation2 + $0x108] sm:$0xff] %vm390, %v825
    %924 = vst.msk [vmem:[#allocation2 + $0x110] sm:$0xff] %vm390, %v826
    %925 = vst.msk [vmem:[#allocation2 + $0x118] sm:$0xff] %vm390, %v827
    %926 = vst.msk [vmem:[#allocation2 + $0x120] sm:$0xff] %vm390, %v828
    %927 = vst.msk [vmem:[#allocation2 + $0x128] sm:$0xff] %vm390, %v829
    %928 = vst.msk [vmem:[#allocation2 + $0x130] sm:$0xff] %vm390, %v830
    %929 = vst.msk [vmem:[#allocation2 + $0x138] sm:$0xff] %vm390, %v831
    %930 = vst.msk [vmem:[#allocation2 + $0x140] sm:$0xff] %vm390, %v832
    %931 = vst.msk [vmem:[#allocation2 + $0x148] sm:$0xff] %vm390, %v833
    %932 = vst.msk [vmem:[#allocation2 + $0x150] sm:$0xff] %vm390, %v834
    %933 = vst.msk [vmem:[#allocation2 + $0x158] sm:$0xff] %vm390, %v835
    %934 = vst.msk [vmem:[#allocation2 + $0x160] sm:$0xff] %vm390, %v836
    %935 = vst.msk [vmem:[#allocation2 + $0x168] sm:$0xff] %vm390, %v837
    %936 = vst.msk [vmem:[#allocation2 + $0x170] sm:$0xff] %vm390, %v838
    %937 = vst.msk [vmem:[#allocation2 + $0x178] sm:$0xff] %vm390, %v839
    %938 = vst.msk [vmem:[#allocation2 + $0x180] sm:$0xff] %vm390, %v840
    %939 = vst.msk [vmem:[#allocation2 + $0x188] sm:$0xff] %vm390, %v841
    %940 = vst.msk [vmem:[#allocation2 + $0x190] sm:$0xff] %vm390, %v842
    %941 = vst.msk [vmem:[#allocation2 + $0x198] sm:$0xff] %vm390, %v843
    %942 = vst.msk [vmem:[#allocation2 + $0x1a0] sm:$0xff] %vm390, %v844
    %943 = vst.msk [vmem:[#allocation2 + $0x1a8] sm:$0xff] %vm390, %v845
    %944 = vst.msk [vmem:[#allocation2 + $0x1b0] sm:$0xff] %vm390, %v846
    %945 = vst.msk [vmem:[#allocation2 + $0x1b8] sm:$0xff] %vm390, %v847
    %946 = vst.msk [vmem:[#allocation2 + $0x1c0] sm:$0xff] %vm390, %v848
    %947 = vst.msk [vmem:[#allocation2 + $0x1c8] sm:$0xff] %vm390, %v849
    %948 = vst.msk [vmem:[#allocation2 + $0x1d0] sm:$0xff] %vm390, %v850
    %949 = vst.msk [vmem:[#allocation2 + $0x1d8] sm:$0xff] %vm390, %v851
    %950 = vst.msk [vmem:[#allocation2 + $0x1e0] sm:$0xff] %vm390, %v852
    %951 = vst.msk [vmem:[#allocation2 + $0x1e8] sm:$0xff] %vm390, %v853
    %952 = vst.msk [vmem:[#allocation2 + $0x1f0] sm:$0xff] %vm390, %v854
    %953 = vst.msk [vmem:[#allocation2 + $0x1f8] sm:$0xff] %vm390, %v855
    %954 = vst.msk [vmem:[#allocation2 + $0x200] sm:$0xff] %vm390, %v856
    %955 = vst.msk [vmem:[#allocation2 + $0x208] sm:$0xff] %vm390, %v857
    %956 = vst.msk [vmem:[#allocation2 + $0x210] sm:$0xff] %vm390, %v858
    %957 = vst.msk [vmem:[#allocation2 + $0x218] sm:$0xff] %vm390, %v859
    %958 = vst.msk [vmem:[#allocation2 + $0x220] sm:$0xff] %vm390, %v860
    %959 = vst.msk [vmem:[#allocation2 + $0x228] sm:$0xff] %vm390, %v861
    %960 = vst.msk [vmem:[#allocation2 + $0x230] sm:$0xff] %vm390, %v862
    %961 = vst.msk [vmem:[#allocation2 + $0x238] sm:$0xff] %vm390, %v863
    %962 = vst.msk [vmem:[#allocation2 + $0x240] sm:$0xff] %vm390, %v864
    %963 = vst.msk [vmem:[#allocation2 + $0x248] sm:$0xff] %vm390, %v865
    %964 = vst.msk [vmem:[#allocation2 + $0x250] sm:$0xff] %vm390, %v866
    %965 = vst.msk [vmem:[#allocation2 + $0x258] sm:$0xff] %vm390, %v867
    %966 = vst.msk [vmem:[#allocation2 + $0x260] sm:$0xff] %vm390, %v868
    %967 = vst.msk [vmem:[#allocation2 + $0x268] sm:$0xff] %vm390, %v869
    %968 = vst.msk [vmem:[#allocation2 + $0x270] sm:$0xff] %vm390, %v870
    %969 = vst.msk [vmem:[#allocation2 + $0x278] sm:$0xff] %vm390, %v871
    %970 = vst.msk [vmem:[#allocation2 + $0x280] sm:$0xff] %vm390, %v872
    %971 = vst.msk [vmem:[#allocation2 + $0x288] sm:$0xff] %vm390, %v873
    %972 = vst.msk [vmem:[#allocation2 + $0x290] sm:$0xff] %vm390, %v874
    %973 = vst.msk [vmem:[#allocation2 + $0x298] sm:$0xff] %vm390, %v875
    %974 = vst.msk [vmem:[#allocation2 + $0x2a0] sm:$0xff] %vm390, %v876
    %975 = vst.msk [vmem:[#allocation2 + $0x2a8] sm:$0xff] %vm390, %v877
    %976 = vst.msk [vmem:[#allocation2 + $0x2b0] sm:$0xff] %vm390, %v878
    %977 = vst.msk [vmem:[#allocation2 + $0x2b8] sm:$0xff] %vm390, %v879
    %978 = vst.msk [vmem:[#allocation2 + $0x2c0] sm:$0xff] %vm390, %v880
    %979 = vst.msk [vmem:[#allocation2 + $0x2c8] sm:$0xff] %vm390, %v881
    %980 = vst.msk [vmem:[#allocation2 + $0x2d0] sm:$0xff] %vm390, %v882
    %981 = vst.msk [vmem:[#allocation2 + $0x2d8] sm:$0xff] %vm390, %v883
    %982 = vst.msk [vmem:[#allocation2 + $0x2e0] sm:$0xff] %vm390, %v884
    %983 = vst.msk [vmem:[#allocation2 + $0x2e8] sm:$0xff] %vm390, %v885
    %984 = vst.msk [vmem:[#allocation2 + $0x2f0] sm:$0xff] %vm390, %v886
    %985 = vst.msk [vmem:[#allocation2 + $0x2f8] sm:$0xff] %vm390, %v887
    %986 = vst.msk [vmem:[#allocation2 + $0x300] sm:$0xff] %vm390, %v888
    %987 = vst.msk [vmem:[#allocation2 + $0x308] sm:$0xff] %vm390, %v889
    %v988 = vld [vmem:[#allocation2] sm:$0xff]
    %v989 = vld [vmem:[#allocation2 + $0x8] sm:$0xff]
    %v990 = vld [vmem:[#allocation2 + $0x10] sm:$0xff]
    %v991 = vld [vmem:[#allocation2 + $0x18] sm:$0xff]
    %v992 = vld [vmem:[#allocation2 + $0x20] sm:$0xff]
    %v993 = vld [vmem:[#allocation2 + $0x28] sm:$0xff]
    %v994 = vld [vmem:[#allocation2 + $0x30] sm:$0xff]
    %v995 = vld [vmem:[#allocation2 + $0x38] sm:$0xff]
    %v996 = vld [vmem:[#allocation2 + $0x40] sm:$0xff]
    %v997 = vld [vmem:[#allocation2 + $0x48] sm:$0xff]
    %v998 = vld [vmem:[#allocation2 + $0x50] sm:$0xff]
    %v999 = vld [vmem:[#allocation2 + $0x58] sm:$0xff]
    %v1000 = vld [vmem:[#allocation2 + $0x60] sm:$0xff]
    %v1001 = vld [vmem:[#allocation2 + $0x68] sm:$0xff]
    %v1002 = vld [vmem:[#allocation2 + $0x70] sm:$0xff]
    %v1003 = vld [vmem:[#allocation2 + $0x78] sm:$0xff]
    %v1004 = vld [vmem:[#allocation2 + $0x80] sm:$0xff]
    %v1005 = vld [vmem:[#allocation2 + $0x88] sm:$0xff]
    %v1006 = vld [vmem:[#allocation2 + $0x90] sm:$0xff]
    %v1007 = vld [vmem:[#allocation2 + $0x98] sm:$0xff]
    %v1008 = vld [vmem:[#allocation2 + $0xa0] sm:$0xff]
    %v1009 = vld [vmem:[#allocation2 + $0xa8] sm:$0xff]
    %v1010 = vld [vmem:[#allocation2 + $0xb0] sm:$0xff]
    %v1011 = vld [vmem:[#allocation2 + $0xb8] sm:$0xff]
    %v1012 = vld [vmem:[#allocation2 + $0xc0] sm:$0xff]
    %v1013 = vld [vmem:[#allocation2 + $0xc8] sm:$0xff]
    %v1014 = vld [vmem:[#allocation2 + $0xd0] sm:$0xff]
    %v1015 = vld [vmem:[#allocation2 + $0xd8] sm:$0xff]
    %v1016 = vld [vmem:[#allocation2 + $0xe0] sm:$0xff]
    %v1017 = vld [vmem:[#allocation2 + $0xe8] sm:$0xff]
    %v1018 = vld [vmem:[#allocation2 + $0xf0] sm:$0xff]
    %v1019 = vld [vmem:[#allocation2 + $0xf8] sm:$0xff]
    %v1020 = vld [vmem:[#allocation2 + $0x100] sm:$0xff]
    %v1021 = vld [vmem:[#allocation2 + $0x108] sm:$0xff]
    %v1022 = vld [vmem:[#allocation2 + $0x110] sm:$0xff]
    %v1023 = vld [vmem:[#allocation2 + $0x118] sm:$0xff]
    %v1024 = vld [vmem:[#allocation2 + $0x120] sm:$0xff]
    %v1025 = vld [vmem:[#allocation2 + $0x128] sm:$0xff]
    %v1026 = vld [vmem:[#allocation2 + $0x130] sm:$0xff]
    %v1027 = vld [vmem:[#allocation2 + $0x138] sm:$0xff]
    %v1028 = vld [vmem:[#allocation2 + $0x140] sm:$0xff]
    %v1029 = vld [vmem:[#allocation2 + $0x148] sm:$0xff]
    %v1030 = vld [vmem:[#allocation2 + $0x150] sm:$0xff]
    %v1031 = vld [vmem:[#allocation2 + $0x158] sm:$0xff]
    %v1032 = vld [vmem:[#allocation2 + $0x160] sm:$0xff]
    %v1033 = vld [vmem:[#allocation2 + $0x168] sm:$0xff]
    %v1034 = vld [vmem:[#allocation2 + $0x170] sm:$0xff]
    %v1035 = vld [vmem:[#allocation2 + $0x178] sm:$0xff]
    %v1036 = vld [vmem:[#allocation2 + $0x180] sm:$0xff]
    %v1037 = vld [vmem:[#allocation2 + $0x188] sm:$0xff]
    %v1038 = vld [vmem:[#allocation2 + $0x190] sm:$0xff]
    %v1039 = vld [vmem:[#allocation2 + $0x198] sm:$0xff]
    %v1040 = vld [vmem:[#allocation2 + $0x1a0] sm:$0xff]
    %v1041 = vld [vmem:[#allocation2 + $0x1a8] sm:$0xff]
    %v1042 = vld [vmem:[#allocation2 + $0x1b0] sm:$0xff]
    %v1043 = vld [vmem:[#allocation2 + $0x1b8] sm:$0xff]
    %v1044 = vld [vmem:[#allocation2 + $0x1c0] sm:$0xff]
    %v1045 = vld [vmem:[#allocation2 + $0x1c8] sm:$0xff]
    %v1046 = vld [vmem:[#allocation2 + $0x1d0] sm:$0xff]
    %v1047 = vld [vmem:[#allocation2 + $0x1d8] sm:$0xff]
    %v1048 = vld [vmem:[#allocation2 + $0x1e0] sm:$0xff]
    %v1049 = vld [vmem:[#allocation2 + $0x1e8] sm:$0xff]
    %v1050 = vld [vmem:[#allocation2 + $0x1f0] sm:$0xff]
    %v1051 = vld [vmem:[#allocation2 + $0x1f8] sm:$0xff]
    %v1052 = vld [vmem:[#allocation2 + $0x200] sm:$0xff]
    %v1053 = vld [vmem:[#allocation2 + $0x208] sm:$0xff]
    %v1054 = vld [vmem:[#allocation2 + $0x210] sm:$0xff]
    %v1055 = vld [vmem:[#allocation2 + $0x218] sm:$0xff]
    %v1056 = vld [vmem:[#allocation2 + $0x220] sm:$0xff]
    %v1057 = vld [vmem:[#allocation2 + $0x228] sm:$0xff]
    %v1058 = vld [vmem:[#allocation2 + $0x230] sm:$0xff]
    %v1059 = vld [vmem:[#allocation2 + $0x238] sm:$0xff]
    %v1060 = vld [vmem:[#allocation2 + $0x240] sm:$0xff]
    %v1061 = vld [vmem:[#allocation2 + $0x248] sm:$0xff]
    %v1062 = vld [vmem:[#allocation2 + $0x250] sm:$0xff]
    %v1063 = vld [vmem:[#allocation2 + $0x258] sm:$0xff]
    %v1064 = vld [vmem:[#allocation2 + $0x260] sm:$0xff]
    %v1065 = vld [vmem:[#allocation2 + $0x268] sm:$0xff]
    %v1066 = vld [vmem:[#allocation2 + $0x270] sm:$0xff]
    %v1067 = vld [vmem:[#allocation2 + $0x278] sm:$0xff]
    %v1068 = vld [vmem:[#allocation2 + $0x280] sm:$0xff]
    %v1069 = vld [vmem:[#allocation2 + $0x288] sm:$0xff]
    %v1070 = vld [vmem:[#allocation2 + $0x290] sm:$0xff]
    %v1071 = vld [vmem:[#allocation2 + $0x298] sm:$0xff]
    %v1072 = vld [vmem:[#allocation2 + $0x2a0] sm:$0xff]
    %v1073 = vld [vmem:[#allocation2 + $0x2a8] sm:$0xff]
    %v1074 = vld [vmem:[#allocation2 + $0x2b0] sm:$0xff]
    %v1075 = vld [vmem:[#allocation2 + $0x2b8] sm:$0xff]
    %v1076 = vld [vmem:[#allocation2 + $0x2c0] sm:$0xff]
    %v1077 = vld [vmem:[#allocation2 + $0x2c8] sm:$0xff]
    %v1078 = vld [vmem:[#allocation2 + $0x2d0] sm:$0xff]
    %v1079 = vld [vmem:[#allocation2 + $0x2d8] sm:$0xff]
    %v1080 = vld [vmem:[#allocation2 + $0x2e0] sm:$0xff]
    %v1081 = vld [vmem:[#allocation2 + $0x2e8] sm:$0xff]
    %v1082 = vld [vmem:[#allocation2 + $0x2f0] sm:$0x7]
    %v1083 = vld [vmem:[#allocation2 + $0x1] sm:$0xff]
    %v1084 = vld [vmem:[#allocation2 + $0x9] sm:$0xff]
    %v1085 = vld [vmem:[#allocation2 + $0x11] sm:$0xff]
    %v1086 = vld [vmem:[#allocation2 + $0x19] sm:$0xff]
    %v1087 = vld [vmem:[#allocation2 + $0x21] sm:$0xff]
    %v1088 = vld [vmem:[#allocation2 + $0x29] sm:$0xff]
    %v1089 = vld [vmem:[#allocation2 + $0x31] sm:$0xff]
    %v1090 = vld [vmem:[#allocation2 + $0x39] sm:$0xff]
    %v1091 = vld [vmem:[#allocation2 + $0x41] sm:$0xff]
    %v1092 = vld [vmem:[#allocation2 + $0x49] sm:$0xff]
    %v1093 = vld [vmem:[#allocation2 + $0x51] sm:$0xff]
    %v1094 = vld [vmem:[#allocation2 + $0x59] sm:$0xff]
    %v1095 = vld [vmem:[#allocation2 + $0x61] sm:$0xff]
    %v1096 = vld [vmem:[#allocation2 + $0x69] sm:$0xff]
    %v1097 = vld [vmem:[#allocation2 + $0x71] sm:$0xff]
    %v1098 = vld [vmem:[#allocation2 + $0x79] sm:$0xff]
    %v1099 = vld [vmem:[#allocation2 + $0x81] sm:$0xff]
    %v1100 = vld [vmem:[#allocation2 + $0x89] sm:$0xff]
    %v1101 = vld [vmem:[#allocation2 + $0x91] sm:$0xff]
    %v1102 = vld [vmem:[#allocation2 + $0x99] sm:$0xff]
    %v1103 = vld [vmem:[#allocation2 + $0xa1] sm:$0xff]
    %v1104 = vld [vmem:[#allocation2 + $0xa9] sm:$0xff]
    %v1105 = vld [vmem:[#allocation2 + $0xb1] sm:$0xff]
    %v1106 = vld [vmem:[#allocation2 + $0xb9] sm:$0xff]
    %v1107 = vld [vmem:[#allocation2 + $0xc1] sm:$0xff]
    %v1108 = vld [vmem:[#allocation2 + $0xc9] sm:$0xff]
    %v1109 = vld [vmem:[#allocation2 + $0xd1] sm:$0xff]
    %v1110 = vld [vmem:[#allocation2 + $0xd9] sm:$0xff]
    %v1111 = vld [vmem:[#allocation2 + $0xe1] sm:$0xff]
    %v1112 = vld [vmem:[#allocation2 + $0xe9] sm:$0xff]
    %v1113 = vld [vmem:[#allocation2 + $0xf1] sm:$0xff]
    %v1114 = vld [vmem:[#allocation2 + $0xf9] sm:$0xff]
    %v1115 = vld [vmem:[#allocation2 + $0x101] sm:$0xff]
    %v1116 = vld [vmem:[#allocation2 + $0x109] sm:$0xff]
    %v1117 = vld [vmem:[#allocation2 + $0x111] sm:$0xff]
    %v1118 = vld [vmem:[#allocation2 + $0x119] sm:$0xff]
    %v1119 = vld [vmem:[#allocation2 + $0x121] sm:$0xff]
    %v1120 = vld [vmem:[#allocation2 + $0x129] sm:$0xff]
    %v1121 = vld [vmem:[#allocation2 + $0x131] sm:$0xff]
    %v1122 = vld [vmem:[#allocation2 + $0x139] sm:$0xff]
    %v1123 = vld [vmem:[#allocation2 + $0x141] sm:$0xff]
    %v1124 = vld [vmem:[#allocation2 + $0x149] sm:$0xff]
    %v1125 = vld [vmem:[#allocation2 + $0x151] sm:$0xff]
    %v1126 = vld [vmem:[#allocation2 + $0x159] sm:$0xff]
    %v1127 = vld [vmem:[#allocation2 + $0x161] sm:$0xff]
    %v1128 = vld [vmem:[#allocation2 + $0x169] sm:$0xff]
    %v1129 = vld [vmem:[#allocation2 + $0x171] sm:$0xff]
    %v1130 = vld [vmem:[#allocation2 + $0x179] sm:$0xff]
    %v1131 = vld [vmem:[#allocation2 + $0x181] sm:$0xff]
    %v1132 = vld [vmem:[#allocation2 + $0x189] sm:$0xff]
    %v1133 = vld [vmem:[#allocation2 + $0x191] sm:$0xff]
    %v1134 = vld [vmem:[#allocation2 + $0x199] sm:$0xff]
    %v1135 = vld [vmem:[#allocation2 + $0x1a1] sm:$0xff]
    %v1136 = vld [vmem:[#allocation2 + $0x1a9] sm:$0xff]
    %v1137 = vld [vmem:[#allocation2 + $0x1b1] sm:$0xff]
    %v1138 = vld [vmem:[#allocation2 + $0x1b9] sm:$0xff]
    %v1139 = vld [vmem:[#allocation2 + $0x1c1] sm:$0xff]
    %v1140 = vld [vmem:[#allocation2 + $0x1c9] sm:$0xff]
    %v1141 = vld [vmem:[#allocation2 + $0x1d1] sm:$0xff]
    %v1142 = vld [vmem:[#allocation2 + $0x1d9] sm:$0xff]
    %v1143 = vld [vmem:[#allocation2 + $0x1e1] sm:$0xff]
    %v1144 = vld [vmem:[#allocation2 + $0x1e9] sm:$0xff]
    %v1145 = vld [vmem:[#allocation2 + $0x1f1] sm:$0xff]
    %v1146 = vld [vmem:[#allocation2 + $0x1f9] sm:$0xff]
    %v1147 = vld [vmem:[#allocation2 + $0x201] sm:$0xff]
    %v1148 = vld [vmem:[#allocation2 + $0x209] sm:$0xff]
    %v1149 = vld [vmem:[#allocation2 + $0x211] sm:$0xff]
    %v1150 = vld [vmem:[#allocation2 + $0x219] sm:$0xff]
    %v1151 = vld [vmem:[#allocation2 + $0x221] sm:$0xff]
    %v1152 = vld [vmem:[#allocation2 + $0x229] sm:$0xff]
    %v1153 = vld [vmem:[#allocation2 + $0x231] sm:$0xff]
    %v1154 = vld [vmem:[#allocation2 + $0x239] sm:$0xff]
    %v1155 = vld [vmem:[#allocation2 + $0x241] sm:$0xff]
    %v1156 = vld [vmem:[#allocation2 + $0x249] sm:$0xff]
    %v1157 = vld [vmem:[#allocation2 + $0x251] sm:$0xff]
    %v1158 = vld [vmem:[#allocation2 + $0x259] sm:$0xff]
    %v1159 = vld [vmem:[#allocation2 + $0x261] sm:$0xff]
    %v1160 = vld [vmem:[#allocation2 + $0x269] sm:$0xff]
    %v1161 = vld [vmem:[#allocation2 + $0x271] sm:$0xff]
    %v1162 = vld [vmem:[#allocation2 + $0x279] sm:$0xff]
    %v1163 = vld [vmem:[#allocation2 + $0x281] sm:$0xff]
    %v1164 = vld [vmem:[#allocation2 + $0x289] sm:$0xff]
    %v1165 = vld [vmem:[#allocation2 + $0x291] sm:$0xff]
    %v1166 = vld [vmem:[#allocation2 + $0x299] sm:$0xff]
    %v1167 = vld [vmem:[#allocation2 + $0x2a1] sm:$0xff]
    %v1168 = vld [vmem:[#allocation2 + $0x2a9] sm:$0xff]
    %v1169 = vld [vmem:[#allocation2 + $0x2b1] sm:$0xff]
    %v1170 = vld [vmem:[#allocation2 + $0x2b9] sm:$0xff]
    %v1171 = vld [vmem:[#allocation2 + $0x2c1] sm:$0xff]
    %v1172 = vld [vmem:[#allocation2 + $0x2c9] sm:$0xff]
    %v1173 = vld [vmem:[#allocation2 + $0x2d1] sm:$0xff]
    %v1174 = vld [vmem:[#allocation2 + $0x2d9] sm:$0xff]
    %v1175 = vld [vmem:[#allocation2 + $0x2e1] sm:$0xff]
    %v1176 = vld [vmem:[#allocation2 + $0x2e9] sm:$0xff]
    %v1177 = vld [vmem:[#allocation2 + $0x2f1] sm:$0x7]
    %v1178 = vld [vmem:[#allocation2 + $0x1c] sm:$0xff]
    %v1179 = vld [vmem:[#allocation2 + $0x24] sm:$0xff]
    %v1180 = vld [vmem:[#allocation2 + $0x2c] sm:$0xff]
    %v1181 = vld [vmem:[#allocation2 + $0x34] sm:$0xff]
    %v1182 = vld [vmem:[#allocation2 + $0x3c] sm:$0xff]
    %v1183 = vld [vmem:[#allocation2 + $0x44] sm:$0xff]
    %v1184 = vld [vmem:[#allocation2 + $0x4c] sm:$0xff]
    %v1185 = vld [vmem:[#allocation2 + $0x54] sm:$0xff]
    %v1186 = vld [vmem:[#allocation2 + $0x5c] sm:$0xff]
    %v1187 = vld [vmem:[#allocation2 + $0x64] sm:$0xff]
    %v1188 = vld [vmem:[#allocation2 + $0x6c] sm:$0xff]
    %v1189 = vld [vmem:[#allocation2 + $0x74] sm:$0xff]
    %v1190 = vld [vmem:[#allocation2 + $0x7c] sm:$0xff]
    %v1191 = vld [vmem:[#allocation2 + $0x84] sm:$0xff]
    %v1192 = vld [vmem:[#allocation2 + $0x8c] sm:$0xff]
    %v1193 = vld [vmem:[#allocation2 + $0x94] sm:$0xff]
    %v1194 = vld [vmem:[#allocation2 + $0x9c] sm:$0xff]
    %v1195 = vld [vmem:[#allocation2 + $0xa4] sm:$0xff]
    %v1196 = vld [vmem:[#allocation2 + $0xac] sm:$0xff]
    %v1197 = vld [vmem:[#allocation2 + $0xb4] sm:$0xff]
    %v1198 = vld [vmem:[#allocation2 + $0xbc] sm:$0xff]
    %v1199 = vld [vmem:[#allocation2 + $0xc4] sm:$0xff]
    %v1200 = vld [vmem:[#allocation2 + $0xcc] sm:$0xff]
    %v1201 = vld [vmem:[#allocation2 + $0xd4] sm:$0xff]
    %v1202 = vld [vmem:[#allocation2 + $0xdc] sm:$0xff]
    %v1203 = vld [vmem:[#allocation2 + $0xe4] sm:$0xff]
    %v1204 = vld [vmem:[#allocation2 + $0xec] sm:$0xff]
    %v1205 = vld [vmem:[#allocation2 + $0xf4] sm:$0xff]
    %v1206 = vld [vmem:[#allocation2 + $0xfc] sm:$0xff]
    %v1207 = vld [vmem:[#allocation2 + $0x104] sm:$0xff]
    %v1208 = vld [vmem:[#allocation2 + $0x10c] sm:$0xff]
    %v1209 = vld [vmem:[#allocation2 + $0x114] sm:$0xff]
    %v1210 = vld [vmem:[#allocation2 + $0x11c] sm:$0xff]
    %v1211 = vld [vmem:[#allocation2 + $0x124] sm:$0xff]
    %v1212 = vld [vmem:[#allocation2 + $0x12c] sm:$0xff]
    %v1213 = vld [vmem:[#allocation2 + $0x134] sm:$0xff]
    %v1214 = vld [vmem:[#allocation2 + $0x13c] sm:$0xff]
    %v1215 = vld [vmem:[#allocation2 + $0x144] sm:$0xff]
    %v1216 = vld [vmem:[#allocation2 + $0x14c] sm:$0xff]
    %v1217 = vld [vmem:[#allocation2 + $0x154] sm:$0xff]
    %v1218 = vld [vmem:[#allocation2 + $0x15c] sm:$0xff]
    %v1219 = vld [vmem:[#allocation2 + $0x164] sm:$0xff]
    %v1220 = vld [vmem:[#allocation2 + $0x16c] sm:$0xff]
    %v1221 = vld [vmem:[#allocation2 + $0x174] sm:$0xff]
    %v1222 = vld [vmem:[#allocation2 + $0x17c] sm:$0xff]
    %v1223 = vld [vmem:[#allocation2 + $0x184] sm:$0xff]
    %v1224 = vld [vmem:[#allocation2 + $0x18c] sm:$0xff]
    %v1225 = vld [vmem:[#allocation2 + $0x194] sm:$0xff]
    %v1226 = vld [vmem:[#allocation2 + $0x19c] sm:$0xff]
    %v1227 = vld [vmem:[#allocation2 + $0x1a4] sm:$0xff]
    %v1228 = vld [vmem:[#allocation2 + $0x1ac] sm:$0xff]
    %v1229 = vld [vmem:[#allocation2 + $0x1b4] sm:$0xff]
    %v1230 = vld [vmem:[#allocation2 + $0x1bc] sm:$0xff]
    %v1231 = vld [vmem:[#allocation2 + $0x1c4] sm:$0xff]
    %v1232 = vld [vmem:[#allocation2 + $0x1cc] sm:$0xff]
    %v1233 = vld [vmem:[#allocation2 + $0x1d4] sm:$0xff]
    %v1234 = vld [vmem:[#allocation2 + $0x1dc] sm:$0xff]
    %v1235 = vld [vmem:[#allocation2 + $0x1e4] sm:$0xff]
    %v1236 = vld [vmem:[#allocation2 + $0x1ec] sm:$0xff]
    %v1237 = vld [vmem:[#allocation2 + $0x1f4] sm:$0xff]
    %v1238 = vld [vmem:[#allocation2 + $0x1fc] sm:$0xff]
    %v1239 = vld [vmem:[#allocation2 + $0x204] sm:$0xff]
    %v1240 = vld [vmem:[#allocation2 + $0x20c] sm:$0xff]
    %v1241 = vld [vmem:[#allocation2 + $0x214] sm:$0xff]
    %v1242 = vld [vmem:[#allocation2 + $0x21c] sm:$0xff]
    %v1243 = vld [vmem:[#allocation2 + $0x224] sm:$0xff]
    %v1244 = vld [vmem:[#allocation2 + $0x22c] sm:$0xff]
    %v1245 = vld [vmem:[#allocation2 + $0x234] sm:$0xff]
    %v1246 = vld [vmem:[#allocation2 + $0x23c] sm:$0xff]
    %v1247 = vld [vmem:[#allocation2 + $0x244] sm:$0xff]
    %v1248 = vld [vmem:[#allocation2 + $0x24c] sm:$0xff]
    %v1249 = vld [vmem:[#allocation2 + $0x254] sm:$0xff]
    %v1250 = vld [vmem:[#allocation2 + $0x25c] sm:$0xff]
    %v1251 = vld [vmem:[#allocation2 + $0x264] sm:$0xff]
    %v1252 = vld [vmem:[#allocation2 + $0x26c] sm:$0xff]
    %v1253 = vld [vmem:[#allocation2 + $0x274] sm:$0xff]
    %v1254 = vld [vmem:[#allocation2 + $0x27c] sm:$0xff]
    %v1255 = vld [vmem:[#allocation2 + $0x284] sm:$0xff]
    %v1256 = vld [vmem:[#allocation2 + $0x28c] sm:$0xff]
    %v1257 = vld [vmem:[#allocation2 + $0x294] sm:$0xff]
    %v1258 = vld [vmem:[#allocation2 + $0x29c] sm:$0xff]
    %v1259 = vld [vmem:[#allocation2 + $0x2a4] sm:$0xff]
    %v1260 = vld [vmem:[#allocation2 + $0x2ac] sm:$0xff]
    %v1261 = vld [vmem:[#allocation2 + $0x2b4] sm:$0xff]
    %v1262 = vld [vmem:[#allocation2 + $0x2bc] sm:$0xff]
    %v1263 = vld [vmem:[#allocation2 + $0x2c4] sm:$0xff]
    %v1264 = vld [vmem:[#allocation2 + $0x2cc] sm:$0xff]
    %v1265 = vld [vmem:[#allocation2 + $0x2d4] sm:$0xff]
    %v1266 = vld [vmem:[#allocation2 + $0x2dc] sm:$0xff]
    %v1267 = vld [vmem:[#allocation2 + $0x2e4] sm:$0xff]
    %v1268 = vld [vmem:[#allocation2 + $0x2ec] sm:$0xff]
    %v1269 = vld [vmem:[#allocation2 + $0x2f4] sm:$0xff]
    %v1270 = vld [vmem:[#allocation2 + $0x2fc] sm:$0xff]
    %v1271 = vld [vmem:[#allocation2 + $0x304] sm:$0xff]
    %v1272 = vld [vmem:[#allocation2 + $0x30c] sm:$0x7]
    %v1273 = vld [vmem:[#allocation2 + $0x1d] sm:$0xff]
    %v1274 = vld [vmem:[#allocation2 + $0x25] sm:$0xff]
    %v1275 = vld [vmem:[#allocation2 + $0x2d] sm:$0xff]
    %v1276 = vld [vmem:[#allocation2 + $0x35] sm:$0xff]
    %v1277 = vld [vmem:[#allocation2 + $0x3d] sm:$0xff]
    %v1278 = vld [vmem:[#allocation2 + $0x45] sm:$0xff]
    %v1279 = vld [vmem:[#allocation2 + $0x4d] sm:$0xff]
    %v1280 = vld [vmem:[#allocation2 + $0x55] sm:$0xff]
    %v1281 = vld [vmem:[#allocation2 + $0x5d] sm:$0xff]
    %v1282 = vld [vmem:[#allocation2 + $0x65] sm:$0xff]
    %v1283 = vld [vmem:[#allocation2 + $0x6d] sm:$0xff]
    %v1284 = vld [vmem:[#allocation2 + $0x75] sm:$0xff]
    %v1285 = vld [vmem:[#allocation2 + $0x7d] sm:$0xff]
    %v1286 = vld [vmem:[#allocation2 + $0x85] sm:$0xff]
    %v1287 = vld [vmem:[#allocation2 + $0x8d] sm:$0xff]
    %v1288 = vld [vmem:[#allocation2 + $0x95] sm:$0xff]
    %v1289 = vld [vmem:[#allocation2 + $0x9d] sm:$0xff]
    %v1290 = vld [vmem:[#allocation2 + $0xa5] sm:$0xff]
    %v1291 = vld [vmem:[#allocation2 + $0xad] sm:$0xff]
    %v1292 = vld [vmem:[#allocation2 + $0xb5] sm:$0xff]
    %v1293 = vld [vmem:[#allocation2 + $0xbd] sm:$0xff]
    %v1294 = vld [vmem:[#allocation2 + $0xc5] sm:$0xff]
    %v1295 = vld [vmem:[#allocation2 + $0xcd] sm:$0xff]
    %v1296 = vld [vmem:[#allocation2 + $0xd5] sm:$0xff]
    %v1297 = vld [vmem:[#allocation2 + $0xdd] sm:$0xff]
    %v1298 = vld [vmem:[#allocation2 + $0xe5] sm:$0xff]
    %v1299 = vld [vmem:[#allocation2 + $0xed] sm:$0xff]
    %v1300 = vld [vmem:[#allocation2 + $0xf5] sm:$0xff]
    %v1301 = vld [vmem:[#allocation2 + $0xfd] sm:$0xff]
    %v1302 = vld [vmem:[#allocation2 + $0x105] sm:$0xff]
    %v1303 = vld [vmem:[#allocation2 + $0x10d] sm:$0xff]
    %v1304 = vld [vmem:[#allocation2 + $0x115] sm:$0xff]
    %v1305 = vld [vmem:[#allocation2 + $0x11d] sm:$0xff]
    %v1306 = vld [vmem:[#allocation2 + $0x125] sm:$0xff]
    %v1307 = vld [vmem:[#allocation2 + $0x12d] sm:$0xff]
    %v1308 = vld [vmem:[#allocation2 + $0x135] sm:$0xff]
    %v1309 = vld [vmem:[#allocation2 + $0x13d] sm:$0xff]
    %v1310 = vld [vmem:[#allocation2 + $0x145] sm:$0xff]
    %v1311 = vld [vmem:[#allocation2 + $0x14d] sm:$0xff]
    %v1312 = vld [vmem:[#allocation2 + $0x155] sm:$0xff]
    %v1313 = vld [vmem:[#allocation2 + $0x15d] sm:$0xff]
    %v1314 = vld [vmem:[#allocation2 + $0x165] sm:$0xff]
    %v1315 = vld [vmem:[#allocation2 + $0x16d] sm:$0xff]
    %v1316 = vld [vmem:[#allocation2 + $0x175] sm:$0xff]
    %v1317 = vld [vmem:[#allocation2 + $0x17d] sm:$0xff]
    %v1318 = vld [vmem:[#allocation2 + $0x185] sm:$0xff]
    %v1319 = vld [vmem:[#allocation2 + $0x18d] sm:$0xff]
    %v1320 = vld [vmem:[#allocation2 + $0x195] sm:$0xff]
    %v1321 = vld [vmem:[#allocation2 + $0x19d] sm:$0xff]
    %v1322 = vld [vmem:[#allocation2 + $0x1a5] sm:$0xff]
    %v1323 = vld [vmem:[#allocation2 + $0x1ad] sm:$0xff]
    %v1324 = vld [vmem:[#allocation2 + $0x1b5] sm:$0xff]
    %v1325 = vld [vmem:[#allocation2 + $0x1bd] sm:$0xff]
    %v1326 = vld [vmem:[#allocation2 + $0x1c5] sm:$0xff]
    %v1327 = vld [vmem:[#allocation2 + $0x1cd] sm:$0xff]
    %v1328 = vld [vmem:[#allocation2 + $0x1d5] sm:$0xff]
    %v1329 = vld [vmem:[#allocation2 + $0x1dd] sm:$0xff]
    %v1330 = vld [vmem:[#allocation2 + $0x1e5] sm:$0xff]
    %v1331 = vld [vmem:[#allocation2 + $0x1ed] sm:$0xff]
    %v1332 = vld [vmem:[#allocation2 + $0x1f5] sm:$0xff]
    %v1333 = vld [vmem:[#allocation2 + $0x1fd] sm:$0xff]
    %v1334 = vld [vmem:[#allocation2 + $0x205] sm:$0xff]
    %v1335 = vld [vmem:[#allocation2 + $0x20d] sm:$0xff]
    %v1336 = vld [vmem:[#allocation2 + $0x215] sm:$0xff]
    %v1337 = vld [vmem:[#allocation2 + $0x21d] sm:$0xff]
    %v1338 = vld [vmem:[#allocation2 + $0x225] sm:$0xff]
    %v1339 = vld [vmem:[#allocation2 + $0x22d] sm:$0xff]
    %v1340 = vld [vmem:[#allocation2 + $0x235] sm:$0xff]
    %v1341 = vld [vmem:[#allocation2 + $0x23d] sm:$0xff]
    %v1342 = vld [vmem:[#allocation2 + $0x245] sm:$0xff]
    %v1343 = vld [vmem:[#allocation2 + $0x24d] sm:$0xff]
    %v1344 = vld [vmem:[#allocation2 + $0x255] sm:$0xff]
    %v1345 = vld [vmem:[#allocation2 + $0x25d] sm:$0xff]
    %v1346 = vld [vmem:[#allocation2 + $0x265] sm:$0xff]
    %v1347 = vld [vmem:[#allocation2 + $0x26d] sm:$0xff]
    %v1348 = vld [vmem:[#allocation2 + $0x275] sm:$0xff]
    %v1349 = vld [vmem:[#allocation2 + $0x27d] sm:$0xff]
    %v1350 = vld [vmem:[#allocation2 + $0x285] sm:$0xff]
    %v1351 = vld [vmem:[#allocation2 + $0x28d] sm:$0xff]
    %v1352 = vld [vmem:[#allocation2 + $0x295] sm:$0xff]
    %v1353 = vld [vmem:[#allocation2 + $0x29d] sm:$0xff]
    %v1354 = vld [vmem:[#allocation2 + $0x2a5] sm:$0xff]
    %v1355 = vld [vmem:[#allocation2 + $0x2ad] sm:$0xff]
    %v1356 = vld [vmem:[#allocation2 + $0x2b5] sm:$0xff]
    %v1357 = vld [vmem:[#allocation2 + $0x2bd] sm:$0xff]
    %v1358 = vld [vmem:[#allocation2 + $0x2c5] sm:$0xff]
    %v1359 = vld [vmem:[#allocation2 + $0x2cd] sm:$0xff]
    %v1360 = vld [vmem:[#allocation2 + $0x2d5] sm:$0xff]
    %v1361 = vld [vmem:[#allocation2 + $0x2dd] sm:$0xff]
    %v1362 = vld [vmem:[#allocation2 + $0x2e5] sm:$0xff]
    %v1363 = vld [vmem:[#allocation2 + $0x2ed] sm:$0xff]
    %v1364 = vld [vmem:[#allocation2 + $0x2f5] sm:$0xff]
    %v1365 = vld [vmem:[#allocation2 + $0x2fd] sm:$0xff]
    %v1366 = vld [vmem:[#allocation2 + $0x305] sm:$0xff]
    %v1367 = vld [vmem:[#allocation2 + $0x30d] sm:$0x7]
    %v1368 = vmax.f32 %v988, %v1083
    %v1369 = vmax.f32 %v989, %v1084
    %v1370 = vmax.f32 %v990, %v1085
    %v1371 = vmax.f32 %v991, %v1086
    %v1372 = vmax.f32 %v992, %v1087
    %v1373 = vmax.f32 %v993, %v1088
    %v1374 = vmax.f32 %v994, %v1089
    %v1375 = vmax.f32 %v995, %v1090
    %v1376 = vmax.f32 %v996, %v1091
    %v1377 = vmax.f32 %v997, %v1092
    %v1378 = vmax.f32 %v998, %v1093
    %v1379 = vmax.f32 %v999, %v1094
    %v1380 = vmax.f32 %v1000, %v1095
    %v1381 = vmax.f32 %v1001, %v1096
    %v1382 = vmax.f32 %v1002, %v1097
    %v1383 = vmax.f32 %v1003, %v1098
    %v1384 = vmax.f32 %v1004, %v1099
    %v1385 = vmax.f32 %v1005, %v1100
    %v1386 = vmax.f32 %v1006, %v1101
    %v1387 = vmax.f32 %v1007, %v1102
    %v1388 = vmax.f32 %v1008, %v1103
    %v1389 = vmax.f32 %v1009, %v1104
    %v1390 = vmax.f32 %v1010, %v1105
    %v1391 = vmax.f32 %v1011, %v1106
    %v1392 = vmax.f32 %v1012, %v1107
    %v1393 = vmax.f32 %v1013, %v1108
    %v1394 = vmax.f32 %v1014, %v1109
    %v1395 = vmax.f32 %v1015, %v1110
    %v1396 = vmax.f32 %v1016, %v1111
    %v1397 = vmax.f32 %v1017, %v1112
    %v1398 = vmax.f32 %v1018, %v1113
    %v1399 = vmax.f32 %v1019, %v1114
    %v1400 = vmax.f32 %v1020, %v1115
    %v1401 = vmax.f32 %v1021, %v1116
    %v1402 = vmax.f32 %v1022, %v1117
    %v1403 = vmax.f32 %v1023, %v1118
    %v1404 = vmax.f32 %v1024, %v1119
    %v1405 = vmax.f32 %v1025, %v1120
    %v1406 = vmax.f32 %v1026, %v1121
    %v1407 = vmax.f32 %v1027, %v1122
    %v1408 = vmax.f32 %v1028, %v1123
    %v1409 = vmax.f32 %v1029, %v1124
    %v1410 = vmax.f32 %v1030, %v1125
    %v1411 = vmax.f32 %v1031, %v1126
    %v1412 = vmax.f32 %v1032, %v1127
    %v1413 = vmax.f32 %v1033, %v1128
    %v1414 = vmax.f32 %v1034, %v1129
    %v1415 = vmax.f32 %v1035, %v1130
    %v1416 = vmax.f32 %v1036, %v1131
    %v1417 = vmax.f32 %v1037, %v1132
    %v1418 = vmax.f32 %v1038, %v1133
    %v1419 = vmax.f32 %v1039, %v1134
    %v1420 = vmax.f32 %v1040, %v1135
    %v1421 = vmax.f32 %v1041, %v1136
    %v1422 = vmax.f32 %v1042, %v1137
    %v1423 = vmax.f32 %v1043, %v1138
    %v1424 = vmax.f32 %v1044, %v1139
    %v1425 = vmax.f32 %v1045, %v1140
    %v1426 = vmax.f32 %v1046, %v1141
    %v1427 = vmax.f32 %v1047, %v1142
    %v1428 = vmax.f32 %v1048, %v1143
    %v1429 = vmax.f32 %v1049, %v1144
    %v1430 = vmax.f32 %v1050, %v1145
    %v1431 = vmax.f32 %v1051, %v1146
    %v1432 = vmax.f32 %v1052, %v1147
    %v1433 = vmax.f32 %v1053, %v1148
    %v1434 = vmax.f32 %v1054, %v1149
    %v1435 = vmax.f32 %v1055, %v1150
    %v1436 = vmax.f32 %v1056, %v1151
    %v1437 = vmax.f32 %v1057, %v1152
    %v1438 = vmax.f32 %v1058, %v1153
    %v1439 = vmax.f32 %v1059, %v1154
    %v1440 = vmax.f32 %v1060, %v1155
    %v1441 = vmax.f32 %v1061, %v1156
    %v1442 = vmax.f32 %v1062, %v1157
    %v1443 = vmax.f32 %v1063, %v1158
    %v1444 = vmax.f32 %v1064, %v1159
    %v1445 = vmax.f32 %v1065, %v1160
    %v1446 = vmax.f32 %v1066, %v1161
    %v1447 = vmax.f32 %v1067, %v1162
    %v1448 = vmax.f32 %v1068, %v1163
    %v1449 = vmax.f32 %v1069, %v1164
    %v1450 = vmax.f32 %v1070, %v1165
    %v1451 = vmax.f32 %v1071, %v1166
    %v1452 = vmax.f32 %v1072, %v1167
    %v1453 = vmax.f32 %v1073, %v1168
    %v1454 = vmax.f32 %v1074, %v1169
    %v1455 = vmax.f32 %v1075, %v1170
    %v1456 = vmax.f32 %v1076, %v1171
    %v1457 = vmax.f32 %v1077, %v1172
    %v1458 = vmax.f32 %v1078, %v1173
    %v1459 = vmax.f32 %v1079, %v1174
    %v1460 = vmax.f32 %v1080, %v1175
    %v1461 = vmax.f32 %v1081, %v1176
    %v1462 = vmax.f32 %v1082, %v1177
    %v1463 = vmax.f32 %v1178, %v1273
    %v1464 = vmax.f32 %v1179, %v1274
    %v1465 = vmax.f32 %v1180, %v1275
    %v1466 = vmax.f32 %v1181, %v1276
    %v1467 = vmax.f32 %v1182, %v1277
    %v1468 = vmax.f32 %v1183, %v1278
    %v1469 = vmax.f32 %v1184, %v1279
    %v1470 = vmax.f32 %v1185, %v1280
    %v1471 = vmax.f32 %v1186, %v1281
    %v1472 = vmax.f32 %v1187, %v1282
    %v1473 = vmax.f32 %v1188, %v1283
    %v1474 = vmax.f32 %v1189, %v1284
    %v1475 = vmax.f32 %v1190, %v1285
    %v1476 = vmax.f32 %v1191, %v1286
    %v1477 = vmax.f32 %v1192, %v1287
    %v1478 = vmax.f32 %v1193, %v1288
    %v1479 = vmax.f32 %v1194, %v1289
    %v1480 = vmax.f32 %v1195, %v1290
    %v1481 = vmax.f32 %v1196, %v1291
    %v1482 = vmax.f32 %v1197, %v1292
    %v1483 = vmax.f32 %v1198, %v1293
    %v1484 = vmax.f32 %v1199, %v1294
    %v1485 = vmax.f32 %v1200, %v1295
    %v1486 = vmax.f32 %v1201, %v1296
    %v1487 = vmax.f32 %v1202, %v1297
    %v1488 = vmax.f32 %v1203, %v1298
    %v1489 = vmax.f32 %v1204, %v1299
    %v1490 = vmax.f32 %v1205, %v1300
    %v1491 = vmax.f32 %v1206, %v1301
    %v1492 = vmax.f32 %v1207, %v1302
    %v1493 = vmax.f32 %v1208, %v1303
    %v1494 = vmax.f32 %v1209, %v1304
    %v1495 = vmax.f32 %v1210, %v1305
    %v1496 = vmax.f32 %v1211, %v1306
    %v1497 = vmax.f32 %v1212, %v1307
    %v1498 = vmax.f32 %v1213, %v1308
    %v1499 = vmax.f32 %v1214, %v1309
    %v1500 = vmax.f32 %v1215, %v1310
    %v1501 = vmax.f32 %v1216, %v1311
    %v1502 = vmax.f32 %v1217, %v1312
    %v1503 = vmax.f32 %v1218, %v1313
    %v1504 = vmax.f32 %v1219, %v1314
    %v1505 = vmax.f32 %v1220, %v1315
    %v1506 = vmax.f32 %v1221, %v1316
    %v1507 = vmax.f32 %v1222, %v1317
    %v1508 = vmax.f32 %v1223, %v1318
    %v1509 = vmax.f32 %v1224, %v1319
    %v1510 = vmax.f32 %v1225, %v1320
    %v1511 = vmax.f32 %v1226, %v1321
    %v1512 = vmax.f32 %v1227, %v1322
    %v1513 = vmax.f32 %v1228, %v1323
    %v1514 = vmax.f32 %v1229, %v1324
    %v1515 = vmax.f32 %v1230, %v1325
    %v1516 = vmax.f32 %v1231, %v1326
    %v1517 = vmax.f32 %v1232, %v1327
    %v1518 = vmax.f32 %v1233, %v1328
    %v1519 = vmax.f32 %v1234, %v1329
    %v1520 = vmax.f32 %v1235, %v1330
    %v1521 = vmax.f32 %v1236, %v1331
    %v1522 = vmax.f32 %v1237, %v1332
    %v1523 = vmax.f32 %v1238, %v1333
    %v1524 = vmax.f32 %v1239, %v1334
    %v1525 = vmax.f32 %v1240, %v1335
    %v1526 = vmax.f32 %v1241, %v1336
    %v1527 = vmax.f32 %v1242, %v1337
    %v1528 = vmax.f32 %v1243, %v1338
    %v1529 = vmax.f32 %v1244, %v1339
    %v1530 = vmax.f32 %v1245, %v1340
    %v1531 = vmax.f32 %v1246, %v1341
    %v1532 = vmax.f32 %v1247, %v1342
    %v1533 = vmax.f32 %v1248, %v1343
    %v1534 = vmax.f32 %v1249, %v1344
    %v1535 = vmax.f32 %v1250, %v1345
    %v1536 = vmax.f32 %v1251, %v1346
    %v1537 = vmax.f32 %v1252, %v1347
    %v1538 = vmax.f32 %v1253, %v1348
    %v1539 = vmax.f32 %v1254, %v1349
    %v1540 = vmax.f32 %v1255, %v1350
    %v1541 = vmax.f32 %v1256, %v1351
    %v1542 = vmax.f32 %v1257, %v1352
    %v1543 = vmax.f32 %v1258, %v1353
    %v1544 = vmax.f32 %v1259, %v1354
    %v1545 = vmax.f32 %v1260, %v1355
    %v1546 = vmax.f32 %v1261, %v1356
    %v1547 = vmax.f32 %v1262, %v1357
    %v1548 = vmax.f32 %v1263, %v1358
    %v1549 = vmax.f32 %v1264, %v1359
    %v1550 = vmax.f32 %v1265, %v1360
    %v1551 = vmax.f32 %v1266, %v1361
    %v1552 = vmax.f32 %v1267, %v1362
    %v1553 = vmax.f32 %v1268, %v1363
    %v1554 = vmax.f32 %v1269, %v1364
    %v1555 = vmax.f32 %v1270, %v1365
    %v1556 = vmax.f32 %v1271, %v1366
    %v1557 = vmax.f32 %v1272, %v1367
    %v1558 = vmax.f32 %v1368, %v1463
    %v1559 = vmax.f32 %v1369, %v1464
    %v1560 = vmax.f32 %v1370, %v1465
    %v1561 = vmax.f32 %v1371, %v1466
    %v1562 = vmax.f32 %v1372, %v1467
    %v1563 = vmax.f32 %v1373, %v1468
    %v1564 = vmax.f32 %v1374, %v1469
    %v1565 = vmax.f32 %v1375, %v1470
    %v1566 = vmax.f32 %v1376, %v1471
    %v1567 = vmax.f32 %v1377, %v1472
    %v1568 = vmax.f32 %v1378, %v1473
    %v1569 = vmax.f32 %v1379, %v1474
    %v1570 = vmax.f32 %v1380, %v1475
    %v1571 = vmax.f32 %v1381, %v1476
    %v1572 = vmax.f32 %v1382, %v1477
    %v1573 = vmax.f32 %v1383, %v1478
    %v1574 = vmax.f32 %v1384, %v1479
    %v1575 = vmax.f32 %v1385, %v1480
    %v1576 = vmax.f32 %v1386, %v1481
    %v1577 = vmax.f32 %v1387, %v1482
    %v1578 = vmax.f32 %v1388, %v1483
    %v1579 = vmax.f32 %v1389, %v1484
    %v1580 = vmax.f32 %v1390, %v1485
    %v1581 = vmax.f32 %v1391, %v1486
    %v1582 = vmax.f32 %v1392, %v1487
    %v1583 = vmax.f32 %v1393, %v1488
    %v1584 = vmax.f32 %v1394, %v1489
    %v1585 = vmax.f32 %v1395, %v1490
    %v1586 = vmax.f32 %v1396, %v1491
    %v1587 = vmax.f32 %v1397, %v1492
    %v1588 = vmax.f32 %v1398, %v1493
    %v1589 = vmax.f32 %v1399, %v1494
    %v1590 = vmax.f32 %v1400, %v1495
    %v1591 = vmax.f32 %v1401, %v1496
    %v1592 = vmax.f32 %v1402, %v1497
    %v1593 = vmax.f32 %v1403, %v1498
    %v1594 = vmax.f32 %v1404, %v1499
    %v1595 = vmax.f32 %v1405, %v1500
    %v1596 = vmax.f32 %v1406, %v1501
    %v1597 = vmax.f32 %v1407, %v1502
    %v1598 = vmax.f32 %v1408, %v1503
    %v1599 = vmax.f32 %v1409, %v1504
    %v1600 = vmax.f32 %v1410, %v1505
    %v1601 = vmax.f32 %v1411, %v1506
    %v1602 = vmax.f32 %v1412, %v1507
    %v1603 = vmax.f32 %v1413, %v1508
    %v1604 = vmax.f32 %v1414, %v1509
    %v1605 = vmax.f32 %v1415, %v1510
    %v1606 = vmax.f32 %v1416, %v1511
    %v1607 = vmax.f32 %v1417, %v1512
    %v1608 = vmax.f32 %v1418, %v1513
    %v1609 = vmax.f32 %v1419, %v1514
    %v1610 = vmax.f32 %v1420, %v1515
    %v1611 = vmax.f32 %v1421, %v1516
    %v1612 = vmax.f32 %v1422, %v1517
    %v1613 = vmax.f32 %v1423, %v1518
    %v1614 = vmax.f32 %v1424, %v1519
    %v1615 = vmax.f32 %v1425, %v1520
    %v1616 = vmax.f32 %v1426, %v1521
    %v1617 = vmax.f32 %v1427, %v1522
    %v1618 = vmax.f32 %v1428, %v1523
    %v1619 = vmax.f32 %v1429, %v1524
    %v1620 = vmax.f32 %v1430, %v1525
    %v1621 = vmax.f32 %v1431, %v1526
    %v1622 = vmax.f32 %v1432, %v1527
    %v1623 = vmax.f32 %v1433, %v1528
    %v1624 = vmax.f32 %v1434, %v1529
    %v1625 = vmax.f32 %v1435, %v1530
    %v1626 = vmax.f32 %v1436, %v1531
    %v1627 = vmax.f32 %v1437, %v1532
    %v1628 = vmax.f32 %v1438, %v1533
    %v1629 = vmax.f32 %v1439, %v1534
    %v1630 = vmax.f32 %v1440, %v1535
    %v1631 = vmax.f32 %v1441, %v1536
    %v1632 = vmax.f32 %v1442, %v1537
    %v1633 = vmax.f32 %v1443, %v1538
    %v1634 = vmax.f32 %v1444, %v1539
    %v1635 = vmax.f32 %v1445, %v1540
    %v1636 = vmax.f32 %v1446, %v1541
    %v1637 = vmax.f32 %v1447, %v1542
    %v1638 = vmax.f32 %v1448, %v1543
    %v1639 = vmax.f32 %v1449, %v1544
    %v1640 = vmax.f32 %v1450, %v1545
    %v1641 = vmax.f32 %v1451, %v1546
    %v1642 = vmax.f32 %v1452, %v1547
    %v1643 = vmax.f32 %v1453, %v1548
    %v1644 = vmax.f32 %v1454, %v1549
    %v1645 = vmax.f32 %v1455, %v1550
    %v1646 = vmax.f32 %v1456, %v1551
    %v1647 = vmax.f32 %v1457, %v1552
    %v1648 = vmax.f32 %v1458, %v1553
    %v1649 = vmax.f32 %v1459, %v1554
    %v1650 = vmax.f32 %v1460, %v1555
    %v1651 = vmax.f32 %v1461, %v1556
    %v1652 = vmax.f32 %v1462, %v1557
    %v1653 = vpack.c.bf16 %v1559, %v1558
    %v1654 = vpack.c.bf16 %v1561, %v1560
    %v1655 = vpack.c.bf16 %v1563, %v1562
    %v1656 = vpack.c.bf16 %v1565, %v1564
    %v1657 = vpack.c.bf16 %v1567, %v1566
    %v1658 = vpack.c.bf16 %v1569, %v1568
    %v1659 = vpack.c.bf16 %v1571, %v1570
    %v1660 = vpack.c.bf16 %v1573, %v1572
    %v1661 = vpack.c.bf16 %v1575, %v1574
    %v1662 = vpack.c.bf16 %v1577, %v1576
    %v1663 = vpack.c.bf16 %v1579, %v1578
    %v1664 = vpack.c.bf16 %v1581, %v1580
    %v1665 = vpack.c.bf16 %v1583, %v1582
    %v1666 = vpack.c.bf16 %v1585, %v1584
    %v1667 = vpack.c.bf16 %v1587, %v1586
    %v1668 = vpack.c.bf16 %v1589, %v1588
    %v1669 = vpack.c.bf16 %v1591, %v1590
    %v1670 = vpack.c.bf16 %v1593, %v1592
    %v1671 = vpack.c.bf16 %v1595, %v1594
    %v1672 = vpack.c.bf16 %v1597, %v1596
    %v1673 = vpack.c.bf16 %v1599, %v1598
    %v1674 = vpack.c.bf16 %v1601, %v1600
    %v1675 = vpack.c.bf16 %v1603, %v1602
    %v1676 = vpack.c.bf16 %v1605, %v1604
    %v1677 = vpack.c.bf16 %v1607, %v1606
    %v1678 = vpack.c.bf16 %v1609, %v1608
    %v1679 = vpack.c.bf16 %v1611, %v1610
    %v1680 = vpack.c.bf16 %v1613, %v1612
    %v1681 = vpack.c.bf16 %v1615, %v1614
    %v1682 = vpack.c.bf16 %v1617, %v1616
    %v1683 = vpack.c.bf16 %v1619, %v1618
    %v1684 = vpack.c.bf16 %v1621, %v1620
    %v1685 = vpack.c.bf16 %v1623, %v1622
    %v1686 = vpack.c.bf16 %v1625, %v1624
    %v1687 = vpack.c.bf16 %v1627, %v1626
    %v1688 = vpack.c.bf16 %v1629, %v1628
    %v1689 = vpack.c.bf16 %v1631, %v1630
    %v1690 = vpack.c.bf16 %v1633, %v1632
    %v1691 = vpack.c.bf16 %v1635, %v1634
    %v1692 = vpack.c.bf16 %v1637, %v1636
    %v1693 = vpack.c.bf16 %v1639, %v1638
    %v1694 = vpack.c.bf16 %v1641, %v1640
    %v1695 = vpack.c.bf16 %v1643, %v1642
    %v1696 = vpack.c.bf16 %v1645, %v1644
    %v1697 = vpack.c.bf16 %v1647, %v1646
    %v1698 = vpack.c.bf16 %v1649, %v1648
    %v1699 = vpack.c.bf16 %v1651, %v1650
    %v1700 = vpack.c.bf16 %v1652, %v1652
    %v1701 = vld [vmem:[%s3] sm:$0xff]
    %v1702 = vld [vmem:[%s3 + $0x8] sm:$0xff]
    %v1703 = vld [vmem:[%s3 + $0x10] sm:$0xff]
    %v1704 = vld [vmem:[%s3 + $0x18] sm:$0xff]
    %v1705 = vld [vmem:[%s3 + $0x20] sm:$0xff]
    %v1706 = vld [vmem:[%s3 + $0x28] sm:$0xff]
    %v1707 = vld [vmem:[%s3 + $0x30] sm:$0xff]
    %v1708 = vld [vmem:[%s3 + $0x38] sm:$0xff]
    %v1709 = vld [vmem:[%s3 + $0x40] sm:$0xff]
    %v1710 = vld [vmem:[%s3 + $0x48] sm:$0xff]
    %v1711 = vld [vmem:[%s3 + $0x50] sm:$0xff]
    %v1712 = vld [vmem:[%s3 + $0x58] sm:$0xff]
    %v1713 = vld [vmem:[%s3 + $0x60] sm:$0xff]
    %v1714 = vld [vmem:[%s3 + $0x68] sm:$0xff]
    %v1715 = vld [vmem:[%s3 + $0x70] sm:$0xff]
    %v1716 = vld [vmem:[%s3 + $0x78] sm:$0xff]
    %v1717 = vld [vmem:[%s3 + $0x80] sm:$0xff]
    %v1718 = vld [vmem:[%s3 + $0x88] sm:$0xff]
    %v1719 = vld [vmem:[%s3 + $0x90] sm:$0xff]
    %v1720 = vld [vmem:[%s3 + $0x98] sm:$0xff]
    %v1721 = vld [vmem:[%s3 + $0xa0] sm:$0xff]
    %v1722 = vld [vmem:[%s3 + $0xa8] sm:$0xff]
    %v1723 = vld [vmem:[%s3 + $0xb0] sm:$0xff]
    %v1724 = vld [vmem:[%s3 + $0xb8] sm:$0xff]
    %v1725 = vld [vmem:[%s3 + $0xc0] sm:$0xff]
    %v1726 = vld [vmem:[%s3 + $0xc8] sm:$0xff]
    %v1727 = vld [vmem:[%s3 + $0xd0] sm:$0xff]
    %v1728 = vld [vmem:[%s3 + $0xd8] sm:$0xff]
    %v1729 = vld [vmem:[%s3 + $0xe0] sm:$0xff]
    %v1730 = vld [vmem:[%s3 + $0xe8] sm:$0xff]
    %v1731 = vld [vmem:[%s3 + $0xf0] sm:$0xff]
    %v1732 = vld [vmem:[%s3 + $0xf8] sm:$0xff]
    %v1733 = vld [vmem:[%s3 + $0x100] sm:$0xff]
    %v1734 = vld [vmem:[%s3 + $0x108] sm:$0xff]
    %v1735 = vld [vmem:[%s3 + $0x110] sm:$0xff]
    %v1736 = vld [vmem:[%s3 + $0x118] sm:$0xff]
    %v1737 = vld [vmem:[%s3 + $0x120] sm:$0xff]
    %v1738 = vld [vmem:[%s3 + $0x128] sm:$0xff]
    %v1739 = vld [vmem:[%s3 + $0x130] sm:$0xff]
    %v1740 = vld [vmem:[%s3 + $0x138] sm:$0xff]
    %v1741 = vld [vmem:[%s3 + $0x140] sm:$0xff]
    %v1742 = vld [vmem:[%s3 + $0x148] sm:$0xff]
    %v1743 = vld [vmem:[%s3 + $0x150] sm:$0xff]
    %v1744 = vld [vmem:[%s3 + $0x158] sm:$0xff]
    %v1745 = vld [vmem:[%s3 + $0x160] sm:$0xff]
    %v1746 = vld [vmem:[%s3 + $0x168] sm:$0xff]
    %v1747 = vld [vmem:[%s3 + $0x170] sm:$0xff]
    %v1748 = vld [vmem:[%s3 + $0x178] sm:$0xff]
    %v1749 = vld [vmem:[%s3 + $0x180] sm:$0xff]
    %v1750 = vld [vmem:[%s3 + $0x188] sm:$0xff]
    %v1751 = vld [vmem:[%s3 + $0x190] sm:$0xff]
    %v1752 = vld [vmem:[%s3 + $0x198] sm:$0xff]
    %v1753 = vld [vmem:[%s3 + $0x1a0] sm:$0xff]
    %v1754 = vld [vmem:[%s3 + $0x1a8] sm:$0xff]
    %v1755 = vld [vmem:[%s3 + $0x1b0] sm:$0xff]
    %v1756 = vld [vmem:[%s3 + $0x1b8] sm:$0xff]
    %v1757 = vld [vmem:[%s3 + $0x1c0] sm:$0xff]
    %v1758 = vld [vmem:[%s3 + $0x1c8] sm:$0xff]
    %v1759 = vld [vmem:[%s3 + $0x1d0] sm:$0xff]
    %v1760 = vld [vmem:[%s3 + $0x1d8] sm:$0xff]
    %v1761 = vld [vmem:[%s3 + $0x1e0] sm:$0xff]
    %v1762 = vld [vmem:[%s3 + $0x1e8] sm:$0xff]
    %v1763 = vld [vmem:[%s3 + $0x1f0] sm:$0xff]
    %v1764 = vld [vmem:[%s3 + $0x1f8] sm:$0xff]
    %v1765 = vld [vmem:[%s3 + $0x200] sm:$0xff]
    %v1766 = vld [vmem:[%s3 + $0x208] sm:$0xff]
    %v1767 = vld [vmem:[%s3 + $0x210] sm:$0xff]
    %v1768 = vld [vmem:[%s3 + $0x218] sm:$0xff]
    %v1769 = vld [vmem:[%s3 + $0x220] sm:$0xff]
    %v1770 = vld [vmem:[%s3 + $0x228] sm:$0xff]
    %v1771 = vld [vmem:[%s3 + $0x230] sm:$0xff]
    %v1772 = vld [vmem:[%s3 + $0x238] sm:$0xff]
    %v1773 = vld [vmem:[%s3 + $0x240] sm:$0xff]
    %v1774 = vld [vmem:[%s3 + $0x248] sm:$0xff]
    %v1775 = vld [vmem:[%s3 + $0x250] sm:$0xff]
    %v1776 = vld [vmem:[%s3 + $0x258] sm:$0xff]
    %v1777 = vld [vmem:[%s3 + $0x260] sm:$0xff]
    %v1778 = vld [vmem:[%s3 + $0x268] sm:$0xff]
    %v1779 = vld [vmem:[%s3 + $0x270] sm:$0xff]
    %v1780 = vld [vmem:[%s3 + $0x278] sm:$0xff]
    %v1781 = vld [vmem:[%s3 + $0x280] sm:$0xff]
    %v1782 = vld [vmem:[%s3 + $0x288] sm:$0xff]
    %v1783 = vld [vmem:[%s3 + $0x290] sm:$0xff]
    %v1784 = vld [vmem:[%s3 + $0x298] sm:$0xff]
    %v1785 = vld [vmem:[%s3 + $0x2a0] sm:$0xff]
    %v1786 = vld [vmem:[%s3 + $0x2a8] sm:$0xff]
    %v1787 = vld [vmem:[%s3 + $0x2b0] sm:$0xff]
    %v1788 = vld [vmem:[%s3 + $0x2b8] sm:$0xff]
    %v1789 = vld [vmem:[%s3 + $0x2c0] sm:$0xff]
    %v1790 = vld [vmem:[%s3 + $0x2c8] sm:$0xff]
    %v1791 = vld [vmem:[%s3 + $0x2d0] sm:$0xff]
    %v1792 = vld [vmem:[%s3 + $0x2d8] sm:$0xff]
    %v1793 = vld [vmem:[%s3 + $0x2e0] sm:$0xff]
    %v1794 = vld [vmem:[%s3 + $0x2e8] sm:$0xff]
    %v1795 = vld [vmem:[%s3 + $0x2f0] sm:$0xff]
    %v1796 = vld [vmem:[%s3 + $0x2f8] sm:$0xff]
    %v1797 = vld [vmem:[%s3 + $0x300] sm:$0x11]
    %v1798 = vld [vmem:[%s3 + $0x308] sm:$0x11]
    %v1799 = vld [vmem:[%s3 + $0x310] sm:$0x11]
    %v1899 = vunpack.c.l.b16 %v1701
    %v1900 = vunpack.c.h.b16 %v1701
    %v1901 = vunpack.c.l.b16 %v1702
    %v1902 = vunpack.c.h.b16 %v1702
    %v1903 = vunpack.c.l.b16 %v1703
    %v1904 = vunpack.c.h.b16 %v1703
    %v1905 = vunpack.c.l.b16 %v1704
    %v1906 = vunpack.c.h.b16 %v1704
    %v1907 = vunpack.c.l.b16 %v1705
    %v1908 = vunpack.c.h.b16 %v1705
    %v1909 = vunpack.c.l.b16 %v1706
    %v1910 = vunpack.c.h.b16 %v1706
    %v1911 = vunpack.c.l.b16 %v1707
    %v1912 = vunpack.c.h.b16 %v1707
    %v1913 = vunpack.c.l.b16 %v1708
    %v1914 = vunpack.c.h.b16 %v1708
    %v1915 = vunpack.c.l.b16 %v1709
    %v1916 = vunpack.c.h.b16 %v1709
    %v1917 = vunpack.c.l.b16 %v1710
    %v1918 = vunpack.c.h.b16 %v1710
    %v1919 = vunpack.c.l.b16 %v1711
    %v1920 = vunpack.c.h.b16 %v1711
    %v1921 = vunpack.c.l.b16 %v1712
    %v1922 = vunpack.c.h.b16 %v1712
    %v1923 = vunpack.c.l.b16 %v1713
    %v1924 = vunpack.c.h.b16 %v1713
    %v1925 = vunpack.c.l.b16 %v1714
    %v1926 = vunpack.c.h.b16 %v1714
    %v1927 = vunpack.c.l.b16 %v1715
    %v1928 = vunpack.c.h.b16 %v1715
    %v1929 = vunpack.c.l.b16 %v1716
    %v1930 = vunpack.c.h.b16 %v1716
    %v1931 = vunpack.c.l.b16 %v1717
    %v1932 = vunpack.c.h.b16 %v1717
    %v1933 = vunpack.c.l.b16 %v1718
    %v1934 = vunpack.c.h.b16 %v1718
    %v1935 = vunpack.c.l.b16 %v1719
    %v1936 = vunpack.c.h.b16 %v1719
    %v1937 = vunpack.c.l.b16 %v1720
    %v1938 = vunpack.c.h.b16 %v1720
    %v1939 = vunpack.c.l.b16 %v1721
    %v1940 = vunpack.c.h.b16 %v1721
    %v1941 = vunpack.c.l.b16 %v1722
    %v1942 = vunpack.c.h.b16 %v1722
    %v1943 = vunpack.c.l.b16 %v1723
    %v1944 = vunpack.c.h.b16 %v1723
    %v1945 = vunpack.c.l.b16 %v1724
    %v1946 = vunpack.c.h.b16 %v1724
    %v1947 = vunpack.c.l.b16 %v1725
    %v1948 = vunpack.c.h.b16 %v1725
    %v1949 = vunpack.c.l.b16 %v1726
    %v1950 = vunpack.c.h.b16 %v1726
    %v1951 = vunpack.c.l.b16 %v1727
    %v1952 = vunpack.c.h.b16 %v1727
    %v1953 = vunpack.c.l.b16 %v1728
    %v1954 = vunpack.c.h.b16 %v1728
    %v1955 = vunpack.c.l.b16 %v1729
    %v1956 = vunpack.c.h.b16 %v1729
    %v1957 = vunpack.c.l.b16 %v1730
    %v1958 = vunpack.c.h.b16 %v1730
    %v1959 = vunpack.c.l.b16 %v1731
    %v1960 = vunpack.c.h.b16 %v1731
    %v1961 = vunpack.c.l.b16 %v1732
    %v1962 = vunpack.c.h.b16 %v1732
    %v1963 = vunpack.c.l.b16 %v1733
    %v1964 = vunpack.c.h.b16 %v1733
    %v1965 = vunpack.c.l.b16 %v1734
    %v1966 = vunpack.c.h.b16 %v1734
    %v1967 = vunpack.c.l.b16 %v1735
    %v1968 = vunpack.c.h.b16 %v1735
    %v1969 = vunpack.c.l.b16 %v1736
    %v1970 = vunpack.c.h.b16 %v1736
    %v1971 = vunpack.c.l.b16 %v1737
    %v1972 = vunpack.c.h.b16 %v1737
    %v1973 = vunpack.c.l.b16 %v1738
    %v1974 = vunpack.c.h.b16 %v1738
    %v1975 = vunpack.c.l.b16 %v1739
    %v1976 = vunpack.c.h.b16 %v1739
    %v1977 = vunpack.c.l.b16 %v1740
    %v1978 = vunpack.c.h.b16 %v1740
    %v1979 = vunpack.c.l.b16 %v1741
    %v1980 = vunpack.c.h.b16 %v1741
    %v1981 = vunpack.c.l.b16 %v1742
    %v1982 = vunpack.c.h.b16 %v1742
    %v1983 = vunpack.c.l.b16 %v1743
    %v1984 = vunpack.c.h.b16 %v1743
    %v1985 = vunpack.c.l.b16 %v1744
    %v1986 = vunpack.c.h.b16 %v1744
    %v1987 = vunpack.c.l.b16 %v1745
    %v1988 = vunpack.c.h.b16 %v1745
    %v1989 = vunpack.c.l.b16 %v1746
    %v1990 = vunpack.c.h.b16 %v1746
    %v1991 = vunpack.c.l.b16 %v1747
    %v1992 = vunpack.c.h.b16 %v1747
    %v1993 = vunpack.c.l.b16 %v1748
    %v1994 = vunpack.c.h.b16 %v1748
    %v1995 = vunpack.c.l.b16 %v1749
    %v1996 = vunpack.c.h.b16 %v1749
    %v1997 = vunpack.c.l.b16 %v1750
    %v1998 = vunpack.c.h.b16 %v1750
    %v1999 = vunpack.c.l.b16 %v1751
    %v2000 = vunpack.c.h.b16 %v1751
    %v2001 = vunpack.c.l.b16 %v1752
    %v2002 = vunpack.c.h.b16 %v1752
    %v2003 = vunpack.c.l.b16 %v1753
    %v2004 = vunpack.c.h.b16 %v1753
    %v2005 = vunpack.c.l.b16 %v1754
    %v2006 = vunpack.c.h.b16 %v1754
    %v2007 = vunpack.c.l.b16 %v1755
    %v2008 = vunpack.c.h.b16 %v1755
    %v2009 = vunpack.c.l.b16 %v1756
    %v2010 = vunpack.c.h.b16 %v1756
    %v2011 = vunpack.c.l.b16 %v1757
    %v2012 = vunpack.c.h.b16 %v1757
    %v2013 = vunpack.c.l.b16 %v1758
    %v2014 = vunpack.c.h.b16 %v1758
    %v2015 = vunpack.c.l.b16 %v1759
    %v2016 = vunpack.c.h.b16 %v1759
    %v2017 = vunpack.c.l.b16 %v1760
    %v2018 = vunpack.c.h.b16 %v1760
    %v2019 = vunpack.c.l.b16 %v1761
    %v2020 = vunpack.c.h.b16 %v1761
    %v2021 = vunpack.c.l.b16 %v1762
    %v2022 = vunpack.c.h.b16 %v1762
    %v2023 = vunpack.c.l.b16 %v1763
    %v2024 = vunpack.c.h.b16 %v1763
    %v2025 = vunpack.c.l.b16 %v1764
    %v2026 = vunpack.c.h.b16 %v1764
    %v2027 = vunpack.c.l.b16 %v1765
    %v2028 = vunpack.c.h.b16 %v1765
    %v2029 = vunpack.c.l.b16 %v1766
    %v2030 = vunpack.c.h.b16 %v1766
    %v2031 = vunpack.c.l.b16 %v1767
    %v2032 = vunpack.c.h.b16 %v1767
    %v2033 = vunpack.c.l.b16 %v1768
    %v2034 = vunpack.c.h.b16 %v1768
    %v2035 = vunpack.c.l.b16 %v1769
    %v2036 = vunpack.c.h.b16 %v1769
    %v2037 = vunpack.c.l.b16 %v1770
    %v2038 = vunpack.c.h.b16 %v1770
    %v2039 = vunpack.c.l.b16 %v1771
    %v2040 = vunpack.c.h.b16 %v1771
    %v2041 = vunpack.c.l.b16 %v1772
    %v2042 = vunpack.c.h.b16 %v1772
    %v2043 = vunpack.c.l.b16 %v1773
    %v2044 = vunpack.c.h.b16 %v1773
    %v2045 = vunpack.c.l.b16 %v1774
    %v2046 = vunpack.c.h.b16 %v1774
    %v2047 = vunpack.c.l.b16 %v1775
    %v2048 = vunpack.c.h.b16 %v1775
    %v2049 = vunpack.c.l.b16 %v1776
    %v2050 = vunpack.c.h.b16 %v1776
    %v2051 = vunpack.c.l.b16 %v1777
    %v2052 = vunpack.c.h.b16 %v1777
    %v2053 = vunpack.c.l.b16 %v1778
    %v2054 = vunpack.c.h.b16 %v1778
    %v2055 = vunpack.c.l.b16 %v1779
    %v2056 = vunpack.c.h.b16 %v1779
    %v2057 = vunpack.c.l.b16 %v1780
    %v2058 = vunpack.c.h.b16 %v1780
    %v2059 = vunpack.c.l.b16 %v1781
    %v2060 = vunpack.c.h.b16 %v1781
    %v2061 = vunpack.c.l.b16 %v1782
    %v2062 = vunpack.c.h.b16 %v1782
    %v2063 = vunpack.c.l.b16 %v1783
    %v2064 = vunpack.c.h.b16 %v1783
    %v2065 = vunpack.c.l.b16 %v1784
    %v2066 = vunpack.c.h.b16 %v1784
    %v2067 = vunpack.c.l.b16 %v1785
    %v2068 = vunpack.c.h.b16 %v1785
    %v2069 = vunpack.c.l.b16 %v1786
    %v2070 = vunpack.c.h.b16 %v1786
    %v2071 = vunpack.c.l.b16 %v1787
    %v2072 = vunpack.c.h.b16 %v1787
    %v2073 = vunpack.c.l.b16 %v1788
    %v2074 = vunpack.c.h.b16 %v1788
    %v2075 = vunpack.c.l.b16 %v1789
    %v2076 = vunpack.c.h.b16 %v1789
    %v2077 = vunpack.c.l.b16 %v1790
    %v2078 = vunpack.c.h.b16 %v1790
    %v2079 = vunpack.c.l.b16 %v1791
    %v2080 = vunpack.c.h.b16 %v1791
    %v2081 = vunpack.c.l.b16 %v1792
    %v2082 = vunpack.c.h.b16 %v1792
    %v2083 = vunpack.c.l.b16 %v1793
    %v2084 = vunpack.c.h.b16 %v1793
    %v2085 = vunpack.c.l.b16 %v1794
    %v2086 = vunpack.c.h.b16 %v1794
    %v2087 = vunpack.c.l.b16 %v1795
    %v2088 = vunpack.c.h.b16 %v1795
    %v2089 = vunpack.c.l.b16 %v1796
    %v2090 = vunpack.c.h.b16 %v1796
    %v2091 = vunpack.c.l.b16 %v1797
    %v2092 = vunpack.c.h.b16 %v1797
    %v2093 = vunpack.c.l.b16 %v1798
    %v2094 = vunpack.c.h.b16 %v1798
    %v2095 = vunpack.c.l.b16 %v1799
    %v2096 = vunpack.c.h.b16 %v1799
    %v2097 = vpack.c.b16 %v1905, %v1899
    %v2098 = vpack.c.b16 %v1906, %v1900
    %v2099 = vpack.c.b16 %v1907, %v1901
    %v2100 = vpack.c.b16 %v1908, %v1902
    %v2101 = vpack.c.b16 %v1909, %v1903
    %v2102 = vpack.c.b16 %v1910, %v1904
    %v2103 = vpack.c.b16 %v1917, %v1911
    %v2104 = vpack.c.b16 %v1918, %v1912
    %v2105 = vpack.c.b16 %v1919, %v1913
    %v2106 = vpack.c.b16 %v1920, %v1914
    %v2107 = vpack.c.b16 %v1921, %v1915
    %v2108 = vpack.c.b16 %v1922, %v1916
    %v2109 = vpack.c.b16 %v1929, %v1923
    %v2110 = vpack.c.b16 %v1930, %v1924
    %v2111 = vpack.c.b16 %v1931, %v1925
    %v2112 = vpack.c.b16 %v1932, %v1926
    %v2113 = vpack.c.b16 %v1933, %v1927
    %v2114 = vpack.c.b16 %v1934, %v1928
    %v2115 = vpack.c.b16 %v1941, %v1935
    %v2116 = vpack.c.b16 %v1942, %v1936
    %v2117 = vpack.c.b16 %v1943, %v1937
    %v2118 = vpack.c.b16 %v1944, %v1938
    %v2119 = vpack.c.b16 %v1945, %v1939
    %v2120 = vpack.c.b16 %v1946, %v1940
    %v2121 = vpack.c.b16 %v1953, %v1947
    %v2122 = vpack.c.b16 %v1954, %v1948
    %v2123 = vpack.c.b16 %v1955, %v1949
    %v2124 = vpack.c.b16 %v1956, %v1950
    %v2125 = vpack.c.b16 %v1957, %v1951
    %v2126 = vpack.c.b16 %v1958, %v1952
    %v2127 = vpack.c.b16 %v1965, %v1959
    %v2128 = vpack.c.b16 %v1966, %v1960
    %v2129 = vpack.c.b16 %v1967, %v1961
    %v2130 = vpack.c.b16 %v1968, %v1962
    %v2131 = vpack.c.b16 %v1969, %v1963
    %v2132 = vpack.c.b16 %v1970, %v1964
    %v2133 = vpack.c.b16 %v1977, %v1971
    %v2134 = vpack.c.b16 %v1978, %v1972
    %v2135 = vpack.c.b16 %v1979, %v1973
    %v2136 = vpack.c.b16 %v1980, %v1974
    %v2137 = vpack.c.b16 %v1981, %v1975
    %v2138 = vpack.c.b16 %v1982, %v1976
    %v2139 = vpack.c.b16 %v1989, %v1983
    %v2140 = vpack.c.b16 %v1990, %v1984
    %v2141 = vpack.c.b16 %v1991, %v1985
    %v2142 = vpack.c.b16 %v1992, %v1986
    %v2143 = vpack.c.b16 %v1993, %v1987
    %v2144 = vpack.c.b16 %v1994, %v1988
    %v2145 = vpack.c.b16 %v2001, %v1995
    %v2146 = vpack.c.b16 %v2002, %v1996
    %v2147 = vpack.c.b16 %v2003, %v1997
    %v2148 = vpack.c.b16 %v2004, %v1998
    %v2149 = vpack.c.b16 %v2005, %v1999
    %v2150 = vpack.c.b16 %v2006, %v2000
    %v2151 = vpack.c.b16 %v2013, %v2007
    %v2152 = vpack.c.b16 %v2014, %v2008
    %v2153 = vpack.c.b16 %v2015, %v2009
    %v2154 = vpack.c.b16 %v2016, %v2010
    %v2155 = vpack.c.b16 %v2017, %v2011
    %v2156 = vpack.c.b16 %v2018, %v2012
    %v2157 = vpack.c.b16 %v2025, %v2019
    %v2158 = vpack.c.b16 %v2026, %v2020
    %v2159 = vpack.c.b16 %v2027, %v2021
    %v2160 = vpack.c.b16 %v2028, %v2022
    %v2161 = vpack.c.b16 %v2029, %v2023
    %v2162 = vpack.c.b16 %v2030, %v2024
    %v2163 = vpack.c.b16 %v2037, %v2031
    %v2164 = vpack.c.b16 %v2038, %v2032
    %v2165 = vpack.c.b16 %v2039, %v2033
    %v2166 = vpack.c.b16 %v2040, %v2034
    %v2167 = vpack.c.b16 %v2041, %v2035
    %v2168 = vpack.c.b16 %v2042, %v2036
    %v2169 = vpack.c.b16 %v2049, %v2043
    %v2170 = vpack.c.b16 %v2050, %v2044
    %v2171 = vpack.c.b16 %v2051, %v2045
    %v2172 = vpack.c.b16 %v2052, %v2046
    %v2173 = vpack.c.b16 %v2053, %v2047
    %v2174 = vpack.c.b16 %v2054, %v2048
    %v2175 = vpack.c.b16 %v2061, %v2055
    %v2176 = vpack.c.b16 %v2062, %v2056
    %v2177 = vpack.c.b16 %v2063, %v2057
    %v2178 = vpack.c.b16 %v2064, %v2058
    %v2179 = vpack.c.b16 %v2065, %v2059
    %v2180 = vpack.c.b16 %v2066, %v2060
    %v2181 = vpack.c.b16 %v2073, %v2067
    %v2182 = vpack.c.b16 %v2074, %v2068
    %v2183 = vpack.c.b16 %v2075, %v2069
    %v2184 = vpack.c.b16 %v2076, %v2070
    %v2185 = vpack.c.b16 %v2077, %v2071
    %v2186 = vpack.c.b16 %v2078, %v2072
    %v2187 = vpack.c.b16 %v2085, %v2079
    %v2188 = vpack.c.b16 %v2086, %v2080
    %v2189 = vpack.c.b16 %v2087, %v2081
    %v2190 = vpack.c.b16 %v2088, %v2082
    %v2191 = vpack.c.b16 %v2089, %v2083
    %v2192 = vpack.c.b16 %v2090, %v2084
    %v2193 = vpack.c.b16 %v2091, %v2091
    %v2194 = vpack.c.b16 %v2092, %v2092
    %v2195 = vpack.c.b16 %v2093, %v2093
    %v2196 = vpack.c.b16 %v2094, %v2094
    %v2197 = vpack.c.b16 %v2095, %v2095
    %v2198 = vpack.c.b16 %v2096, %v2096
    %vm2284 = vcmask 941056
    %v2286 = vsel %vm2284, %v2102, 0
    %v2289 = vsel %vm2284, %v2108, 0
    %v2292 = vsel %vm2284, %v2114, 0
    %v2295 = vsel %vm2284, %v2120, 0
    %v2298 = vsel %vm2284, %v2126, 0
    %v2301 = vsel %vm2284, %v2132, 0
    %v2304 = vsel %vm2284, %v2138, 0
    %v2307 = vsel %vm2284, %v2144, 0
    %v2310 = vsel %vm2284, %v2150, 0
    %v2313 = vsel %vm2284, %v2156, 0
    %v2316 = vsel %vm2284, %v2162, 0
    %v2319 = vsel %vm2284, %v2168, 0
    %v2322 = vsel %vm2284, %v2174, 0
    %v2325 = vsel %vm2284, %v2180, 0
    %v2328 = vsel %vm2284, %v2186, 0
    %v2331 = vsel %vm2284, %v2192, 0
    %v2334 = vsel %vm2284, %v2198, 0
    %vm2336 = vcmask 1040384
    %vm2337 = vcmask 1041408
    %v2338 = vsel %vm2336, 4294967295, 65535
    %v2339 = vsel %vm2337, %v2338, 0
    %v2341 = vand.u32 %v1700, %v2339
    %2343 = vmatpush.bf16.msra.mxu0 %v1660
    %2344 = vmatpush.bf16.msra.mxu0 %v1659
    %2345 = vmatpush.bf16.msra.mxu0 %v1658
    %2346 = vmatpush.bf16.msra.mxu0 %v1657
    %2347 = vmatpush.bf16.msra.mxu0 %v1656
    %2348 = vmatpush.bf16.msra.mxu0 %v1655
    %2349 = vmatpush.bf16.msra.mxu0 %v1654
    %2350 = vmatpush.bf16.msra.mxu0 %v1653
    %2351 = vmatmul.bf16.gmra.mxu0 %v2097
    %v2352 = vpop.f32.mrf.mxu0
    %v2353 = vadd.f32 0.0, %v2352
    %v2354 = vpop.f32.mrf.mxu0
    %v2355 = vadd.f32 0.0, %v2354
    %2356 = vmatmul.bf16.gmra.mxu0 %v2103
    %v2357 = vpop.f32.mrf.mxu0
    %v2358 = vadd.f32 0.0, %v2357
    %v2359 = vpop.f32.mrf.mxu0
    %v2360 = vadd.f32 0.0, %v2359
    %2361 = vmatmul.bf16.gmra.mxu0 %v2109
    %v2362 = vpop.f32.mrf.mxu0
    %v2363 = vadd.f32 0.0, %v2362
    %v2364 = vpop.f32.mrf.mxu0
    %v2365 = vadd.f32 0.0, %v2364
    %2366 = vmatmul.bf16.gmra.mxu0 %v2115
    %v2367 = vpop.f32.mrf.mxu0
    %v2368 = vadd.f32 0.0, %v2367
    %v2369 = vpop.f32.mrf.mxu0
    %v2370 = vadd.f32 0.0, %v2369
    %2371 = vmatmul.bf16.gmra.mxu0 %v2121
    %v2372 = vpop.f32.mrf.mxu0
    %v2373 = vadd.f32 0.0, %v2372
    %v2374 = vpop.f32.mrf.mxu0
    %v2375 = vadd.f32 0.0, %v2374
    %2376 = vmatmul.bf16.gmra.mxu0 %v2127
    %v2377 = vpop.f32.mrf.mxu0
    %v2378 = vadd.f32 0.0, %v2377
    %v2379 = vpop.f32.mrf.mxu0
    %v2380 = vadd.f32 0.0, %v2379
    %2381 = vmatmul.bf16.gmra.mxu0 %v2133
    %v2382 = vpop.f32.mrf.mxu0
    %v2383 = vadd.f32 0.0, %v2382
    %v2384 = vpop.f32.mrf.mxu0
    %v2385 = vadd.f32 0.0, %v2384
    %2386 = vmatmul.bf16.gmra.mxu0 %v2139
    %v2387 = vpop.f32.mrf.mxu0
    %v2388 = vadd.f32 0.0, %v2387
    %v2389 = vpop.f32.mrf.mxu0
    %v2390 = vadd.f32 0.0, %v2389
    %2391 = vmatmul.bf16.gmra.mxu0 %v2145
    %v2392 = vpop.f32.mrf.mxu0
    %v2393 = vadd.f32 0.0, %v2392
    %v2394 = vpop.f32.mrf.mxu0
    %v2395 = vadd.f32 0.0, %v2394
    %2396 = vmatmul.bf16.gmra.mxu0 %v2151
    %v2397 = vpop.f32.mrf.mxu0
    %v2398 = vadd.f32 0.0, %v2397
    %v2399 = vpop.f32.mrf.mxu0
    %v2400 = vadd.f32 0.0, %v2399
    %2401 = vmatmul.bf16.gmra.mxu0 %v2157
    %v2402 = vpop.f32.mrf.mxu0
    %v2403 = vadd.f32 0.0, %v2402
    %v2404 = vpop.f32.mrf.mxu0
    %v2405 = vadd.f32 0.0, %v2404
    %2406 = vmatmul.bf16.gmra.mxu0 %v2163
    %v2407 = vpop.f32.mrf.mxu0
    %v2408 = vadd.f32 0.0, %v2407
    %v2409 = vpop.f32.mrf.mxu0
    %v2410 = vadd.f32 0.0, %v2409
    %2411 = vmatmul.bf16.gmra.mxu0 %v2169
    %v2412 = vpop.f32.mrf.mxu0
    %v2413 = vadd.f32 0.0, %v2412
    %v2414 = vpop.f32.mrf.mxu0
    %v2415 = vadd.f32 0.0, %v2414
    %2416 = vmatmul.bf16.gmra.mxu0 %v2175
    %v2417 = vpop.f32.mrf.mxu0
    %v2418 = vadd.f32 0.0, %v2417
    %v2419 = vpop.f32.mrf.mxu0
    %v2420 = vadd.f32 0.0, %v2419
    %2421 = vmatmul.bf16.gmra.mxu0 %v2181
    %v2422 = vpop.f32.mrf.mxu0
    %v2423 = vadd.f32 0.0, %v2422
    %v2424 = vpop.f32.mrf.mxu0
    %v2425 = vadd.f32 0.0, %v2424
    %2426 = vmatmul.bf16.gmra.mxu0 %v2187
    %v2427 = vpop.f32.mrf.mxu0
    %v2428 = vadd.f32 0.0, %v2427
    %v2429 = vpop.f32.mrf.mxu0
    %v2430 = vadd.f32 0.0, %v2429
    %2431 = vmatmul.bf16.gmra.mxu0 %v2193
    %v2432 = vpop.f32.mrf.mxu0
    %v2433 = vadd.f32 0.0, %v2432
    %v2434 = vpop.f32.mrf.mxu0
    %2435 = vdwg.mxu0
    %2436 = vmatpush.bf16.msra.mxu0 %v1668
    %2437 = vmatpush.bf16.msra.mxu0 %v1667
    %2438 = vmatpush.bf16.msra.mxu0 %v1666
    %2439 = vmatpush.bf16.msra.mxu0 %v1665
    %2440 = vmatpush.bf16.msra.mxu0 %v1664
    %2441 = vmatpush.bf16.msra.mxu0 %v1663
    %2442 = vmatpush.bf16.msra.mxu0 %v1662
    %2443 = vmatpush.bf16.msra.mxu0 %v1661
    %2444 = vmatmul.bf16.gmra.mxu0 %v2098
    %v2445 = vpop.f32.mrf.mxu0
    %v2446 = vadd.f32 %v2353, %v2445
    %v2447 = vpop.f32.mrf.mxu0
    %v2448 = vadd.f32 %v2355, %v2447
    %2449 = vmatmul.bf16.gmra.mxu0 %v2104
    %v2450 = vpop.f32.mrf.mxu0
    %v2451 = vadd.f32 %v2358, %v2450
    %v2452 = vpop.f32.mrf.mxu0
    %v2453 = vadd.f32 %v2360, %v2452
    %2454 = vmatmul.bf16.gmra.mxu0 %v2110
    %v2455 = vpop.f32.mrf.mxu0
    %v2456 = vadd.f32 %v2363, %v2455
    %v2457 = vpop.f32.mrf.mxu0
    %v2458 = vadd.f32 %v2365, %v2457
    %2459 = vmatmul.bf16.gmra.mxu0 %v2116
    %v2460 = vpop.f32.mrf.mxu0
    %v2461 = vadd.f32 %v2368, %v2460
    %v2462 = vpop.f32.mrf.mxu0
    %v2463 = vadd.f32 %v2370, %v2462
    %2464 = vmatmul.bf16.gmra.mxu0 %v2122
    %v2465 = vpop.f32.mrf.mxu0
    %v2466 = vadd.f32 %v2373, %v2465
    %v2467 = vpop.f32.mrf.mxu0
    %v2468 = vadd.f32 %v2375, %v2467
    %2469 = vmatmul.bf16.gmra.mxu0 %v2128
    %v2470 = vpop.f32.mrf.mxu0
    %v2471 = vadd.f32 %v2378, %v2470
    %v2472 = vpop.f32.mrf.mxu0
    %v2473 = vadd.f32 %v2380, %v2472
    %2474 = vmatmul.bf16.gmra.mxu0 %v2134
    %v2475 = vpop.f32.mrf.mxu0
    %v2476 = vadd.f32 %v2383, %v2475
    %v2477 = vpop.f32.mrf.mxu0
    %v2478 = vadd.f32 %v2385, %v2477
    %2479 = vmatmul.bf16.gmra.mxu0 %v2140
    %v2480 = vpop.f32.mrf.mxu0
    %v2481 = vadd.f32 %v2388, %v2480
    %v2482 = vpop.f32.mrf.mxu0
    %v2483 = vadd.f32 %v2390, %v2482
    %2484 = vmatmul.bf16.gmra.mxu0 %v2146
    %v2485 = vpop.f32.mrf.mxu0
    %v2486 = vadd.f32 %v2393, %v2485
    %v2487 = vpop.f32.mrf.mxu0
    %v2488 = vadd.f32 %v2395, %v2487
    %2489 = vmatmul.bf16.gmra.mxu0 %v2152
    %v2490 = vpop.f32.mrf.mxu0
    %v2491 = vadd.f32 %v2398, %v2490
    %v2492 = vpop.f32.mrf.mxu0
    %v2493 = vadd.f32 %v2400, %v2492
    %2494 = vmatmul.bf16.gmra.mxu0 %v2158
    %v2495 = vpop.f32.mrf.mxu0
    %v2496 = vadd.f32 %v2403, %v2495
    %v2497 = vpop.f32.mrf.mxu0
    %v2498 = vadd.f32 %v2405, %v2497
    %2499 = vmatmul.bf16.gmra.mxu0 %v2164
    %v2500 = vpop.f32.mrf.mxu0
    %v2501 = vadd.f32 %v2408, %v2500
    %v2502 = vpop.f32.mrf.mxu0
    %v2503 = vadd.f32 %v2410, %v2502
    %2504 = vmatmul.bf16.gmra.mxu0 %v2170
    %v2505 = vpop.f32.mrf.mxu0
    %v2506 = vadd.f32 %v2413, %v2505
    %v2507 = vpop.f32.mrf.mxu0
    %v2508 = vadd.f32 %v2415, %v2507
    %2509 = vmatmul.bf16.gmra.mxu0 %v2176
    %v2510 = vpop.f32.mrf.mxu0
    %v2511 = vadd.f32 %v2418, %v2510
    %v2512 = vpop.f32.mrf.mxu0
    %v2513 = vadd.f32 %v2420, %v2512
    %2514 = vmatmul.bf16.gmra.mxu0 %v2182
    %v2515 = vpop.f32.mrf.mxu0
    %v2516 = vadd.f32 %v2423, %v2515
    %v2517 = vpop.f32.mrf.mxu0
    %v2518 = vadd.f32 %v2425, %v2517
    %2519 = vmatmul.bf16.gmra.mxu0 %v2188
    %v2520 = vpop.f32.mrf.mxu0
    %v2521 = vadd.f32 %v2428, %v2520
    %v2522 = vpop.f32.mrf.mxu0
    %v2523 = vadd.f32 %v2430, %v2522
    %2524 = vmatmul.bf16.gmra.mxu0 %v2194
    %v2525 = vpop.f32.mrf.mxu0
    %v2526 = vadd.f32 %v2433, %v2525
    %v2527 = vpop.f32.mrf.mxu0
    %2528 = vdwg.mxu0
    %2529 = vmatpush.bf16.msra.mxu0 %v1676
    %2530 = vmatpush.bf16.msra.mxu0 %v1675
    %2531 = vmatpush.bf16.msra.mxu0 %v1674
    %2532 = vmatpush.bf16.msra.mxu0 %v1673
    %2533 = vmatpush.bf16.msra.mxu0 %v1672
    %2534 = vmatpush.bf16.msra.mxu0 %v1671
    %2535 = vmatpush.bf16.msra.mxu0 %v1670
    %2536 = vmatpush.bf16.msra.mxu0 %v1669
    %2537 = vmatmul.bf16.gmra.mxu0 %v2099
    %v2538 = vpop.f32.mrf.mxu0
    %v2539 = vadd.f32 %v2446, %v2538
    %v2540 = vpop.f32.mrf.mxu0
    %v2541 = vadd.f32 %v2448, %v2540
    %2542 = vmatmul.bf16.gmra.mxu0 %v2105
    %v2543 = vpop.f32.mrf.mxu0
    %v2544 = vadd.f32 %v2451, %v2543
    %v2545 = vpop.f32.mrf.mxu0
    %v2546 = vadd.f32 %v2453, %v2545
    %2547 = vmatmul.bf16.gmra.mxu0 %v2111
    %v2548 = vpop.f32.mrf.mxu0
    %v2549 = vadd.f32 %v2456, %v2548
    %v2550 = vpop.f32.mrf.mxu0
    %v2551 = vadd.f32 %v2458, %v2550
    %2552 = vmatmul.bf16.gmra.mxu0 %v2117
    %v2553 = vpop.f32.mrf.mxu0
    %v2554 = vadd.f32 %v2461, %v2553
    %v2555 = vpop.f32.mrf.mxu0
    %v2556 = vadd.f32 %v2463, %v2555
    %2557 = vmatmul.bf16.gmra.mxu0 %v2123
    %v2558 = vpop.f32.mrf.mxu0
    %v2559 = vadd.f32 %v2466, %v2558
    %v2560 = vpop.f32.mrf.mxu0
    %v2561 = vadd.f32 %v2468, %v2560
    %2562 = vmatmul.bf16.gmra.mxu0 %v2129
    %v2563 = vpop.f32.mrf.mxu0
    %v2564 = vadd.f32 %v2471, %v2563
    %v2565 = vpop.f32.mrf.mxu0
    %v2566 = vadd.f32 %v2473, %v2565
    %2567 = vmatmul.bf16.gmra.mxu0 %v2135
    %v2568 = vpop.f32.mrf.mxu0
    %v2569 = vadd.f32 %v2476, %v2568
    %v2570 = vpop.f32.mrf.mxu0
    %v2571 = vadd.f32 %v2478, %v2570
    %2572 = vmatmul.bf16.gmra.mxu0 %v2141
    %v2573 = vpop.f32.mrf.mxu0
    %v2574 = vadd.f32 %v2481, %v2573
    %v2575 = vpop.f32.mrf.mxu0
    %v2576 = vadd.f32 %v2483, %v2575
    %2577 = vmatmul.bf16.gmra.mxu0 %v2147
    %v2578 = vpop.f32.mrf.mxu0
    %v2579 = vadd.f32 %v2486, %v2578
    %v2580 = vpop.f32.mrf.mxu0
    %v2581 = vadd.f32 %v2488, %v2580
    %2582 = vmatmul.bf16.gmra.mxu0 %v2153
    %v2583 = vpop.f32.mrf.mxu0
    %v2584 = vadd.f32 %v2491, %v2583
    %v2585 = vpop.f32.mrf.mxu0
    %v2586 = vadd.f32 %v2493, %v2585
    %2587 = vmatmul.bf16.gmra.mxu0 %v2159
    %v2588 = vpop.f32.mrf.mxu0
    %v2589 = vadd.f32 %v2496, %v2588
    %v2590 = vpop.f32.mrf.mxu0
    %v2591 = vadd.f32 %v2498, %v2590
    %2592 = vmatmul.bf16.gmra.mxu0 %v2165
    %v2593 = vpop.f32.mrf.mxu0
    %v2594 = vadd.f32 %v2501, %v2593
    %v2595 = vpop.f32.mrf.mxu0
    %v2596 = vadd.f32 %v2503, %v2595
    %2597 = vmatmul.bf16.gmra.mxu0 %v2171
    %v2598 = vpop.f32.mrf.mxu0
    %v2599 = vadd.f32 %v2506, %v2598
    %v2600 = vpop.f32.mrf.mxu0
    %v2601 = vadd.f32 %v2508, %v2600
    %2602 = vmatmul.bf16.gmra.mxu0 %v2177
    %v2603 = vpop.f32.mrf.mxu0
    %v2604 = vadd.f32 %v2511, %v2603
    %v2605 = vpop.f32.mrf.mxu0
    %v2606 = vadd.f32 %v2513, %v2605
    %2607 = vmatmul.bf16.gmra.mxu0 %v2183
    %v2608 = vpop.f32.mrf.mxu0
    %v2609 = vadd.f32 %v2516, %v2608
    %v2610 = vpop.f32.mrf.mxu0
    %v2611 = vadd.f32 %v2518, %v2610
    %2612 = vmatmul.bf16.gmra.mxu0 %v2189
    %v2613 = vpop.f32.mrf.mxu0
    %v2614 = vadd.f32 %v2521, %v2613
    %v2615 = vpop.f32.mrf.mxu0
    %v2616 = vadd.f32 %v2523, %v2615
    %2617 = vmatmul.bf16.gmra.mxu0 %v2195
    %v2618 = vpop.f32.mrf.mxu0
    %v2619 = vadd.f32 %v2526, %v2618
    %v2620 = vpop.f32.mrf.mxu0
    %2621 = vdwg.mxu0
    %2622 = vmatpush.bf16.msra.mxu0 %v1684
    %2623 = vmatpush.bf16.msra.mxu0 %v1683
    %2624 = vmatpush.bf16.msra.mxu0 %v1682
    %2625 = vmatpush.bf16.msra.mxu0 %v1681
    %2626 = vmatpush.bf16.msra.mxu0 %v1680
    %2627 = vmatpush.bf16.msra.mxu0 %v1679
    %2628 = vmatpush.bf16.msra.mxu0 %v1678
    %2629 = vmatpush.bf16.msra.mxu0 %v1677
    %2630 = vmatmul.bf16.gmra.mxu0 %v2100
    %v2631 = vpop.f32.mrf.mxu0
    %v2632 = vadd.f32 %v2539, %v2631
    %v2633 = vpop.f32.mrf.mxu0
    %v2634 = vadd.f32 %v2541, %v2633
    %2635 = vmatmul.bf16.gmra.mxu0 %v2106
    %v2636 = vpop.f32.mrf.mxu0
    %v2637 = vadd.f32 %v2544, %v2636
    %v2638 = vpop.f32.mrf.mxu0
    %v2639 = vadd.f32 %v2546, %v2638
    %2640 = vmatmul.bf16.gmra.mxu0 %v2112
    %v2641 = vpop.f32.mrf.mxu0
    %v2642 = vadd.f32 %v2549, %v2641
    %v2643 = vpop.f32.mrf.mxu0
    %v2644 = vadd.f32 %v2551, %v2643
    %2645 = vmatmul.bf16.gmra.mxu0 %v2118
    %v2646 = vpop.f32.mrf.mxu0
    %v2647 = vadd.f32 %v2554, %v2646
    %v2648 = vpop.f32.mrf.mxu0
    %v2649 = vadd.f32 %v2556, %v2648
    %2650 = vmatmul.bf16.gmra.mxu0 %v2124
    %v2651 = vpop.f32.mrf.mxu0
    %v2652 = vadd.f32 %v2559, %v2651
    %v2653 = vpop.f32.mrf.mxu0
    %v2654 = vadd.f32 %v2561, %v2653
    %2655 = vmatmul.bf16.gmra.mxu0 %v2130
    %v2656 = vpop.f32.mrf.mxu0
    %v2657 = vadd.f32 %v2564, %v2656
    %v2658 = vpop.f32.mrf.mxu0
    %v2659 = vadd.f32 %v2566, %v2658
    %2660 = vmatmul.bf16.gmra.mxu0 %v2136
    %v2661 = vpop.f32.mrf.mxu0
    %v2662 = vadd.f32 %v2569, %v2661
    %v2663 = vpop.f32.mrf.mxu0
    %v2664 = vadd.f32 %v2571, %v2663
    %2665 = vmatmul.bf16.gmra.mxu0 %v2142
    %v2666 = vpop.f32.mrf.mxu0
    %v2667 = vadd.f32 %v2574, %v2666
    %v2668 = vpop.f32.mrf.mxu0
    %v2669 = vadd.f32 %v2576, %v2668
    %2670 = vmatmul.bf16.gmra.mxu0 %v2148
    %v2671 = vpop.f32.mrf.mxu0
    %v2672 = vadd.f32 %v2579, %v2671
    %v2673 = vpop.f32.mrf.mxu0
    %v2674 = vadd.f32 %v2581, %v2673
    %2675 = vmatmul.bf16.gmra.mxu0 %v2154
    %v2676 = vpop.f32.mrf.mxu0
    %v2677 = vadd.f32 %v2584, %v2676
    %v2678 = vpop.f32.mrf.mxu0
    %v2679 = vadd.f32 %v2586, %v2678
    %2680 = vmatmul.bf16.gmra.mxu0 %v2160
    %v2681 = vpop.f32.mrf.mxu0
    %v2682 = vadd.f32 %v2589, %v2681
    %v2683 = vpop.f32.mrf.mxu0
    %v2684 = vadd.f32 %v2591, %v2683
    %2685 = vmatmul.bf16.gmra.mxu0 %v2166
    %v2686 = vpop.f32.mrf.mxu0
    %v2687 = vadd.f32 %v2594, %v2686
    %v2688 = vpop.f32.mrf.mxu0
    %v2689 = vadd.f32 %v2596, %v2688
    %2690 = vmatmul.bf16.gmra.mxu0 %v2172
    %v2691 = vpop.f32.mrf.mxu0
    %v2692 = vadd.f32 %v2599, %v2691
    %v2693 = vpop.f32.mrf.mxu0
    %v2694 = vadd.f32 %v2601, %v2693
    %2695 = vmatmul.bf16.gmra.mxu0 %v2178
    %v2696 = vpop.f32.mrf.mxu0
    %v2697 = vadd.f32 %v2604, %v2696
    %v2698 = vpop.f32.mrf.mxu0
    %v2699 = vadd.f32 %v2606, %v2698
    %2700 = vmatmul.bf16.gmra.mxu0 %v2184
    %v2701 = vpop.f32.mrf.mxu0
    %v2702 = vadd.f32 %v2609, %v2701
    %v2703 = vpop.f32.mrf.mxu0
    %v2704 = vadd.f32 %v2611, %v2703
    %2705 = vmatmul.bf16.gmra.mxu0 %v2190
    %v2706 = vpop.f32.mrf.mxu0
    %v2707 = vadd.f32 %v2614, %v2706
    %v2708 = vpop.f32.mrf.mxu0
    %v2709 = vadd.f32 %v2616, %v2708
    %2710 = vmatmul.bf16.gmra.mxu0 %v2196
    %v2711 = vpop.f32.mrf.mxu0
    %v2712 = vadd.f32 %v2619, %v2711
    %v2713 = vpop.f32.mrf.mxu0
    %2714 = vdwg.mxu0
    %2715 = vmatpush.bf16.msra.mxu0 %v1692
    %2716 = vmatpush.bf16.msra.mxu0 %v1691
    %2717 = vmatpush.bf16.msra.mxu0 %v1690
    %2718 = vmatpush.bf16.msra.mxu0 %v1689
    %2719 = vmatpush.bf16.msra.mxu0 %v1688
    %2720 = vmatpush.bf16.msra.mxu0 %v1687
    %2721 = vmatpush.bf16.msra.mxu0 %v1686
    %2722 = vmatpush.bf16.msra.mxu0 %v1685
    %2723 = vmatmul.bf16.gmra.mxu0 %v2101
    %v2724 = vpop.f32.mrf.mxu0
    %v2725 = vadd.f32 %v2632, %v2724
    %v2726 = vpop.f32.mrf.mxu0
    %v2727 = vadd.f32 %v2634, %v2726
    %2728 = vmatmul.bf16.gmra.mxu0 %v2107
    %v2729 = vpop.f32.mrf.mxu0
    %v2730 = vadd.f32 %v2637, %v2729
    %v2731 = vpop.f32.mrf.mxu0
    %v2732 = vadd.f32 %v2639, %v2731
    %2733 = vmatmul.bf16.gmra.mxu0 %v2113
    %v2734 = vpop.f32.mrf.mxu0
    %v2735 = vadd.f32 %v2642, %v2734
    %v2736 = vpop.f32.mrf.mxu0
    %v2737 = vadd.f32 %v2644, %v2736
    %2738 = vmatmul.bf16.gmra.mxu0 %v2119
    %v2739 = vpop.f32.mrf.mxu0
    %v2740 = vadd.f32 %v2647, %v2739
    %v2741 = vpop.f32.mrf.mxu0
    %v2742 = vadd.f32 %v2649, %v2741
    %2743 = vmatmul.bf16.gmra.mxu0 %v2125
    %v2744 = vpop.f32.mrf.mxu0
    %v2745 = vadd.f32 %v2652, %v2744
    %v2746 = vpop.f32.mrf.mxu0
    %v2747 = vadd.f32 %v2654, %v2746
    %2748 = vmatmul.bf16.gmra.mxu0 %v2131
    %v2749 = vpop.f32.mrf.mxu0
    %v2750 = vadd.f32 %v2657, %v2749
    %v2751 = vpop.f32.mrf.mxu0
    %v2752 = vadd.f32 %v2659, %v2751
    %2753 = vmatmul.bf16.gmra.mxu0 %v2137
    %v2754 = vpop.f32.mrf.mxu0
    %v2755 = vadd.f32 %v2662, %v2754
    %v2756 = vpop.f32.mrf.mxu0
    %v2757 = vadd.f32 %v2664, %v2756
    %2758 = vmatmul.bf16.gmra.mxu0 %v2143
    %v2759 = vpop.f32.mrf.mxu0
    %v2760 = vadd.f32 %v2667, %v2759
    %v2761 = vpop.f32.mrf.mxu0
    %v2762 = vadd.f32 %v2669, %v2761
    %2763 = vmatmul.bf16.gmra.mxu0 %v2149
    %v2764 = vpop.f32.mrf.mxu0
    %v2765 = vadd.f32 %v2672, %v2764
    %v2766 = vpop.f32.mrf.mxu0
    %v2767 = vadd.f32 %v2674, %v2766
    %2768 = vmatmul.bf16.gmra.mxu0 %v2155
    %v2769 = vpop.f32.mrf.mxu0
    %v2770 = vadd.f32 %v2677, %v2769
    %v2771 = vpop.f32.mrf.mxu0
    %v2772 = vadd.f32 %v2679, %v2771
    %2773 = vmatmul.bf16.gmra.mxu0 %v2161
    %v2774 = vpop.f32.mrf.mxu0
    %v2775 = vadd.f32 %v2682, %v2774
    %v2776 = vpop.f32.mrf.mxu0
    %v2777 = vadd.f32 %v2684, %v2776
    %2778 = vmatmul.bf16.gmra.mxu0 %v2167
    %v2779 = vpop.f32.mrf.mxu0
    %v2780 = vadd.f32 %v2687, %v2779
    %v2781 = vpop.f32.mrf.mxu0
    %v2782 = vadd.f32 %v2689, %v2781
    %2783 = vmatmul.bf16.gmra.mxu0 %v2173
    %v2784 = vpop.f32.mrf.mxu0
    %v2785 = vadd.f32 %v2692, %v2784
    %v2786 = vpop.f32.mrf.mxu0
    %v2787 = vadd.f32 %v2694, %v2786
    %2788 = vmatmul.bf16.gmra.mxu0 %v2179
    %v2789 = vpop.f32.mrf.mxu0
    %v2790 = vadd.f32 %v2697, %v2789
    %v2791 = vpop.f32.mrf.mxu0
    %v2792 = vadd.f32 %v2699, %v2791
    %2793 = vmatmul.bf16.gmra.mxu0 %v2185
    %v2794 = vpop.f32.mrf.mxu0
    %v2795 = vadd.f32 %v2702, %v2794
    %v2796 = vpop.f32.mrf.mxu0
    %v2797 = vadd.f32 %v2704, %v2796
    %2798 = vmatmul.bf16.gmra.mxu0 %v2191
    %v2799 = vpop.f32.mrf.mxu0
    %v2800 = vadd.f32 %v2707, %v2799
    %v2801 = vpop.f32.mrf.mxu0
    %v2802 = vadd.f32 %v2709, %v2801
    %2803 = vmatmul.bf16.gmra.mxu0 %v2197
    %v2804 = vpop.f32.mrf.mxu0
    %v2805 = vadd.f32 %v2712, %v2804
    %v2806 = vpop.f32.mrf.mxu0
    %2807 = vdwg.mxu0
    %2808 = vmatpush.bf16.msra.mxu0 %v2341
    %2809 = vmatpush.bf16.msra.mxu0 %v1699
    %2810 = vmatpush.bf16.msra.mxu0 %v1698
    %2811 = vmatpush.bf16.msra.mxu0 %v1697
    %2812 = vmatpush.bf16.msra.mxu0 %v1696
    %2813 = vmatpush.bf16.msra.mxu0 %v1695
    %2814 = vmatpush.bf16.msra.mxu0 %v1694
    %2815 = vmatpush.bf16.msra.mxu0 %v1693
    %2816 = vmatmul.bf16.gmra.mxu0 %v2286
    %v2817 = vpop.f32.mrf.mxu0
    %v2818 = vadd.f32 %v2725, %v2817
    %v2819 = vpop.f32.mrf.mxu0
    %v2820 = vadd.f32 %v2727, %v2819
    %2821 = vmatmul.bf16.gmra.mxu0 %v2289
    %v2822 = vpop.f32.mrf.mxu0
    %v2823 = vadd.f32 %v2730, %v2822
    %v2824 = vpop.f32.mrf.mxu0
    %v2825 = vadd.f32 %v2732, %v2824
    %2826 = vmatmul.bf16.gmra.mxu0 %v2292
    %v2827 = vpop.f32.mrf.mxu0
    %v2828 = vadd.f32 %v2735, %v2827
    %v2829 = vpop.f32.mrf.mxu0
    %v2830 = vadd.f32 %v2737, %v2829
    %2831 = vmatmul.bf16.gmra.mxu0 %v2295
    %v2832 = vpop.f32.mrf.mxu0
    %v2833 = vadd.f32 %v2740, %v2832
    %v2834 = vpop.f32.mrf.mxu0
    %v2835 = vadd.f32 %v2742, %v2834
    %2836 = vmatmul.bf16.gmra.mxu0 %v2298
    %v2837 = vpop.f32.mrf.mxu0
    %v2838 = vadd.f32 %v2745, %v2837
    %v2839 = vpop.f32.mrf.mxu0
    %v2840 = vadd.f32 %v2747, %v2839
    %2841 = vmatmul.bf16.gmra.mxu0 %v2301
    %v2842 = vpop.f32.mrf.mxu0
    %v2843 = vadd.f32 %v2750, %v2842
    %v2844 = vpop.f32.mrf.mxu0
    %v2845 = vadd.f32 %v2752, %v2844
    %2846 = vmatmul.bf16.gmra.mxu0 %v2304
    %v2847 = vpop.f32.mrf.mxu0
    %v2848 = vadd.f32 %v2755, %v2847
    %v2849 = vpop.f32.mrf.mxu0
    %v2850 = vadd.f32 %v2757, %v2849
    %2851 = vmatmul.bf16.gmra.mxu0 %v2307
    %v2852 = vpop.f32.mrf.mxu0
    %v2853 = vadd.f32 %v2760, %v2852
    %v2854 = vpop.f32.mrf.mxu0
    %v2855 = vadd.f32 %v2762, %v2854
    %2856 = vmatmul.bf16.gmra.mxu0 %v2310
    %v2857 = vpop.f32.mrf.mxu0
    %v2858 = vadd.f32 %v2765, %v2857
    %v2859 = vpop.f32.mrf.mxu0
    %v2860 = vadd.f32 %v2767, %v2859
    %2861 = vmatmul.bf16.gmra.mxu0 %v2313
    %v2862 = vpop.f32.mrf.mxu0
    %v2863 = vadd.f32 %v2770, %v2862
    %v2864 = vpop.f32.mrf.mxu0
    %v2865 = vadd.f32 %v2772, %v2864
    %2866 = vmatmul.bf16.gmra.mxu0 %v2316
    %v2867 = vpop.f32.mrf.mxu0
    %v2868 = vadd.f32 %v2775, %v2867
    %v2869 = vpop.f32.mrf.mxu0
    %v2870 = vadd.f32 %v2777, %v2869
    %2871 = vmatmul.bf16.gmra.mxu0 %v2319
    %v2872 = vpop.f32.mrf.mxu0
    %v2873 = vadd.f32 %v2780, %v2872
    %v2874 = vpop.f32.mrf.mxu0
    %v2875 = vadd.f32 %v2782, %v2874
    %2876 = vmatmul.bf16.gmra.mxu0 %v2322
    %v2877 = vpop.f32.mrf.mxu0
    %v2878 = vadd.f32 %v2785, %v2877
    %v2879 = vpop.f32.mrf.mxu0
    %v2880 = vadd.f32 %v2787, %v2879
    %2881 = vmatmul.bf16.gmra.mxu0 %v2325
    %v2882 = vpop.f32.mrf.mxu0
    %v2883 = vadd.f32 %v2790, %v2882
    %v2884 = vpop.f32.mrf.mxu0
    %v2885 = vadd.f32 %v2792, %v2884
    %2886 = vmatmul.bf16.gmra.mxu0 %v2328
    %v2887 = vpop.f32.mrf.mxu0
    %v2888 = vadd.f32 %v2795, %v2887
    %v2889 = vpop.f32.mrf.mxu0
    %v2890 = vadd.f32 %v2797, %v2889
    %2891 = vmatmul.bf16.gmra.mxu0 %v2331
    %v2892 = vpop.f32.mrf.mxu0
    %v2893 = vadd.f32 %v2800, %v2892
    %v2894 = vpop.f32.mrf.mxu0
    %v2895 = vadd.f32 %v2802, %v2894
    %2896 = vmatmul.bf16.gmra.mxu0 %v2334
    %v2897 = vpop.f32.mrf.mxu0
    %v2898 = vadd.f32 %v2805, %v2897
    %v2899 = vpop.f32.mrf.mxu0
    %2900 = vdwg.mxu0
    %v2901 = vpack.c.bf16 %v2818, %v2818
    %v2902 = vpack.c.bf16 %v2820, %v2820
    %v2903 = vpack.c.bf16 %v2823, %v2823
    %v2904 = vpack.c.bf16 %v2825, %v2825
    %v2905 = vpack.c.bf16 %v2828, %v2828
    %v2906 = vpack.c.bf16 %v2830, %v2830
    %v2907 = vpack.c.bf16 %v2833, %v2833
    %v2908 = vpack.c.bf16 %v2835, %v2835
    %v2909 = vpack.c.bf16 %v2838, %v2838
    %v2910 = vpack.c.bf16 %v2840, %v2840
    %v2911 = vpack.c.bf16 %v2843, %v2843
    %v2912 = vpack.c.bf16 %v2845, %v2845
    %v2913 = vpack.c.bf16 %v2848, %v2848
    %v2914 = vpack.c.bf16 %v2850, %v2850
    %v2915 = vpack.c.bf16 %v2853, %v2853
    %v2916 = vpack.c.bf16 %v2855, %v2855
    %v2917 = vpack.c.bf16 %v2858, %v2858
    %v2918 = vpack.c.bf16 %v2860, %v2860
    %v2919 = vpack.c.bf16 %v2863, %v2863
    %v2920 = vpack.c.bf16 %v2865, %v2865
    %v2921 = vpack.c.bf16 %v2868, %v2868
    %v2922 = vpack.c.bf16 %v2870, %v2870
    %v2923 = vpack.c.bf16 %v2873, %v2873
    %v2924 = vpack.c.bf16 %v2875, %v2875
    %v2925 = vpack.c.bf16 %v2878, %v2878
    %v2926 = vpack.c.bf16 %v2880, %v2880
    %v2927 = vpack.c.bf16 %v2883, %v2883
    %v2928 = vpack.c.bf16 %v2885, %v2885
    %v2929 = vpack.c.bf16 %v2888, %v2888
    %v2930 = vpack.c.bf16 %v2890, %v2890
    %v2931 = vpack.c.bf16 %v2893, %v2893
    %v2932 = vpack.c.bf16 %v2895, %v2895
    %v2933 = vpack.c.bf16 %v2898, %v2898
    %s2934 = smul.u32 %s19, 33
    %s2935 = smul.addr %s2934, 4
    %s2936 = scalar_lea.vmem %s4, %s2935
    %vm2937 = vcmask 257024
    %2938 = vst.msk [vmem:[%s2936] sm:$0xf] %vm2937, %v2901
    %2939 = vst.msk [vmem:[%s2936 + $0x4] sm:$0xf] %vm2937, %v2902
    %2940 = vst.msk [vmem:[%s2936 + $0x8] sm:$0xf] %vm2937, %v2903
    %2941 = vst.msk [vmem:[%s2936 + $0xc] sm:$0xf] %vm2937, %v2904
    %2942 = vst.msk [vmem:[%s2936 + $0x10] sm:$0xf] %vm2937, %v2905
    %2943 = vst.msk [vmem:[%s2936 + $0x14] sm:$0xf] %vm2937, %v2906
    %2944 = vst.msk [vmem:[%s2936 + $0x18] sm:$0xf] %vm2937, %v2907
    %2945 = vst.msk [vmem:[%s2936 + $0x1c] sm:$0xf] %vm2937, %v2908
    %2946 = vst.msk [vmem:[%s2936 + $0x20] sm:$0xf] %vm2937, %v2909
    %2947 = vst.msk [vmem:[%s2936 + $0x24] sm:$0xf] %vm2937, %v2910
    %2948 = vst.msk [vmem:[%s2936 + $0x28] sm:$0xf] %vm2937, %v2911
    %2949 = vst.msk [vmem:[%s2936 + $0x2c] sm:$0xf] %vm2937, %v2912
    %2950 = vst.msk [vmem:[%s2936 + $0x30] sm:$0xf] %vm2937, %v2913
    %2951 = vst.msk [vmem:[%s2936 + $0x34] sm:$0xf] %vm2937, %v2914
    %2952 = vst.msk [vmem:[%s2936 + $0x38] sm:$0xf] %vm2937, %v2915
    %2953 = vst.msk [vmem:[%s2936 + $0x3c] sm:$0xf] %vm2937, %v2916
    %2954 = vst.msk [vmem:[%s2936 + $0x40] sm:$0xf] %vm2937, %v2917
    %2955 = vst.msk [vmem:[%s2936 + $0x44] sm:$0xf] %vm2937, %v2918
    %2956 = vst.msk [vmem:[%s2936 + $0x48] sm:$0xf] %vm2937, %v2919
    %2957 = vst.msk [vmem:[%s2936 + $0x4c] sm:$0xf] %vm2937, %v2920
    %2958 = vst.msk [vmem:[%s2936 + $0x50] sm:$0xf] %vm2937, %v2921
    %2959 = vst.msk [vmem:[%s2936 + $0x54] sm:$0xf] %vm2937, %v2922
    %2960 = vst.msk [vmem:[%s2936 + $0x58] sm:$0xf] %vm2937, %v2923
    %2961 = vst.msk [vmem:[%s2936 + $0x5c] sm:$0xf] %vm2937, %v2924
    %2962 = vst.msk [vmem:[%s2936 + $0x60] sm:$0xf] %vm2937, %v2925
    %2963 = vst.msk [vmem:[%s2936 + $0x64] sm:$0xf] %vm2937, %v2926
    %2964 = vst.msk [vmem:[%s2936 + $0x68] sm:$0xf] %vm2937, %v2927
    %2965 = vst.msk [vmem:[%s2936 + $0x6c] sm:$0xf] %vm2937, %v2928
    %2966 = vst.msk [vmem:[%s2936 + $0x70] sm:$0xf] %vm2937, %v2929
    %2967 = vst.msk [vmem:[%s2936 + $0x74] sm:$0xf] %vm2937, %v2930
    %2968 = vst.msk [vmem:[%s2936 + $0x78] sm:$0xf] %vm2937, %v2931
    %2969 = vst.msk [vmem:[%s2936 + $0x7c] sm:$0xf] %vm2937, %v2932
    %vm2970 = vcmask 253952
    %2971 = vst.msk [vmem:[%s2936 + $0x80] sm:$0x1] %vm2970, %v2933
  $region22: #{convnet_forward.4} parent=0 // loop_footer
    %s23 = sadd.s32 1, %s19
  $region23: #{convnet_forward.4} parent=0 // loop_footer_branch
    %18 = sbr.rel target = $region19
  $region24: #{convnet_forward.4} parent=0 // loop_exit
    _
  // Predicated region
  $region25: #{convnet_forward.4} parent=0 // pred_check
    _
  $region26: #{convnet_forward.4} parent=0 // pred_check_branch
    %2973 = sbr.rel (0) target = $region28
  $region27: #{convnet_forward.4} parent=0 // pred_region
    _
  $region28: #{convnet_forward.4} parent=0 // pred_fallthru
    _
  // Predicated region
  $region29: #{convnet_forward.4} parent=0 // pred_check
    _
  $region30: #{convnet_forward.4} parent=0 // pred_check_branch
    %2975 = sbr.rel (0) target = $region32
  $region31: #{convnet_forward.4} parent=0 // pred_region
    _
  $region32: #{convnet_forward.4} parent=0 // pred_fallthru
    _

// kernel: convnet_forward.5
$region0: #{convnet_forward.5}
  #allocation0 [shape = 'u32[]', space=smem, size = 0x4, offset = 0x4, fixed_abs, tag = 'smem constant byte address 0x4 - core index']
  #allocation1 [shape = 'u32[72,128]{1,0:T(1,128)}', space=vmem, size = 0x9000, scoped, tag = 'internal scratch']
  #allocation2 [shape = 'f32[224,64]{1,0:T(8,128)}', space=vmem, size = 0x1c000, scoped, tag = 'scratch operand']
  %s0 = inlined_call_operand.vmem [shape: bf16[2,258,32], index: 0, kind: input, shape index: {}]
  %s1 = inlined_call_operand.vmem [shape: bf16[288,64], index: 1, kind: input, shape index: {}]
  %s2 = inlined_call_operand.vmem [shape: f32[1,64], index: 2, kind: input, shape index: {}]
  %s3 = inlined_call_operand.vmem [shape: bf16[83,207], index: 3, kind: input, shape index: {}]
  %s4 = inlined_call_operand.vmem [shape: bf16[2,83,64], index: 4, kind: output, shape index: {}]
  %s5 = sld [smem:[#allocation0]]
  $region33: #{convnet_forward.5} parent=0
    _
  %s7 = ssub.s32 1, %s5
  %s8 = scalar_select 0, %s7, %s5
  // Predicated region
  $region2: #{convnet_forward.5} parent=0 // pred_check
    _
  $region3: #{convnet_forward.5} parent=0 // pred_check_branch
    %10 = sbr.rel (0) target = $region5
  $region4: #{convnet_forward.5} parent=0 // pred_region
    _
  $region5: #{convnet_forward.5} parent=0 // pred_fallthru
    _
  // Predicated region
  $region6: #{convnet_forward.5} parent=0 // pred_check
    _
  $region7: #{convnet_forward.5} parent=0 // pred_check_branch
    %12 = sbr.rel (0) target = $region9
  $region8: #{convnet_forward.5} parent=0 // pred_region
    _
  $region9: #{convnet_forward.5} parent=0 // pred_fallthru
    _
  // Predicated region
  $region10: #{convnet_forward.5} parent=0 // pred_check
    _
  $region11: #{convnet_forward.5} parent=0 // pred_check_branch
    %14 = sbr.rel (0) target = $region13
  $region12: #{convnet_forward.5} parent=0 // pred_region
    _
  $region13: #{convnet_forward.5} parent=0 // pred_fallthru
    _
  // Predicated region
  $region14: #{convnet_forward.5} parent=0 // pred_check
    _
  $region15: #{convnet_forward.5} parent=0 // pred_check_branch
    %16 = sbr.rel (0) target = $region17
  $region16: #{convnet_forward.5} parent=0 // pred_region
    _
  $region17: #{convnet_forward.5} parent=0 // pred_fallthru
    _
  loop: start=0, step=1, limit=2
  $region18: #{convnet_forward.5} parent=0 // loop_pre_header
    _
  $region19: #{convnet_forward.5} parent=0 // loop_header
    %s19 = sphi 0, %s23
    %p20 = scmp.ge.s32.totalorder %s19, 2
  $region20: #{convnet_forward.5} parent=0 // loop_header_branch
    %22 = sbr.rel (%p20) target = $region24
  $region21: #{convnet_forward.5} parent=0 // loop_body
    %s24 = smul.u32 %s19, 33
    %s25 = smul.addr %s24, 4
    %s26 = scalar_lea.vmem %s0, %s25
    %v27 = vld [vmem:[%s26] sm:$0xf]
    %v28 = vld [vmem:[%s26 + $0x4] sm:$0xf]
    %v29 = vld [vmem:[%s26 + $0x8] sm:$0xf]
    %v30 = vld [vmem:[%s26 + $0xc] sm:$0xf]
    %v31 = vld [vmem:[%s26 + $0x10] sm:$0xf]
    %v32 = vld [vmem:[%s26 + $0x14] sm:$0xf]
    %v33 = vld [vmem:[%s26 + $0x18] sm:$0xf]
    %v34 = vld [vmem:[%s26 + $0x1c] sm:$0xf]
    %v35 = vld [vmem:[%s26 + $0x20] sm:$0xf]
    %v36 = vld [vmem:[%s26 + $0x24] sm:$0xf]
    %v37 = vld [vmem:[%s26 + $0x28] sm:$0xf]
    %v38 = vld [vmem:[%s26 + $0x2c] sm:$0xf]
    %v39 = vld [vmem:[%s26 + $0x30] sm:$0xf]
    %v40 = vld [vmem:[%s26 + $0x34] sm:$0xf]
    %v41 = vld [vmem:[%s26 + $0x38] sm:$0xf]
    %v42 = vld [vmem:[%s26 + $0x3c] sm:$0xf]
    %v43 = vld [vmem:[%s26 + $0x40] sm:$0xf]
    %v44 = vld [vmem:[%s26 + $0x44] sm:$0xf]
    %v45 = vld [vmem:[%s26 + $0x48] sm:$0xf]
    %v46 = vld [vmem:[%s26 + $0x4c] sm:$0xf]
    %v47 = vld [vmem:[%s26 + $0x50] sm:$0xf]
    %v48 = vld [vmem:[%s26 + $0x54] sm:$0xf]
    %v49 = vld [vmem:[%s26 + $0x58] sm:$0xf]
    %v50 = vld [vmem:[%s26 + $0x5c] sm:$0xf]
    %v51 = vld [vmem:[%s26 + $0x60] sm:$0xf]
    %v52 = vld [vmem:[%s26 + $0x64] sm:$0xf]
    %v53 = vld [vmem:[%s26 + $0x68] sm:$0xf]
    %v54 = vld [vmem:[%s26 + $0x6c] sm:$0xf]
    %v55 = vld [vmem:[%s26 + $0x70] sm:$0x1]
    %v56 = vld [vmem:[%s26] sm:$0xe]
    %v57 = vld [vmem:[%s26 + $0x70] sm:$0xf]
    %v58 = vld [vmem:[%s26 + $0x74] sm:$0xf]
    %v59 = vld [vmem:[%s26 + $0x78] sm:$0x1]
    %v60 = vld [vmem:[%s26 + $0x8] sm:$0xe]
    %v61 = vld [vmem:[%s26 + $0x78] sm:$0xf]
    %v62 = vld [vmem:[%s26 + $0x7c] sm:$0xf]
    %v63 = vld [vmem:[%s26 + $0x80] sm:$0x1]
    %v64 = vld [vmem:[%s26 + $0x10] sm:$0xe]
    %v93 = vunpack.c.l.b16 %v27
    %v94 = vunpack.c.l.b16 %v28
    %v95 = vunpack.c.l.b16 %v29
    %v96 = vunpack.c.l.b16 %v30
    %v97 = vunpack.c.l.b16 %v31
    %v98 = vunpack.c.l.b16 %v32
    %v99 = vunpack.c.l.b16 %v33
    %v100 = vunpack.c.l.b16 %v34
    %v101 = vunpack.c.l.b16 %v35
    %v102 = vunpack.c.l.b16 %v36
    %v103 = vunpack.c.l.b16 %v37
    %v104 = vunpack.c.l.b16 %v38
    %v105 = vunpack.c.l.b16 %v39
    %v106 = vunpack.c.l.b16 %v40
    %v107 = vunpack.c.l.b16 %v41
    %v108 = vunpack.c.l.b16 %v42
    %v109 = vunpack.c.l.b16 %v43
    %v110 = vunpack.c.l.b16 %v44
    %v111 = vunpack.c.l.b16 %v45
    %v112 = vunpack.c.l.b16 %v46
    %v113 = vunpack.c.l.b16 %v47
    %v114 = vunpack.c.l.b16 %v48
    %v115 = vunpack.c.l.b16 %v49
    %v116 = vunpack.c.l.b16 %v50
    %v117 = vunpack.c.l.b16 %v51
    %v118 = vunpack.c.l.b16 %v52
    %v119 = vunpack.c.l.b16 %v53
    %v120 = vunpack.c.l.b16 %v54
    %v121 = vpack.c.b16 %v94, %v93
    %v122 = vpack.c.b16 %v96, %v95
    %v123 = vpack.c.b16 %v98, %v97
    %v124 = vpack.c.b16 %v100, %v99
    %v125 = vpack.c.b16 %v102, %v101
    %v126 = vpack.c.b16 %v104, %v103
    %v127 = vpack.c.b16 %v106, %v105
    %v128 = vpack.c.b16 %v108, %v107
    %v129 = vpack.c.b16 %v110, %v109
    %v130 = vpack.c.b16 %v112, %v111
    %v131 = vpack.c.b16 %v114, %v113
    %v132 = vpack.c.b16 %v116, %v115
    %v133 = vpack.c.b16 %v118, %v117
    %v134 = vpack.c.b16 %v120, %v119
    %v136 = vunpack.c.l.b16 %v55
    %v137 = vpack.c.b16 %v136, %v136
    %vm138 = vsmask.f32 7424
    %v140 = vshrl.u32 %v121, 16
    %v142 = vshll.u32 %v121, 16
    %v144 = vrot.slane %v142, 1
    %v145 = vor.u32 %v140, %v144
    %v147 = vshll.u32 %v122, 16
    %v149 = vrot.slane %v147, 1
    %v150 = vsel %vm138, %v145, %v149
    %v151 = vshrl.u32 %v122, 16
    %v153 = vor.u32 %v151, %v149
    %v155 = vshll.u32 %v123, 16
    %v157 = vrot.slane %v155, 1
    %v158 = vsel %vm138, %v153, %v157
    %v159 = vshrl.u32 %v123, 16
    %v161 = vor.u32 %v159, %v157
    %v163 = vshll.u32 %v124, 16
    %v165 = vrot.slane %v163, 1
    %v166 = vsel %vm138, %v161, %v165
    %v167 = vshrl.u32 %v124, 16
    %v169 = vor.u32 %v167, %v165
    %v171 = vshll.u32 %v125, 16
    %v173 = vrot.slane %v171, 1
    %v174 = vsel %vm138, %v169, %v173
    %v175 = vshrl.u32 %v125, 16
    %v177 = vor.u32 %v175, %v173
    %v179 = vshll.u32 %v126, 16
    %v181 = vrot.slane %v179, 1
    %v182 = vsel %vm138, %v177, %v181
    %v183 = vshrl.u32 %v126, 16
    %v185 = vor.u32 %v183, %v181
    %v187 = vshll.u32 %v127, 16
    %v189 = vrot.slane %v187, 1
    %v190 = vsel %vm138, %v185, %v189
    %v191 = vshrl.u32 %v127, 16
    %v193 = vor.u32 %v191, %v189
    %v195 = vshll.u32 %v128, 16
    %v197 = vrot.slane %v195, 1
    %v198 = vsel %vm138, %v193, %v197
    %v199 = vshrl.u32 %v128, 16
    %v201 = vor.u32 %v199, %v197
    %v203 = vshll.u32 %v129, 16
    %v205 = vrot.slane %v203, 1
    %v206 = vsel %vm138, %v201, %v205
    %v207 = vshrl.u32 %v129, 16
    %v209 = vor.u32 %v207, %v205
    %v211 = vshll.u32 %v130, 16
    %v213 = vrot.slane %v211, 1
    %v214 = vsel %vm138, %v209, %v213
    %v215 = vshrl.u32 %v130, 16
    %v217 = vor.u32 %v215, %v213
    %v219 = vshll.u32 %v131, 16
    %v221 = vrot.slane %v219, 1
    %v222 = vsel %vm138, %v217, %v221
    %v223 = vshrl.u32 %v131, 16
    %v225 = vor.u32 %v223, %v221
    %v227 = vshll.u32 %v132, 16
    %v229 = vrot.slane %v227, 1
    %v230 = vsel %vm138, %v225, %v229
    %v231 = vshrl.u32 %v132, 16
    %v233 = vor.u32 %v231, %v229
    %v235 = vshll.u32 %v133, 16
    %v237 = vrot.slane %v235, 1
    %v238 = vsel %vm138, %v233, %v237
    %v239 = vshrl.u32 %v133, 16
    %v241 = vor.u32 %v239, %v237
    %v243 = vshll.u32 %v134, 16
    %v245 = vrot.slane %v243, 1
    %v246 = vsel %vm138, %v241, %v245
    %v247 = vshrl.u32 %v134, 16
    %v249 = vor.u32 %v247, %v245
    %v251 = vshll.u32 %v137, 16
    %v253 = vrot.slane %v251, 1
    %v254 = vsel %vm138, %v249, %v253
    %255 = vrot.lane.b32.xlu0 %v150, 32
    %v256 = vpop.permute.xlu0 %255
    %257 = vrot.lane.b32.xlu0 %v158, 32
    %v258 = vpop.permute.xlu0 %257
    %259 = vrot.lane.b32.xlu0 %v166, 32
    %v260 = vpop.permute.xlu0 %259
    %261 = vrot.lane.b32.xlu0 %v174, 32
    %v262 = vpop.permute.xlu0 %261
    %263 = vrot.lane.b32.xlu0 %v182, 32
    %v264 = vpop.permute.xlu0 %263
    %265 = vrot.lane.b32.xlu0 %v190, 32
    %v266 = vpop.permute.xlu0 %265
    %267 = vrot.lane.b32.xlu0 %v198, 32
    %v268 = vpop.permute.xlu0 %267
    %269 = vrot.lane.b32.xlu0 %v206, 32
    %v270 = vpop.permute.xlu0 %269
    %271 = vrot.lane.b32.xlu0 %v214, 32
    %v272 = vpop.permute.xlu0 %271
    %273 = vrot.lane.b32.xlu0 %v222, 32
    %v274 = vpop.permute.xlu0 %273
    %275 = vrot.lane.b32.xlu0 %v230, 32
    %v276 = vpop.permute.xlu0 %275
    %277 = vrot.lane.b32.xlu0 %v238, 32
    %v278 = vpop.permute.xlu0 %277
    %279 = vrot.lane.b32.xlu0 %v246, 32
    %v280 = vpop.permute.xlu0 %279
    %281 = vrot.lane.b32.xlu0 %v254, 32
    %v282 = vpop.permute.xlu0 %281
    %v284 = vunpack.c.l.b16 %v56
    %v285 = vpack.c.b16 %v94, %v284
    %vm286 = vcmask 1046528
    %v287 = vrot.slane %v285, 1
    %v288 = vrot.slane %v122, 1
    %v289 = vsel %vm286, %v287, %v288
    %v290 = vrot.slane %v123, 1
    %v291 = vsel %vm286, %v288, %v290
    %v292 = vrot.slane %v124, 1
    %v293 = vsel %vm286, %v290, %v292
    %v294 = vrot.slane %v125, 1
    %v295 = vsel %vm286, %v292, %v294
    %v296 = vrot.slane %v126, 1
    %v297 = vsel %vm286, %v294, %v296
    %v298 = vrot.slane %v127, 1
    %v299 = vsel %vm286, %v296, %v298
    %v300 = vrot.slane %v128, 1
    %v301 = vsel %vm286, %v298, %v300
    %v302 = vrot.slane %v129, 1
    %v303 = vsel %vm286, %v300, %v302
    %v304 = vrot.slane %v130, 1
    %v305 = vsel %vm286, %v302, %v304
    %v306 = vrot.slane %v131, 1
    %v307 = vsel %vm286, %v304, %v306
    %v308 = vrot.slane %v132, 1
    %v309 = vsel %vm286, %v306, %v308
    %v310 = vrot.slane %v133, 1
    %v311 = vsel %vm286, %v308, %v310
    %v312 = vrot.slane %v134, 1
    %v313 = vsel %vm286, %v310, %v312
    %v314 = vrot.slane %v137, 1
    %v315 = vsel %vm286, %v312, %v314
    %316 = vrot.lane.b32.xlu0 %v289, 64
    %v317 = vpop.permute.xlu0 %316
    %318 = vrot.lane.b32.xlu0 %v291, 64
    %v319 = vpop.permute.xlu0 %318
    %320 = vrot.lane.b32.xlu0 %v293, 64
    %v321 = vpop.permute.xlu0 %320
    %322 = vrot.lane.b32.xlu0 %v295, 64
    %v323 = vpop.permute.xlu0 %322
    %324 = vrot.lane.b32.xlu0 %v297, 64
    %v325 = vpop.permute.xlu0 %324
    %326 = vrot.lane.b32.xlu0 %v299, 64
    %v327 = vpop.permute.xlu0 %326
    %328 = vrot.lane.b32.xlu0 %v301, 64
    %v329 = vpop.permute.xlu0 %328
    %330 = vrot.lane.b32.xlu0 %v303, 64
    %v331 = vpop.permute.xlu0 %330
    %332 = vrot.lane.b32.xlu0 %v305, 64
    %v333 = vpop.permute.xlu0 %332
    %334 = vrot.lane.b32.xlu0 %v307, 64
    %v335 = vpop.permute.xlu0 %334
    %336 = vrot.lane.b32.xlu0 %v309, 64
    %v337 = vpop.permute.xlu0 %336
    %338 = vrot.lane.b32.xlu0 %v311, 64
    %v339 = vpop.permute.xlu0 %338
    %340 = vrot.lane.b32.xlu0 %v313, 64
    %v341 = vpop.permute.xlu0 %340
    %342 = vrot.lane.b32.xlu0 %v315, 64
    %v343 = vpop.permute.xlu0 %342
    %v346 = vunpack.c.l.b16 %v57
    %v347 = vunpack.c.l.b16 %v58
    %v348 = vpack.c.b16 %v347, %v346
    %349 = vrot.lane.b32.xlu0 %v122, 96
    %v350 = vpop.permute.xlu0 %349
    %351 = vrot.lane.b32.xlu0 %v123, 96
    %v352 = vpop.permute.xlu0 %351
    %353 = vrot.lane.b32.xlu0 %v124, 96
    %v354 = vpop.permute.xlu0 %353
    %355 = vrot.lane.b32.xlu0 %v125, 96
    %v356 = vpop.permute.xlu0 %355
    %357 = vrot.lane.b32.xlu0 %v126, 96
    %v358 = vpop.permute.xlu0 %357
    %359 = vrot.lane.b32.xlu0 %v127, 96
    %v360 = vpop.permute.xlu0 %359
    %361 = vrot.lane.b32.xlu0 %v128, 96
    %v362 = vpop.permute.xlu0 %361
    %363 = vrot.lane.b32.xlu0 %v129, 96
    %v364 = vpop.permute.xlu0 %363
    %365 = vrot.lane.b32.xlu0 %v130, 96
    %v366 = vpop.permute.xlu0 %365
    %367 = vrot.lane.b32.xlu0 %v131, 96
    %v368 = vpop.permute.xlu0 %367
    %369 = vrot.lane.b32.xlu0 %v132, 96
    %v370 = vpop.permute.xlu0 %369
    %371 = vrot.lane.b32.xlu0 %v133, 96
    %v372 = vpop.permute.xlu0 %371
    %373 = vrot.lane.b32.xlu0 %v134, 96
    %v374 = vpop.permute.xlu0 %373
    %375 = vrot.lane.b32.xlu0 %v348, 96
    %v376 = vpop.permute.xlu0 %375
    %v378 = vunpack.c.l.b16 %v59
    %v379 = vpack.c.b16 %v378, %v378
    %v381 = vshll.u32 %v348, 16
    %v383 = vrot.slane %v381, 1
    %v384 = vsel %vm138, %v249, %v383
    %v385 = vshrl.u32 %v348, 16
    %v387 = vor.u32 %v385, %v383
    %v389 = vshll.u32 %v379, 16
    %v391 = vrot.slane %v389, 1
    %v392 = vsel %vm138, %v387, %v391
    %v394 = vunpack.c.l.b16 %v60
    %v395 = vpack.c.b16 %v96, %v394
    %v396 = vrot.slane %v395, 1
    %v397 = vsel %vm286, %v396, %v290
    %v398 = vrot.slane %v348, 1
    %v399 = vsel %vm286, %v312, %v398
    %v400 = vrot.slane %v379, 1
    %v401 = vsel %vm286, %v398, %v400
    %402 = vrot.lane.b32.xlu0 %v397, 32
    %v403 = vpop.permute.xlu0 %402
    %404 = vrot.lane.b32.xlu0 %v293, 32
    %v405 = vpop.permute.xlu0 %404
    %406 = vrot.lane.b32.xlu0 %v295, 32
    %v407 = vpop.permute.xlu0 %406
    %408 = vrot.lane.b32.xlu0 %v297, 32
    %v409 = vpop.permute.xlu0 %408
    %410 = vrot.lane.b32.xlu0 %v299, 32
    %v411 = vpop.permute.xlu0 %410
    %412 = vrot.lane.b32.xlu0 %v301, 32
    %v413 = vpop.permute.xlu0 %412
    %414 = vrot.lane.b32.xlu0 %v303, 32
    %v415 = vpop.permute.xlu0 %414
    %416 = vrot.lane.b32.xlu0 %v305, 32
    %v417 = vpop.permute.xlu0 %416
    %418 = vrot.lane.b32.xlu0 %v307, 32
    %v419 = vpop.permute.xlu0 %418
    %420 = vrot.lane.b32.xlu0 %v309, 32
    %v421 = vpop.permute.xlu0 %420
    %422 = vrot.lane.b32.xlu0 %v311, 32
    %v423 = vpop.permute.xlu0 %422
    %424 = vrot.lane.b32.xlu0 %v313, 32
    %v425 = vpop.permute.xlu0 %424
    %426 = vrot.lane.b32.xlu0 %v399, 32
    %v427 = vpop.permute.xlu0 %426
    %428 = vrot.lane.b32.xlu0 %v401, 32
    %v429 = vpop.permute.xlu0 %428
    %v432 = vunpack.c.l.b16 %v61
    %v433 = vunpack.c.l.b16 %v62
    %v434 = vpack.c.b16 %v433, %v432
    %435 = vrot.lane.b32.xlu0 %v123, 64
    %v436 = vpop.permute.xlu0 %435
    %437 = vrot.lane.b32.xlu0 %v124, 64
    %v438 = vpop.permute.xlu0 %437
    %439 = vrot.lane.b32.xlu0 %v125, 64
    %v440 = vpop.permute.xlu0 %439
    %441 = vrot.lane.b32.xlu0 %v126, 64
    %v442 = vpop.permute.xlu0 %441
    %443 = vrot.lane.b32.xlu0 %v127, 64
    %v444 = vpop.permute.xlu0 %443
    %445 = vrot.lane.b32.xlu0 %v128, 64
    %v446 = vpop.permute.xlu0 %445
    %447 = vrot.lane.b32.xlu0 %v129, 64
    %v448 = vpop.permute.xlu0 %447
    %449 = vrot.lane.b32.xlu0 %v130, 64
    %v450 = vpop.permute.xlu0 %449
    %451 = vrot.lane.b32.xlu0 %v131, 64
    %v452 = vpop.permute.xlu0 %451
    %453 = vrot.lane.b32.xlu0 %v132, 64
    %v454 = vpop.permute.xlu0 %453
    %455 = vrot.lane.b32.xlu0 %v133, 64
    %v456 = vpop.permute.xlu0 %455
    %457 = vrot.lane.b32.xlu0 %v134, 64
    %v458 = vpop.permute.xlu0 %457
    %459 = vrot.lane.b32.xlu0 %v348, 64
    %v460 = vpop.permute.xlu0 %459
    %461 = vrot.lane.b32.xlu0 %v434, 64
    %v462 = vpop.permute.xlu0 %461
    %v464 = vunpack.c.l.b16 %v63
    %v465 = vpack.c.b16 %v464, %v464
    %v467 = vshll.u32 %v434, 16
    %v469 = vrot.slane %v467, 1
    %v470 = vsel %vm138, %v387, %v469
    %v471 = vshrl.u32 %v434, 16
    %v473 = vor.u32 %v471, %v469
    %v475 = vshll.u32 %v465, 16
    %v477 = vrot.slane %v475, 1
    %v478 = vsel %vm138, %v473, %v477
    %479 = vrot.lane.b32.xlu0 %v166, 96
    %v480 = vpop.permute.xlu0 %479
    %481 = vrot.lane.b32.xlu0 %v174, 96
    %v482 = vpop.permute.xlu0 %481
    %483 = vrot.lane.b32.xlu0 %v182, 96
    %v484 = vpop.permute.xlu0 %483
    %485 = vrot.lane.b32.xlu0 %v190, 96
    %v486 = vpop.permute.xlu0 %485
    %487 = vrot.lane.b32.xlu0 %v198, 96
    %v488 = vpop.permute.xlu0 %487
    %489 = vrot.lane.b32.xlu0 %v206, 96
    %v490 = vpop.permute.xlu0 %489
    %491 = vrot.lane.b32.xlu0 %v214, 96
    %v492 = vpop.permute.xlu0 %491
    %493 = vrot.lane.b32.xlu0 %v222, 96
    %v494 = vpop.permute.xlu0 %493
    %495 = vrot.lane.b32.xlu0 %v230, 96
    %v496 = vpop.permute.xlu0 %495
    %497 = vrot.lane.b32.xlu0 %v238, 96
    %v498 = vpop.permute.xlu0 %497
    %499 = vrot.lane.b32.xlu0 %v246, 96
    %v500 = vpop.permute.xlu0 %499
    %501 = vrot.lane.b32.xlu0 %v384, 96
    %v502 = vpop.permute.xlu0 %501
    %503 = vrot.lane.b32.xlu0 %v470, 96
    %v504 = vpop.permute.xlu0 %503
    %505 = vrot.lane.b32.xlu0 %v478, 96
    %v506 = vpop.permute.xlu0 %505
    %v508 = vunpack.c.l.b16 %v64
    %v509 = vpack.c.b16 %v98, %v508
    %v510 = vrot.slane %v509, 1
    %v511 = vsel %vm286, %v510, %v292
    %v512 = vrot.slane %v434, 1
    %v513 = vsel %vm286, %v398, %v512
    %v514 = vrot.slane %v465, 1
    %v515 = vsel %vm286, %v512, %v514
    %vm516 = vcmask 261120
    %v518 = vsel %vm516, %v121, %v256
    %v520 = vsel %vm516, %v122, %v258
    %v522 = vsel %vm516, %v123, %v260
    %v524 = vsel %vm516, %v124, %v262
    %v526 = vsel %vm516, %v125, %v264
    %v528 = vsel %vm516, %v126, %v266
    %v530 = vsel %vm516, %v127, %v268
    %v532 = vsel %vm516, %v128, %v270
    %v534 = vsel %vm516, %v129, %v272
    %v536 = vsel %vm516, %v130, %v274
    %v538 = vsel %vm516, %v131, %v276
    %v540 = vsel %vm516, %v132, %v278
    %v542 = vsel %vm516, %v133, %v280
    %v544 = vsel %vm516, %v134, %v282
    %vm545 = vcmask 523264
    %v547 = vsel %vm545, %v518, %v317
    %v549 = vsel %vm545, %v520, %v319
    %v551 = vsel %vm545, %v522, %v321
    %v553 = vsel %vm545, %v524, %v323
    %v555 = vsel %vm545, %v526, %v325
    %v557 = vsel %vm545, %v528, %v327
    %v559 = vsel %vm545, %v530, %v329
    %v561 = vsel %vm545, %v532, %v331
    %v563 = vsel %vm545, %v534, %v333
    %v565 = vsel %vm545, %v536, %v335
    %v567 = vsel %vm545, %v538, %v337
    %v569 = vsel %vm545, %v540, %v339
    %v571 = vsel %vm545, %v542, %v341
    %v573 = vsel %vm545, %v544, %v343
    %vm574 = vcmask 785408
    %v576 = vsel %vm574, %v547, %v350
    %v579 = vsel %vm574, %v549, %v352
    %v582 = vsel %vm574, %v551, %v354
    %v585 = vsel %vm574, %v553, %v356
    %v588 = vsel %vm574, %v555, %v358
    %v591 = vsel %vm574, %v557, %v360
    %v594 = vsel %vm574, %v559, %v362
    %v597 = vsel %vm574, %v561, %v364
    %v600 = vsel %vm574, %v563, %v366
    %v603 = vsel %vm574, %v565, %v368
    %v606 = vsel %vm574, %v567, %v370
    %v609 = vsel %vm574, %v569, %v372
    %v612 = vsel %vm574, %v571, %v374
    %v615 = vsel %vm574, %v573, %v376
    %v619 = vsel %vm516, %v158, %v403
    %v622 = vsel %vm516, %v166, %v405
    %v625 = vsel %vm516, %v174, %v407
    %v628 = vsel %vm516, %v182, %v409
    %v631 = vsel %vm516, %v190, %v411
    %v634 = vsel %vm516, %v198, %v413
    %v637 = vsel %vm516, %v206, %v415
    %v640 = vsel %vm516, %v214, %v417
    %v643 = vsel %vm516, %v222, %v419
    %v646 = vsel %vm516, %v230, %v421
    %v649 = vsel %vm516, %v238, %v423
    %v652 = vsel %vm516, %v246, %v425
    %v655 = vsel %vm516, %v384, %v427
    %v658 = vsel %vm516, %v392, %v429
    %v660 = vsel %vm545, %v619, %v436
    %v662 = vsel %vm545, %v622, %v438
    %v664 = vsel %vm545, %v625, %v440
    %v666 = vsel %vm545, %v628, %v442
    %v668 = vsel %vm545, %v631, %v444
    %v670 = vsel %vm545, %v634, %v446
    %v672 = vsel %vm545, %v637, %v448
    %v674 = vsel %vm545, %v640, %v450
    %v676 = vsel %vm545, %v643, %v452
    %v678 = vsel %vm545, %v646, %v454
    %v680 = vsel %vm545, %v649, %v456
    %v682 = vsel %vm545, %v652, %v458
    %v684 = vsel %vm545, %v655, %v460
    %v686 = vsel %vm545, %v658, %v462
    %v688 = vsel %vm574, %v660, %v480
    %v691 = vsel %vm574, %v662, %v482
    %v694 = vsel %vm574, %v664, %v484
    %v697 = vsel %vm574, %v666, %v486
    %v700 = vsel %vm574, %v668, %v488
    %v703 = vsel %vm574, %v670, %v490
    %v706 = vsel %vm574, %v672, %v492
    %v709 = vsel %vm574, %v674, %v494
    %v712 = vsel %vm574, %v676, %v496
    %v715 = vsel %vm574, %v678, %v498
    %v718 = vsel %vm574, %v680, %v500
    %v721 = vsel %vm574, %v682, %v502
    %v724 = vsel %vm574, %v684, %v504
    %v727 = vsel %vm574, %v686, %v506
    %v729 = vld [vmem:[%s1] sm:$0xf]
    %v730 = vld [vmem:[%s1 + $0x4] sm:$0xf]
    %v731 = vld [vmem:[%s1 + $0x8] sm:$0xf]
    %v732 = vld [vmem:[%s1 + $0xc] sm:$0xf]
    %v733 = vld [vmem:[%s1 + $0x10] sm:$0xf]
    %v734 = vld [vmem:[%s1 + $0x14] sm:$0xf]
    %v735 = vld [vmem:[%s1 + $0x18] sm:$0xf]
    %v736 = vld [vmem:[%s1 + $0x1c] sm:$0xf]
    %v737 = vld [vmem:[%s1 + $0x20] sm:$0xf]
    %v738 = vld [vmem:[%s1 + $0x24] sm:$0xf]
    %v739 = vld [vmem:[%s1 + $0x28] sm:$0xf]
    %v740 = vld [vmem:[%s1 + $0x2c] sm:$0xf]
    %v741 = vld [vmem:[%s1 + $0x30] sm:$0xf]
    %v742 = vld [vmem:[%s1 + $0x34] sm:$0xf]
    %v743 = vld [vmem:[%s1 + $0x38] sm:$0xf]
    %v744 = vld [vmem:[%s1 + $0x3c] sm:$0xf]
    %v745 = vld [vmem:[%s1 + $0x40] sm:$0xf]
    %v746 = vld [vmem:[%s1 + $0x44] sm:$0xf]
    %v747 = vld [vmem:[%s1 + $0x48] sm:$0xf]
    %v748 = vld [vmem:[%s1 + $0x4c] sm:$0xf]
    %v749 = vld [vmem:[%s1 + $0x50] sm:$0xf]
    %v750 = vld [vmem:[%s1 + $0x54] sm:$0xf]
    %v751 = vld [vmem:[%s1 + $0x58] sm:$0xf]
    %v752 = vld [vmem:[%s1 + $0x5c] sm:$0xf]
    %v753 = vld [vmem:[%s1 + $0x60] sm:$0xf]
    %v754 = vld [vmem:[%s1 + $0x64] sm:$0xf]
    %v755 = vld [vmem:[%s1 + $0x68] sm:$0xf]
    %v756 = vld [vmem:[%s1 + $0x6c] sm:$0xf]
    %v757 = vld [vmem:[%s1 + $0x70] sm:$0xf]
    %v758 = vld [vmem:[%s1 + $0x74] sm:$0xf]
    %v759 = vld [vmem:[%s1 + $0x78] sm:$0xf]
    %v760 = vld [vmem:[%s1 + $0x7c] sm:$0xf]
    %v761 = vld [vmem:[%s1 + $0x80] sm:$0xf]
    %v762 = vld [vmem:[%s1 + $0x84] sm:$0xf]
    %v763 = vld [vmem:[%s1 + $0x88] sm:$0xf]
    %v764 = vld [vmem:[%s1 + $0x8c] sm:$0xf]
    %v765 = vld [vmem:[%s2] sm:$0x1]
    %v767 = vperm.slane %v765, 0
    %v805 = vunpack.c.l.b16 %v729
    %v806 = vunpack.c.l.b16 %v730
    %v807 = vunpack.c.l.b16 %v731
    %v808 = vunpack.c.l.b16 %v732
    %v809 = vunpack.c.l.b16 %v733
    %v810 = vunpack.c.l.b16 %v734
    %v811 = vunpack.c.l.b16 %v735
    %v812 = vunpack.c.l.b16 %v736
    %v813 = vunpack.c.l.b16 %v737
    %v814 = vunpack.c.l.b16 %v738
    %v815 = vunpack.c.l.b16 %v739
    %v816 = vunpack.c.l.b16 %v740
    %v817 = vunpack.c.l.b16 %v741
    %v818 = vunpack.c.l.b16 %v742
    %v819 = vunpack.c.l.b16 %v743
    %v820 = vunpack.c.l.b16 %v744
    %v821 = vunpack.c.l.b16 %v745
    %v822 = vunpack.c.l.b16 %v746
    %v823 = vunpack.c.l.b16 %v747
    %v824 = vunpack.c.l.b16 %v748
    %v825 = vunpack.c.l.b16 %v749
    %v826 = vunpack.c.l.b16 %v750
    %v827 = vunpack.c.l.b16 %v751
    %v828 = vunpack.c.l.b16 %v752
    %v829 = vunpack.c.l.b16 %v753
    %v830 = vunpack.c.l.b16 %v754
    %v831 = vunpack.c.l.b16 %v755
    %v832 = vunpack.c.l.b16 %v756
    %v833 = vunpack.c.l.b16 %v757
    %v834 = vunpack.c.l.b16 %v758
    %v835 = vunpack.c.l.b16 %v759
    %v836 = vunpack.c.l.b16 %v760
    %v837 = vunpack.c.l.b16 %v761
    %v838 = vunpack.c.l.b16 %v762
    %v839 = vunpack.c.l.b16 %v763
    %v840 = vunpack.c.l.b16 %v764
    %v841 = vpack.c.b16 %v806, %v805
    %v842 = vpack.c.b16 %v808, %v807
    %v843 = vpack.c.b16 %v810, %v809
    %v844 = vpack.c.b16 %v812, %v811
    %v845 = vpack.c.b16 %v814, %v813
    %v846 = vpack.c.b16 %v816, %v815
    %v847 = vpack.c.b16 %v818, %v817
    %v848 = vpack.c.b16 %v820, %v819
    %v849 = vpack.c.b16 %v822, %v821
    %v850 = vpack.c.b16 %v824, %v823
    %v851 = vpack.c.b16 %v826, %v825
    %v852 = vpack.c.b16 %v828, %v827
    %v853 = vpack.c.b16 %v830, %v829
    %v854 = vpack.c.b16 %v832, %v831
    %v855 = vpack.c.b16 %v834, %v833
    %v856 = vpack.c.b16 %v836, %v835
    %v857 = vpack.c.b16 %v838, %v837
    %v858 = vpack.c.b16 %v840, %v839
    %v878 = vsel %vm516, %v511, 0
    %v881 = vsel %vm516, %v295, 0
    %v884 = vsel %vm516, %v297, 0
    %v887 = vsel %vm516, %v299, 0
    %v890 = vsel %vm516, %v301, 0
    %v893 = vsel %vm516, %v303, 0
    %v896 = vsel %vm516, %v305, 0
    %v899 = vsel %vm516, %v307, 0
    %v902 = vsel %vm516, %v309, 0
    %v905 = vsel %vm516, %v311, 0
    %v908 = vsel %vm516, %v313, 0
    %v911 = vsel %vm516, %v399, 0
    %v914 = vsel %vm516, %v513, 0
    %v917 = vsel %vm516, %v515, 0
    %919 = vmatpush.bf16.msra.mxu0 %v848
    %920 = vmatpush.bf16.msra.mxu0 %v847
    %921 = vmatpush.bf16.msra.mxu0 %v846
    %922 = vmatpush.bf16.msra.mxu0 %v845
    %923 = vmatpush.bf16.msra.mxu0 %v844
    %924 = vmatpush.bf16.msra.mxu0 %v843
    %925 = vmatpush.bf16.msra.mxu0 %v842
    %926 = vmatpush.bf16.msra.mxu0 %v841
    %927 = vmatmul.bf16.gmra.mxu0 %v576
    %v928 = vpop.f32.mrf.mxu0
    %v929 = vadd.f32 %v767, %v928
    %v930 = vpop.f32.mrf.mxu0
    %v931 = vadd.f32 %v767, %v930
    %932 = vmatmul.bf16.gmra.mxu0 %v579
    %v933 = vpop.f32.mrf.mxu0
    %v934 = vadd.f32 %v767, %v933
    %v935 = vpop.f32.mrf.mxu0
    %v936 = vadd.f32 %v767, %v935
    %937 = vmatmul.bf16.gmra.mxu0 %v582
    %v938 = vpop.f32.mrf.mxu0
    %v939 = vadd.f32 %v767, %v938
    %v940 = vpop.f32.mrf.mxu0
    %v941 = vadd.f32 %v767, %v940
    %942 = vmatmul.bf16.gmra.mxu0 %v585
    %v943 = vpop.f32.mrf.mxu0
    %v944 = vadd.f32 %v767, %v943
    %v945 = vpop.f32.mrf.mxu0
    %v946 = vadd.f32 %v767, %v945
    %947 = vmatmul.bf16.gmra.mxu0 %v588
    %v948 = vpop.f32.mrf.mxu0
    %v949 = vadd.f32 %v767, %v948
    %v950 = vpop.f32.mrf.mxu0
    %v951 = vadd.f32 %v767, %v950
    %952 = vmatmul.bf16.gmra.mxu0 %v591
    %v953 = vpop.f32.mrf.mxu0
    %v954 = vadd.f32 %v767, %v953
    %v955 = vpop.f32.mrf.mxu0
    %v956 = vadd.f32 %v767, %v955
    %957 = vmatmul.bf16.gmra.mxu0 %v594
    %v958 = vpop.f32.mrf.mxu0
    %v959 = vadd.f32 %v767, %v958
    %v960 = vpop.f32.mrf.mxu0
    %v961 = vadd.f32 %v767, %v960
    %962 = vmatmul.bf16.gmra.mxu0 %v597
    %v963 = vpop.f32.mrf.mxu0
    %v964 = vadd.f32 %v767, %v963
    %v965 = vpop.f32.mrf.mxu0
    %v966 = vadd.f32 %v767, %v965
    %967 = vmatmul.bf16.gmra.mxu0 %v600
    %v968 = vpop.f32.mrf.mxu0
    %v969 = vadd.f32 %v767, %v968
    %v970 = vpop.f32.mrf.mxu0
    %v971 = vadd.f32 %v767, %v970
    %972 = vmatmul.bf16.gmra.mxu0 %v603
    %v973 = vpop.f32.mrf.mxu0
    %v974 = vadd.f32 %v767, %v973
    %v975 = vpop.f32.mrf.mxu0
    %v976 = vadd.f32 %v767, %v975
    %977 = vmatmul.bf16.gmra.mxu0 %v606
    %v978 = vpop.f32.mrf.mxu0
    %v979 = vadd.f32 %v767, %v978
    %v980 = vpop.f32.mrf.mxu0
    %v981 = vadd.f32 %v767, %v980
    %982 = vmatmul.bf16.gmra.mxu0 %v609
    %v983 = vpop.f32.mrf.mxu0
    %v984 = vadd.f32 %v767, %v983
    %v985 = vpop.f32.mrf.mxu0
    %v986 = vadd.f32 %v767, %v985
    %987 = vmatmul.bf16.gmra.mxu0 %v612
    %v988 = vpop.f32.mrf.mxu0
    %v989 = vadd.f32 %v767, %v988
    %v990 = vpop.f32.mrf.mxu0
    %v991 = vadd.f32 %v767, %v990
    %992 = vmatmul.bf16.gmra.mxu0 %v615
    %v993 = vpop.f32.mrf.mxu0
    %v994 = vadd.f32 %v767, %v993
    %v995 = vpop.f32.mrf.mxu0
    %v996 = vadd.f32 %v767, %v995
    %997 = vdwg.mxu0
    %998 = vmatpush.bf16.msra.mxu0 %v856
    %999 = vmatpush.bf16.msra.mxu0 %v855
    %1000 = vmatpush.bf16.msra.mxu0 %v854
    %1001 = vmatpush.bf16.msra.mxu0 %v853
    %1002 = vmatpush.bf16.msra.mxu0 %v852
    %1003 = vmatpush.bf16.msra.mxu0 %v851
    %1004 = vmatpush.bf16.msra.mxu0 %v850
    %1005 = vmatpush.bf16.msra.mxu0 %v849
    %1006 = vmatmul.bf16.gmra.mxu0 %v688
    %v1007 = vpop.f32.mrf.mxu0
    %v1008 = vadd.f32 %v929, %v1007
    %v1009 = vpop.f32.mrf.mxu0
    %v1010 = vadd.f32 %v931, %v1009
    %1011 = vmatmul.bf16.gmra.mxu0 %v691
    %v1012 = vpop.f32.mrf.mxu0
    %v1013 = vadd.f32 %v934, %v1012
    %v1014 = vpop.f32.mrf.mxu0
    %v1015 = vadd.f32 %v936, %v1014
    %1016 = vmatmul.bf16.gmra.mxu0 %v694
    %v1017 = vpop.f32.mrf.mxu0
    %v1018 = vadd.f32 %v939, %v1017
    %v1019 = vpop.f32.mrf.mxu0
    %v1020 = vadd.f32 %v941, %v1019
    %1021 = vmatmul.bf16.gmra.mxu0 %v697
    %v1022 = vpop.f32.mrf.mxu0
    %v1023 = vadd.f32 %v944, %v1022
    %v1024 = vpop.f32.mrf.mxu0
    %v1025 = vadd.f32 %v946, %v1024
    %1026 = vmatmul.bf16.gmra.mxu0 %v700
    %v1027 = vpop.f32.mrf.mxu0
    %v1028 = vadd.f32 %v949, %v1027
    %v1029 = vpop.f32.mrf.mxu0
    %v1030 = vadd.f32 %v951, %v1029
    %1031 = vmatmul.bf16.gmra.mxu0 %v703
    %v1032 = vpop.f32.mrf.mxu0
    %v1033 = vadd.f32 %v954, %v1032
    %v1034 = vpop.f32.mrf.mxu0
    %v1035 = vadd.f32 %v956, %v1034
    %1036 = vmatmul.bf16.gmra.mxu0 %v706
    %v1037 = vpop.f32.mrf.mxu0
    %v1038 = vadd.f32 %v959, %v1037
    %v1039 = vpop.f32.mrf.mxu0
    %v1040 = vadd.f32 %v961, %v1039
    %1041 = vmatmul.bf16.gmra.mxu0 %v709
    %v1042 = vpop.f32.mrf.mxu0
    %v1043 = vadd.f32 %v964, %v1042
    %v1044 = vpop.f32.mrf.mxu0
    %v1045 = vadd.f32 %v966, %v1044
    %1046 = vmatmul.bf16.gmra.mxu0 %v712
    %v1047 = vpop.f32.mrf.mxu0
    %v1048 = vadd.f32 %v969, %v1047
    %v1049 = vpop.f32.mrf.mxu0
    %v1050 = vadd.f32 %v971, %v1049
    %1051 = vmatmul.bf16.gmra.mxu0 %v715
    %v1052 = vpop.f32.mrf.mxu0
    %v1053 = vadd.f32 %v974, %v1052
    %v1054 = vpop.f32.mrf.mxu0
    %v1055 = vadd.f32 %v976, %v1054
    %1056 = vmatmul.bf16.gmra.mxu0 %v718
    %v1057 = vpop.f32.mrf.mxu0
    %v1058 = vadd.f32 %v979, %v1057
    %v1059 = vpop.f32.mrf.mxu0
    %v1060 = vadd.f32 %v981, %v1059
    %1061 = vmatmul.bf16.gmra.mxu0 %v721
    %v1062 = vpop.f32.mrf.mxu0
    %v1063 = vadd.f32 %v984, %v1062
    %v1064 = vpop.f32.mrf.mxu0
    %v1065 = vadd.f32 %v986, %v1064
    %1066 = vmatmul.bf16.gmra.mxu0 %v724
    %v1067 = vpop.f32.mrf.mxu0
    %v1068 = vadd.f32 %v989, %v1067
    %v1069 = vpop.f32.mrf.mxu0
    %v1070 = vadd.f32 %v991, %v1069
    %1071 = vmatmul.bf16.gmra.mxu0 %v727
    %v1072 = vpop.f32.mrf.mxu0
    %v1073 = vadd.f32 %v994, %v1072
    %v1074 = vpop.f32.mrf.mxu0
    %v1075 = vadd.f32 %v996, %v1074
    %1076 = vdwg.mxu0
    %1077 = vmatpush.bf16.msra.mxu0 0
    %1078 = vmatpush.bf16.msra.mxu0 0
    %1079 = vmatpush.bf16.msra.mxu0 0
    %1080 = vmatpush.bf16.msra.mxu0 0
    %1081 = vmatpush.bf16.msra.mxu0 0
    %1082 = vmatpush.bf16.msra.mxu0 0
    %1083 = vmatpush.bf16.msra.mxu0 %v858
    %1084 = vmatpush.bf16.msra.mxu0 %v857
    %1085 = vmatmul.bf16.gmra.mxu0 %v878
    %v1086 = vpop.f32.mrf.mxu0
    %v1087 = vadd.f32 %v1008, %v1086
    %v1088 = vpop.f32.mrf.mxu0
    %v1089 = vadd.f32 %v1010, %v1088
    %1090 = vmatmul.bf16.gmra.mxu0 %v881
    %v1091 = vpop.f32.mrf.mxu0
    %v1092 = vadd.f32 %v1013, %v1091
    %v1093 = vpop.f32.mrf.mxu0
    %v1094 = vadd.f32 %v1015, %v1093
    %1095 = vmatmul.bf16.gmra.mxu0 %v884
    %v1096 = vpop.f32.mrf.mxu0
    %v1097 = vadd.f32 %v1018, %v1096
    %v1098 = vpop.f32.mrf.mxu0
    %v1099 = vadd.f32 %v1020, %v1098
    %1100 = vmatmul.bf16.gmra.mxu0 %v887
    %v1101 = vpop.f32.mrf.mxu0
    %v1102 = vadd.f32 %v1023, %v1101
    %v1103 = vpop.f32.mrf.mxu0
    %v1104 = vadd.f32 %v1025, %v1103
    %1105 = vmatmul.bf16.gmra.mxu0 %v890
    %v1106 = vpop.f32.mrf.mxu0
    %v1107 = vadd.f32 %v1028, %v1106
    %v1108 = vpop.f32.mrf.mxu0
    %v1109 = vadd.f32 %v1030, %v1108
    %1110 = vmatmul.bf16.gmra.mxu0 %v893
    %v1111 = vpop.f32.mrf.mxu0
    %v1112 = vadd.f32 %v1033, %v1111
    %v1113 = vpop.f32.mrf.mxu0
    %v1114 = vadd.f32 %v1035, %v1113
    %1115 = vmatmul.bf16.gmra.mxu0 %v896
    %v1116 = vpop.f32.mrf.mxu0
    %v1117 = vadd.f32 %v1038, %v1116
    %v1118 = vpop.f32.mrf.mxu0
    %v1119 = vadd.f32 %v1040, %v1118
    %1120 = vmatmul.bf16.gmra.mxu0 %v899
    %v1121 = vpop.f32.mrf.mxu0
    %v1122 = vadd.f32 %v1043, %v1121
    %v1123 = vpop.f32.mrf.mxu0
    %v1124 = vadd.f32 %v1045, %v1123
    %1125 = vmatmul.bf16.gmra.mxu0 %v902
    %v1126 = vpop.f32.mrf.mxu0
    %v1127 = vadd.f32 %v1048, %v1126
    %v1128 = vpop.f32.mrf.mxu0
    %v1129 = vadd.f32 %v1050, %v1128
    %1130 = vmatmul.bf16.gmra.mxu0 %v905
    %v1131 = vpop.f32.mrf.mxu0
    %v1132 = vadd.f32 %v1053, %v1131
    %v1133 = vpop.f32.mrf.mxu0
    %v1134 = vadd.f32 %v1055, %v1133
    %1135 = vmatmul.bf16.gmra.mxu0 %v908
    %v1136 = vpop.f32.mrf.mxu0
    %v1137 = vadd.f32 %v1058, %v1136
    %v1138 = vpop.f32.mrf.mxu0
    %v1139 = vadd.f32 %v1060, %v1138
    %1140 = vmatmul.bf16.gmra.mxu0 %v911
    %v1141 = vpop.f32.mrf.mxu0
    %v1142 = vadd.f32 %v1063, %v1141
    %v1143 = vpop.f32.mrf.mxu0
    %v1144 = vadd.f32 %v1065, %v1143
    %1145 = vmatmul.bf16.gmra.mxu0 %v914
    %v1146 = vpop.f32.mrf.mxu0
    %v1147 = vadd.f32 %v1068, %v1146
    %v1148 = vpop.f32.mrf.mxu0
    %v1149 = vadd.f32 %v1070, %v1148
    %1150 = vmatmul.bf16.gmra.mxu0 %v917
    %v1151 = vpop.f32.mrf.mxu0
    %v1152 = vadd.f32 %v1073, %v1151
    %v1153 = vpop.f32.mrf.mxu0
    %v1154 = vadd.f32 %v1075, %v1153
    %1155 = vdwg.mxu0
    %v1156 = vmax.f32 %v1087, 0.0
    %v1157 = vmax.f32 %v1089, 0.0
    %v1158 = vmax.f32 %v1092, 0.0
    %v1159 = vmax.f32 %v1094, 0.0
    %v1160 = vmax.f32 %v1097, 0.0
    %v1161 = vmax.f32 %v1099, 0.0
    %v1162 = vmax.f32 %v1102, 0.0
    %v1163 = vmax.f32 %v1104, 0.0
    %v1164 = vmax.f32 %v1107, 0.0
    %v1165 = vmax.f32 %v1109, 0.0
    %v1166 = vmax.f32 %v1112, 0.0
    %v1167 = vmax.f32 %v1114, 0.0
    %v1168 = vmax.f32 %v1117, 0.0
    %v1169 = vmax.f32 %v1119, 0.0
    %v1170 = vmax.f32 %v1122, 0.0
    %v1171 = vmax.f32 %v1124, 0.0
    %v1172 = vmax.f32 %v1127, 0.0
    %v1173 = vmax.f32 %v1129, 0.0
    %v1174 = vmax.f32 %v1132, 0.0
    %v1175 = vmax.f32 %v1134, 0.0
    %v1176 = vmax.f32 %v1137, 0.0
    %v1177 = vmax.f32 %v1139, 0.0
    %v1178 = vmax.f32 %v1142, 0.0
    %v1179 = vmax.f32 %v1144, 0.0
    %v1180 = vmax.f32 %v1147, 0.0
    %v1181 = vmax.f32 %v1149, 0.0
    %v1182 = vmax.f32 %v1152, 0.0
    %v1183 = vmax.f32 %v1154, 0.0
    %1184 = vst.msk [vmem:[#allocation2] sm:$0xff] %vm545, %v1156
    %1185 = vst.msk [vmem:[#allocation2 + $0x8] sm:$0xff] %vm545, %v1157
    %1186 = vst.msk [vmem:[#allocation2 + $0x10] sm:$0xff] %vm545, %v1158
    %1187 = vst.msk [vmem:[#allocation2 + $0x18] sm:$0xff] %vm545, %v1159
    %1188 = vst.msk [vmem:[#allocation2 + $0x20] sm:$0xff] %vm545, %v1160
    %1189 = vst.msk [vmem:[#allocation2 + $0x28] sm:$0xff] %vm545, %v1161
    %1190 = vst.msk [vmem:[#allocation2 + $0x30] sm:$0xff] %vm545, %v1162
    %1191 = vst.msk [vmem:[#allocation2 + $0x38] sm:$0xff] %vm545, %v1163
    %1192 = vst.msk [vmem:[#allocation2 + $0x40] sm:$0xff] %vm545, %v1164
    %1193 = vst.msk [vmem:[#allocation2 + $0x48] sm:$0xff] %vm545, %v1165
    %1194 = vst.msk [vmem:[#allocation2 + $0x50] sm:$0xff] %vm545, %v1166
    %1195 = vst.msk [vmem:[#allocation2 + $0x58] sm:$0xff] %vm545, %v1167
    %1196 = vst.msk [vmem:[#allocation2 + $0x60] sm:$0xff] %vm545, %v1168
    %1197 = vst.msk [vmem:[#allocation2 + $0x68] sm:$0xff] %vm545, %v1169
    %1198 = vst.msk [vmem:[#allocation2 + $0x70] sm:$0xff] %vm545, %v1170
    %1199 = vst.msk [vmem:[#allocation2 + $0x78] sm:$0xff] %vm545, %v1171
    %1200 = vst.msk [vmem:[#allocation2 + $0x80] sm:$0xff] %vm545, %v1172
    %1201 = vst.msk [vmem:[#allocation2 + $0x88] sm:$0xff] %vm545, %v1173
    %1202 = vst.msk [vmem:[#allocation2 + $0x90] sm:$0xff] %vm545, %v1174
    %1203 = vst.msk [vmem:[#allocation2 + $0x98] sm:$0xff] %vm545, %v1175
    %1204 = vst.msk [vmem:[#allocation2 + $0xa0] sm:$0xff] %vm545, %v1176
    %1205 = vst.msk [vmem:[#allocation2 + $0xa8] sm:$0xff] %vm545, %v1177
    %1206 = vst.msk [vmem:[#allocation2 + $0xb0] sm:$0xff] %vm545, %v1178
    %1207 = vst.msk [vmem:[#allocation2 + $0xb8] sm:$0xff] %vm545, %v1179
    %1208 = vst.msk [vmem:[#allocation2 + $0xc0] sm:$0xff] %vm545, %v1180
    %1209 = vst.msk [vmem:[#allocation2 + $0xc8] sm:$0xff] %vm545, %v1181
    %1210 = vst.msk [vmem:[#allocation2 + $0xd0] sm:$0xff] %vm545, %v1182
    %1211 = vst.msk [vmem:[#allocation2 + $0xd8] sm:$0xff] %vm545, %v1183
    %v1212 = vld [vmem:[#allocation2] sm:$0xff]
    %v1213 = vld [vmem:[#allocation2 + $0x8] sm:$0xff]
    %v1214 = vld [vmem:[#allocation2 + $0x10] sm:$0xff]
    %v1215 = vld [vmem:[#allocation2 + $0x18] sm:$0xff]
    %v1216 = vld [vmem:[#allocation2 + $0x20] sm:$0xff]
    %v1217 = vld [vmem:[#allocation2 + $0x28] sm:$0xff]
    %v1218 = vld [vmem:[#allocation2 + $0x30] sm:$0xff]
    %v1219 = vld [vmem:[#allocation2 + $0x38] sm:$0xff]
    %v1220 = vld [vmem:[#allocation2 + $0x40] sm:$0xff]
    %v1221 = vld [vmem:[#allocation2 + $0x48] sm:$0xff]
    %v1222 = vld [vmem:[#allocation2 + $0x50] sm:$0xff]
    %v1223 = vld [vmem:[#allocation2 + $0x58] sm:$0xff]
    %v1224 = vld [vmem:[#allocation2 + $0x60] sm:$0xff]
    %v1225 = vld [vmem:[#allocation2 + $0x68] sm:$0xff]
    %v1226 = vld [vmem:[#allocation2 + $0x70] sm:$0xff]
    %v1227 = vld [vmem:[#allocation2 + $0x78] sm:$0xff]
    %v1228 = vld [vmem:[#allocation2 + $0x80] sm:$0xff]
    %v1229 = vld [vmem:[#allocation2 + $0x88] sm:$0xff]
    %v1230 = vld [vmem:[#allocation2 + $0x90] sm:$0xff]
    %v1231 = vld [vmem:[#allocation2 + $0x98] sm:$0xff]
    %v1232 = vld [vmem:[#allocation2 + $0xa0] sm:$0xff]
    %v1233 = vld [vmem:[#allocation2 + $0xa8] sm:$0xff]
    %v1234 = vld [vmem:[#allocation2 + $0xb0] sm:$0xff]
    %v1235 = vld [vmem:[#allocation2 + $0xb8] sm:$0xff]
    %v1236 = vld [vmem:[#allocation2 + $0xc0] sm:$0xff]
    %v1237 = vld [vmem:[#allocation2 + $0xc8] sm:$0x7f]
    %v1238 = vld [vmem:[#allocation2 + $0x1] sm:$0xff]
    %v1239 = vld [vmem:[#allocation2 + $0x9] sm:$0xff]
    %v1240 = vld [vmem:[#allocation2 + $0x11] sm:$0xff]
    %v1241 = vld [vmem:[#allocation2 + $0x19] sm:$0xff]
    %v1242 = vld [vmem:[#allocation2 + $0x21] sm:$0xff]
    %v1243 = vld [vmem:[#allocation2 + $0x29] sm:$0xff]
    %v1244 = vld [vmem:[#allocation2 + $0x31] sm:$0xff]
    %v1245 = vld [vmem:[#allocation2 + $0x39] sm:$0xff]
    %v1246 = vld [vmem:[#allocation2 + $0x41] sm:$0xff]
    %v1247 = vld [vmem:[#allocation2 + $0x49] sm:$0xff]
    %v1248 = vld [vmem:[#allocation2 + $0x51] sm:$0xff]
    %v1249 = vld [vmem:[#allocation2 + $0x59] sm:$0xff]
    %v1250 = vld [vmem:[#allocation2 + $0x61] sm:$0xff]
    %v1251 = vld [vmem:[#allocation2 + $0x69] sm:$0xff]
    %v1252 = vld [vmem:[#allocation2 + $0x71] sm:$0xff]
    %v1253 = vld [vmem:[#allocation2 + $0x79] sm:$0xff]
    %v1254 = vld [vmem:[#allocation2 + $0x81] sm:$0xff]
    %v1255 = vld [vmem:[#allocation2 + $0x89] sm:$0xff]
    %v1256 = vld [vmem:[#allocation2 + $0x91] sm:$0xff]
    %v1257 = vld [vmem:[#allocation2 + $0x99] sm:$0xff]
    %v1258 = vld [vmem:[#allocation2 + $0xa1] sm:$0xff]
    %v1259 = vld [vmem:[#allocation2 + $0xa9] sm:$0xff]
    %v1260 = vld [vmem:[#allocation2 + $0xb1] sm:$0xff]
    %v1261 = vld [vmem:[#allocation2 + $0xb9] sm:$0xff]
    %v1262 = vld [vmem:[#allocation2 + $0xc1] sm:$0xff]
    %v1263 = vld [vmem:[#allocation2 + $0xc9] sm:$0x7f]
    %v1264 = vld [vmem:[#allocation2 + $0xc8] sm:$0xff]
    %v1265 = vld [vmem:[#allocation2 + $0xd0] sm:$0xff]
    %v1266 = vld [vmem:[#allocation2 + $0xd8] sm:$0x7f]
    %v1267 = vld [vmem:[#allocation2 + $0xc9] sm:$0xff]
    %v1268 = vld [vmem:[#allocation2 + $0xd1] sm:$0xff]
    %v1269 = vld [vmem:[#allocation2 + $0xd9] sm:$0x7f]
    %v1270 = vmax.f32 %v1212, %v1238
    %v1271 = vmax.f32 %v1213, %v1239
    %v1272 = vmax.f32 %v1214, %v1240
    %v1273 = vmax.f32 %v1215, %v1241
    %v1274 = vmax.f32 %v1216, %v1242
    %v1275 = vmax.f32 %v1217, %v1243
    %v1276 = vmax.f32 %v1218, %v1244
    %v1277 = vmax.f32 %v1219, %v1245
    %v1278 = vmax.f32 %v1220, %v1246
    %v1279 = vmax.f32 %v1221, %v1247
    %v1280 = vmax.f32 %v1222, %v1248
    %v1281 = vmax.f32 %v1223, %v1249
    %v1282 = vmax.f32 %v1224, %v1250
    %v1283 = vmax.f32 %v1225, %v1251
    %v1284 = vmax.f32 %v1226, %v1252
    %v1285 = vmax.f32 %v1227, %v1253
    %v1286 = vmax.f32 %v1228, %v1254
    %v1287 = vmax.f32 %v1229, %v1255
    %v1288 = vmax.f32 %v1230, %v1256
    %v1289 = vmax.f32 %v1231, %v1257
    %v1290 = vmax.f32 %v1232, %v1258
    %v1291 = vmax.f32 %v1233, %v1259
    %v1292 = vmax.f32 %v1234, %v1260
    %v1293 = vmax.f32 %v1235, %v1261
    %v1294 = vmax.f32 %v1236, %v1262
    %v1295 = vmax.f32 %v1237, %v1263
    %v1296 = vmax.f32 %v1264, %v1267
    %v1297 = vmax.f32 %v1265, %v1268
    %v1298 = vmax.f32 %v1266, %v1269
    %v1299 = vmax.f32 %v1270, %v1272
    %v1300 = vmax.f32 %v1271, %v1273
    %v1301 = vmax.f32 %v1272, %v1274
    %v1302 = vmax.f32 %v1273, %v1275
    %v1303 = vmax.f32 %v1274, %v1276
    %v1304 = vmax.f32 %v1275, %v1277
    %v1305 = vmax.f32 %v1276, %v1278
    %v1306 = vmax.f32 %v1277, %v1279
    %v1307 = vmax.f32 %v1278, %v1280
    %v1308 = vmax.f32 %v1279, %v1281
    %v1309 = vmax.f32 %v1280, %v1282
    %v1310 = vmax.f32 %v1281, %v1283
    %v1311 = vmax.f32 %v1282, %v1284
    %v1312 = vmax.f32 %v1283, %v1285
    %v1313 = vmax.f32 %v1284, %v1286
    %v1314 = vmax.f32 %v1285, %v1287
    %v1315 = vmax.f32 %v1286, %v1288
    %v1316 = vmax.f32 %v1287, %v1289
    %v1317 = vmax.f32 %v1288, %v1290
    %v1318 = vmax.f32 %v1289, %v1291
    %v1319 = vmax.f32 %v1290, %v1292
    %v1320 = vmax.f32 %v1291, %v1293
    %v1321 = vmax.f32 %v1292, %v1294
    %v1322 = vmax.f32 %v1293, %v1296
    %v1323 = vmax.f32 %v1294, %v1297
    %v1324 = vmax.f32 %v1295, %v1298
    %v1325 = vpack.c.bf16 %v1300, %v1299
    %v1326 = vpack.c.bf16 %v1302, %v1301
    %v1327 = vpack.c.bf16 %v1304, %v1303
    %v1328 = vpack.c.bf16 %v1306, %v1305
    %v1329 = vpack.c.bf16 %v1308, %v1307
    %v1330 = vpack.c.bf16 %v1310, %v1309
    %v1331 = vpack.c.bf16 %v1312, %v1311
    %v1332 = vpack.c.bf16 %v1314, %v1313
    %v1333 = vpack.c.bf16 %v1316, %v1315
    %v1334 = vpack.c.bf16 %v1318, %v1317
    %v1335 = vpack.c.bf16 %v1320, %v1319
    %v1336 = vpack.c.bf16 %v1322, %v1321
    %v1337 = vpack.c.bf16 %v1324, %v1323
    %v1338 = vld [vmem:[%s3] sm:$0xff]
    %v1339 = vld [vmem:[%s3 + $0x8] sm:$0xff]
    %v1340 = vld [vmem:[%s3 + $0x10] sm:$0xff]
    %v1341 = vld [vmem:[%s3 + $0x18] sm:$0xff]
    %v1342 = vld [vmem:[%s3 + $0x20] sm:$0xff]
    %v1343 = vld [vmem:[%s3 + $0x28] sm:$0xff]
    %v1344 = vld [vmem:[%s3 + $0x30] sm:$0xff]
    %v1345 = vld [vmem:[%s3 + $0x38] sm:$0xff]
    %v1346 = vld [vmem:[%s3 + $0x40] sm:$0xff]
    %v1347 = vld [vmem:[%s3 + $0x48] sm:$0xff]
    %v1348 = vld [vmem:[%s3 + $0x50] sm:$0x33]
    %v1360 = vunpack.c.l.b16 %v1338
    %v1361 = vunpack.c.h.b16 %v1338
    %v1362 = vunpack.c.l.b16 %v1339
    %v1363 = vunpack.c.h.b16 %v1339
    %v1364 = vunpack.c.l.b16 %v1340
    %v1365 = vunpack.c.h.b16 %v1340
    %v1366 = vunpack.c.l.b16 %v1341
    %v1367 = vunpack.c.h.b16 %v1341
    %v1368 = vunpack.c.l.b16 %v1342
    %v1369 = vunpack.c.h.b16 %v1342
    %v1370 = vunpack.c.l.b16 %v1343
    %v1371 = vunpack.c.h.b16 %v1343
    %v1372 = vunpack.c.l.b16 %v1344
    %v1373 = vunpack.c.h.b16 %v1344
    %v1374 = vunpack.c.l.b16 %v1345
    %v1375 = vunpack.c.h.b16 %v1345
    %v1376 = vunpack.c.l.b16 %v1346
    %v1377 = vunpack.c.h.b16 %v1346
    %v1378 = vunpack.c.l.b16 %v1347
    %v1379 = vunpack.c.h.b16 %v1347
    %v1380 = vunpack.c.l.b16 %v1348
    %v1381 = vunpack.c.h.b16 %v1348
    %v1382 = vpack.c.b16 %v1362, %v1360
    %v1383 = vpack.c.b16 %v1363, %v1361
    %v1384 = vpack.c.b16 %v1366, %v1364
    %v1385 = vpack.c.b16 %v1367, %v1365
    %v1386 = vpack.c.b16 %v1370, %v1368
    %v1387 = vpack.c.b16 %v1371, %v1369
    %v1388 = vpack.c.b16 %v1374, %v1372
    %v1389 = vpack.c.b16 %v1375, %v1373
    %v1390 = vpack.c.b16 %v1378, %v1376
    %v1391 = vpack.c.b16 %v1379, %v1377
    %v1392 = vpack.c.b16 %v1380, %v1380
    %v1393 = vpack.c.b16 %v1381, %v1381
    %vm1400 = vcmask 646144
    %v1402 = vsel %vm1400, %v1383, 0
    %v1405 = vsel %vm1400, %v1385, 0
    %v1408 = vsel %vm1400, %v1387, 0
    %v1411 = vsel %vm1400, %v1389, 0
    %v1414 = vsel %vm1400, %v1391, 0
    %v1417 = vsel %vm1400, %v1393, 0
    %vm1419 = vcmask 1046528
    %vm1420 = vcmask 1047552
    %v1421 = vsel %vm1419, 4294967295, 65535
    %v1422 = vsel %vm1420, %v1421, 0
    %v1424 = vand.u32 %v1337, %v1422
    %1426 = vmatpush.bf16.msra.mxu0 %v1332
    %1427 = vmatpush.bf16.msra.mxu0 %v1331
    %1428 = vmatpush.bf16.msra.mxu0 %v1330
    %1429 = vmatpush.bf16.msra.mxu0 %v1329
    %1430 = vmatpush.bf16.msra.mxu0 %v1328
    %1431 = vmatpush.bf16.msra.mxu0 %v1327
    %1432 = vmatpush.bf16.msra.mxu0 %v1326
    %1433 = vmatpush.bf16.msra.mxu0 %v1325
    %1434 = vmatmul.bf16.gmra.mxu0 %v1382
    %v1435 = vpop.f32.mrf.mxu0
    %v1436 = vadd.f32 0.0, %v1435
    %v1437 = vpop.f32.mrf.mxu0
    %v1438 = vadd.f32 0.0, %v1437
    %1439 = vmatmul.bf16.gmra.mxu0 %v1384
    %v1440 = vpop.f32.mrf.mxu0
    %v1441 = vadd.f32 0.0, %v1440
    %v1442 = vpop.f32.mrf.mxu0
    %v1443 = vadd.f32 0.0, %v1442
    %1444 = vmatmul.bf16.gmra.mxu0 %v1386
    %v1445 = vpop.f32.mrf.mxu0
    %v1446 = vadd.f32 0.0, %v1445
    %v1447 = vpop.f32.mrf.mxu0
    %v1448 = vadd.f32 0.0, %v1447
    %1449 = vmatmul.bf16.gmra.mxu0 %v1388
    %v1450 = vpop.f32.mrf.mxu0
    %v1451 = vadd.f32 0.0, %v1450
    %v1452 = vpop.f32.mrf.mxu0
    %v1453 = vadd.f32 0.0, %v1452
    %1454 = vmatmul.bf16.gmra.mxu0 %v1390
    %v1455 = vpop.f32.mrf.mxu0
    %v1456 = vadd.f32 0.0, %v1455
    %v1457 = vpop.f32.mrf.mxu0
    %v1458 = vadd.f32 0.0, %v1457
    %1459 = vmatmul.bf16.gmra.mxu0 %v1392
    %v1460 = vpop.f32.mrf.mxu0
    %v1461 = vadd.f32 0.0, %v1460
    %v1462 = vpop.f32.mrf.mxu0
    %1463 = vdwg.mxu0
    %1464 = vmatpush.bf16.msra.mxu0 0
    %1465 = vmatpush.bf16.msra.mxu0 0
    %1466 = vmatpush.bf16.msra.mxu0 0
    %1467 = vmatpush.bf16.msra.mxu0 %v1424
    %1468 = vmatpush.bf16.msra.mxu0 %v1336
    %1469 = vmatpush.bf16.msra.mxu0 %v1335
    %1470 = vmatpush.bf16.msra.mxu0 %v1334
    %1471 = vmatpush.bf16.msra.mxu0 %v1333
    %1472 = vmatmul.bf16.gmra.mxu0 %v1402
    %v1473 = vpop.f32.mrf.mxu0
    %v1474 = vadd.f32 %v1436, %v1473
    %v1475 = vpop.f32.mrf.mxu0
    %v1476 = vadd.f32 %v1438, %v1475
    %1477 = vmatmul.bf16.gmra.mxu0 %v1405
    %v1478 = vpop.f32.mrf.mxu0
    %v1479 = vadd.f32 %v1441, %v1478
    %v1480 = vpop.f32.mrf.mxu0
    %v1481 = vadd.f32 %v1443, %v1480
    %1482 = vmatmul.bf16.gmra.mxu0 %v1408
    %v1483 = vpop.f32.mrf.mxu0
    %v1484 = vadd.f32 %v1446, %v1483
    %v1485 = vpop.f32.mrf.mxu0
    %v1486 = vadd.f32 %v1448, %v1485
    %1487 = vmatmul.bf16.gmra.mxu0 %v1411
    %v1488 = vpop.f32.mrf.mxu0
    %v1489 = vadd.f32 %v1451, %v1488
    %v1490 = vpop.f32.mrf.mxu0
    %v1491 = vadd.f32 %v1453, %v1490
    %1492 = vmatmul.bf16.gmra.mxu0 %v1414
    %v1493 = vpop.f32.mrf.mxu0
    %v1494 = vadd.f32 %v1456, %v1493
    %v1495 = vpop.f32.mrf.mxu0
    %v1496 = vadd.f32 %v1458, %v1495
    %1497 = vmatmul.bf16.gmra.mxu0 %v1417
    %v1498 = vpop.f32.mrf.mxu0
    %v1499 = vadd.f32 %v1461, %v1498
    %v1500 = vpop.f32.mrf.mxu0
    %1501 = vdwg.mxu0
    %v1502 = vpack.c.bf16 %v1474, %v1474
    %v1503 = vpack.c.bf16 %v1476, %v1476
    %v1504 = vpack.c.bf16 %v1479, %v1479
    %v1505 = vpack.c.bf16 %v1481, %v1481
    %v1506 = vpack.c.bf16 %v1484, %v1484
    %v1507 = vpack.c.bf16 %v1486, %v1486
    %v1508 = vpack.c.bf16 %v1489, %v1489
    %v1509 = vpack.c.bf16 %v1491, %v1491
    %v1510 = vpack.c.bf16 %v1494, %v1494
    %v1511 = vpack.c.bf16 %v1496, %v1496
    %v1512 = vpack.c.bf16 %v1499, %v1499
    %s1513 = smul.u32 %s19, 11
    %s1514 = smul.addr %s1513, 4
    %s1515 = scalar_lea.vmem %s4, %s1514
    %vm1516 = vcmask 519168
    %1517 = vst.msk [vmem:[%s1515] sm:$0xf] %vm1516, %v1502
    %1518 = vst.msk [vmem:[%s1515 + $0x4] sm:$0xf] %vm1516, %v1503
    %1519 = vst.msk [vmem:[%s1515 + $0x8] sm:$0xf] %vm1516, %v1504
    %1520 = vst.msk [vmem:[%s1515 + $0xc] sm:$0xf] %vm1516, %v1505
    %1521 = vst.msk [vmem:[%s1515 + $0x10] sm:$0xf] %vm1516, %v1506
    %1522 = vst.msk [vmem:[%s1515 + $0x14] sm:$0xf] %vm1516, %v1507
    %1523 = vst.msk [vmem:[%s1515 + $0x18] sm:$0xf] %vm1516, %v1508
    %1524 = vst.msk [vmem:[%s1515 + $0x1c] sm:$0xf] %vm1516, %v1509
    %1525 = vst.msk [vmem:[%s1515 + $0x20] sm:$0xf] %vm1516, %v1510
    %1526 = vst.msk [vmem:[%s1515 + $0x24] sm:$0xf] %vm1516, %v1511
    %vm1527 = vcmask 517120
    %vm1528 = vsmask.f32 1280
    %vm1529 = vmand %vm1527, %vm1528
    %v1530 = vld [vmem:[%s1515 + $0x28] sm:$0x3]
    %v1531 = vsel %vm1529, %v1512, %v1530
    %1532 = vst [vmem:[%s1515 + $0x28] sm:$0x3] %v1531
  $region22: #{convnet_forward.5} parent=0 // loop_footer
    %s23 = sadd.s32 1, %s19
  $region23: #{convnet_forward.5} parent=0 // loop_footer_branch
    %18 = sbr.rel target = $region19
  $region24: #{convnet_forward.5} parent=0 // loop_exit
    _
  // Predicated region
  $region25: #{convnet_forward.5} parent=0 // pred_check
    _
  $region26: #{convnet_forward.5} parent=0 // pred_check_branch
    %1534 = sbr.rel (0) target = $region28
  $region27: #{convnet_forward.5} parent=0 // pred_region
    _
  $region28: #{convnet_forward.5} parent=0 // pred_fallthru
    _
  // Predicated region
  $region29: #{convnet_forward.5} parent=0 // pred_check
    _
  $region30: #{convnet_forward.5} parent=0 // pred_check_branch
    %1536 = sbr.rel (0) target = $region32
  $region31: #{convnet_forward.5} parent=0 // pred_region
    _
  $region32: #{convnet_forward.5} parent=0 // pred_fallthru
    _

</llo_original>
